<compile_context>
chip_gen: v5e
topology: v5e:2x2
jax: 0.10.0
libtpu: 0.0.40
codegen_flags: <defaults>
</compile_context>

<pallas_src>
import jax
import jax.numpy as jnp
from jax import lax
from jax.experimental import pallas as pl
from jax.experimental.pallas import tpu as pltpu

# ------------------------- synthetic model config -------------------------
B = 2           # batch
T = 8           # text sequence length
S = 8           # image token sequence length
D = 32          # model width
H = 4           # attention heads
HD = D // H     # head dim
L = 2           # number of (self-attn + cross-attn) decoder layers
MLP = 4 * D     # mlp hidden
V = 64          # output dim of text_projection (vocab size)
VP = 128        # lane-dense padded projection width
NLN = 5 * L + 1 # layer norms: 5 per layer + final
BW = 128        # bias-slab lane width (>= max(3*D, MLP, D))
EPS = 1e-5
NEG = -1e30
SCALE = 1.0 / float(HD) ** 0.5

assert BW >= max(3 * D, MLP, D)


# --------------------------- exact (erf) GELU ------------------------------
def _erf_approx(x):
    # Abramowitz & Stegun 7.1.26.  Keeps torch.nn.GELU()'s erf semantics with
    # ops guaranteed to lower in Mosaic; reciprocal goes to the EUP slot.
    a1, a2, a3, a4, a5 = (0.254829592, -0.284496736, 1.421413741,
                          -1.453152027, 1.061405429)
    p = 0.3275911
    ax = jnp.abs(x)
    t = pl.reciprocal(1.0 + p * ax, approx=True)
    poly = ((((a5 * t + a4) * t + a3) * t + a2) * t + a1) * t
    e = 1.0 - poly * jnp.exp(-ax * ax)
    return jnp.where(x >= 0, e, -e)


def _gelu_erf(x):
    return 0.5 * x * (1.0 + _erf_approx(x * 0.7071067811865476))


# ------------------------------ Pallas kernel ------------------------------
def coca_text_decoder_kernel(img_ref, tok_ref, lns_ref, qkv_w_ref, ow_ref,
                             w1_ref, w2_ref, bias_ref, proj_ref, out_ref):
    f32 = jnp.float32
    bf16 = jnp.bfloat16

    def mm(a, w):
        # bf16 MXU matmul, f32 accumulate (weights are already bf16).
        return jnp.dot(a.astype(bf16), w, preferred_element_type=f32)

    def layer_norm(h, idx):
        g = lns_ref[idx]                      # [D] lazy load
        b = lns_ref[NLN + idx]                # [D]
        mu = jnp.mean(h, axis=-1, keepdims=True)
        var = jnp.mean((h - mu) ** 2, axis=-1, keepdims=True)
        return (h - mu) * lax.rsqrt(var + EPS) * g + b

    def to_heads(m):                          # [N, D] -> [H, N, HD]
        n = m.shape[0]
        return jnp.transpose(m.reshape(n, H, HD), (1, 0, 2))

    def merge_heads(c):                       # [H, N, HD] -> [N, D]
        n = c.shape[1]
        return jnp.transpose(c, (1, 0, 2)).reshape(n, D)

    def softmax(s):                           # f32 rows, last axis
        s = s - jnp.max(s, axis=-1, keepdims=True)
        p = jnp.exp(s)
        return p * pl.reciprocal(jnp.sum(p, axis=-1, keepdims=True), approx=True)

    def attention(q_in, kv_in, l, kind, mask, fused):
        w = qkv_w_ref[l, kind]                # [D, 3D] bf16, pre-transposed
        bias = bias_ref[l, kind]              # [4, BW] f32
        bqkv = bias[0, :3 * D]
        bo = bias[2, :D]
        if fused:
            qkv = mm(q_in, w) + bqkv          # one fused projection, f32
            q = to_heads(qkv[:, :D])
            k = to_heads(qkv[:, D:2 * D])
            v = to_heads(qkv[:, 2 * D:])
        else:
            # Q for text rows; K/V columns only for image rows (no wasted Q FLOPs).
            q = to_heads(mm(q_in, w[:, :D]) + bqkv[:D])
            kv = mm(kv_in, w[:, D:]) + bqkv[D:]
            k = to_heads(kv[:, :D])
            v = to_heads(kv[:, D:])
        s = jnp.einsum('hnd,hmd->hnm', (q * SCALE).astype(bf16), k.astype(bf16),
                       preferred_element_type=f32)
        if mask is not None:
            s = s + mask                      # f32 mask add
        p = softmax(s)
        ctx = jnp.einsum('hnm,hmd->hnd', p.astype(bf16), v.astype(bf16),
                         preferred_element_type=f32)
        # Single merged output projection (ow packed as [D, D]).
        return mm(merge_heads(ctx), ow_ref[l, kind]) + bo

    def mlp(h, l, kind):
        bias = bias_ref[l, kind]
        b1 = bias[1, :MLP]
        b2 = bias[3, :D]
        hh = mm(h, w1_ref[l, kind]) + b1
        hh = _gelu_erf(hh)                    # f32 elementwise
        return mm(hh, w2_ref[l, kind]) + b2

    # Causal mask built in-kernel (no HBM mask DMA); cross-attn needs no mask.
    row = lax.broadcasted_iota(jnp.int32, (T, T), 0)
    col = lax.broadcasted_iota(jnp.int32, (T, T), 1)
    causal = jnp.where(col <= row, 0.0, NEG).astype(f32)

    img = img_ref[...]                        # [S, D] — this example's image tokens
    x = tok_ref[...]                          # [T, D] — this example's text tokens

    for l in range(L):
        # self-attention residual block (causal)
        h = layer_norm(x, 5 * l + 0)
        x = x + attention(h, h, l, 0, causal, fused=True)
        x = x + mlp(layer_norm(x, 5 * l + 1), l, 0)
        # cross-attention residual block (attends to own image embeddings)
        qn = layer_norm(x, 5 * l + 2)
        kvn = layer_norm(img, 5 * l + 3)
        x = x + attention(qn, kvn, l, 1, None, fused=False)
        x = x + mlp(layer_norm(x, 5 * l + 4), l, 1)

    x = layer_norm(x, 5 * L)
    # Lane-dense [T, 128] store; wrapper slices back to V.
    # TODO(synk): at real CoCa vocab (~49k) tile this matmul over a parallel
    # vocab grid axis instead of a single resident block.
    out_ref[...] = mm(x, proj_ref[...])


# ------------------------------- wrapper ------------------------------------
def coca_text_decoder(image_embs, token_embs, packed_weights):
    """image_embs: [B, S, D], token_embs: [B, T, D] -> logits [B, T, V]."""
    img = image_embs.reshape(B * S, D)
    tok = token_embs.reshape(B * T, D)
    lns, qkv_w, ow, w1, w2, biases, proj_p = packed_weights

    in_specs = [
        pl.BlockSpec((S, D), lambda b: (b, 0)),               # image rows of ex. b
        pl.BlockSpec((T, D), lambda b: (b, 0)),               # text rows of ex. b
        pl.BlockSpec(lns.shape, lambda b: (0, 0)),            # LN slab (resident)
        pl.BlockSpec(qkv_w.shape, lambda b: (0, 0, 0, 0)),    # QKV weights
        pl.BlockSpec(ow.shape, lambda b: (0, 0, 0, 0)),       # attn out weights
        pl.BlockSpec(w1.shape, lambda b: (0, 0, 0, 0)),       # mlp fc weights
        pl.BlockSpec(w2.shape, lambda b: (0, 0, 0, 0)),       # mlp proj weights
        pl.BlockSpec(biases.shape, lambda b: (0, 0, 0, 0)),   # bias slab
        pl.BlockSpec(proj_p.shape, lambda b: (0, 0)),         # text projection
    ]
    # TODO(synk): at production dims (D=768, MLP=3072, L=12) stream the weight
    # slabs per layer via a grid axis so only one layer double-buffers in VMEM
    # (required on v7x's 64 MiB); resident slabs are fine at these toy shapes.
    out = pl.pallas_call(
        coca_text_decoder_kernel,
        out_shape=jax.ShapeDtypeStruct((B * T, VP), jnp.float32),
        grid=(B,),
        in_specs=in_specs,
        out_specs=pl.BlockSpec((T, VP), lambda b: (b, 0)),
        compiler_params=pltpu.CompilerParams(
            dimension_semantics=("parallel",),      # v7x: one example per TC
            vmem_limit_bytes=32 * 1024 * 1024),     # explicit, portable budget
    )(img, tok, lns, qkv_w, ow, w1, w2, biases, proj_p)
    return out.reshape(B, T, VP)[:, :, :V]


# -------------------------- deterministic init -----------------------------
def init_weights(key):
    keys = iter(jax.random.split(key, 64))

    def w(shape, scale=0.02):
        return (scale * jax.random.normal(next(keys), shape)).astype(jnp.float32)

    def ones(shape):
        return jnp.ones(shape, jnp.float32)

    def zeros(shape):
        return jnp.zeros(shape, jnp.float32)

    weights = [
        # ----- self-attention residual blocks (stacked over L) -----
        ones((L, 1, D)), zeros((L, 1, D)),          # ln_1 gamma / beta
        w((L, 3 * D, D)), w((L, 1, 3 * D)),         # attn in_proj W / b
        w((L, D, D)), w((L, 1, D)),                 # attn out_proj W / b
        ones((L, 1, D)), zeros((L, 1, D)),          # ln_2 gamma / beta
        w((L, MLP, D)), w((L, 1, MLP)),             # mlp c_fc W / b
        w((L, D, MLP)), w((L, 1, D)),               # mlp c_proj W / b
        # ----- cross-attention residual blocks (stacked over L) -----
        ones((L, 1, D)), zeros((L, 1, D)),          # ln_1 (query) gamma / beta
        ones((L, 1, D)), zeros((L, 1, D)),          # ln_1_kv gamma / beta
        w((L, 3 * D, D)), w((L, 1, 3 * D)),         # attn in_proj W / b
        w((L, D, D)), w((L, 1, D)),                 # attn out_proj W / b
        ones((L, 1, D)), zeros((L, 1, D)),          # ln_2 gamma / beta
        w((L, MLP, D)), w((L, 1, MLP)),             # mlp c_fc W / b
        w((L, D, MLP)), w((L, 1, D)),               # mlp c_proj W / b
        # ----- final -----
        ones((1, D)), zeros((1, D)),                # ln_final gamma / beta
        w((D, V)),                                  # text_projection
    ]
    return weights


def pack_weights(raw):
    """Pack the 29 torch-layout tensors into 7 kernel slabs.

    Matmul weights are pre-transposed to [in, out] and stored in bf16 (halves
    HBM->VMEM bytes, feeds the bf16 MXU); LN params and biases stay f32 and are
    consolidated into two small slabs.
    """
    (sa_ln1_g, sa_ln1_b, sa_wqkv, sa_bqkv, sa_wo, sa_bo,
     sa_ln2_g, sa_ln2_b, sa_w1, sa_b1, sa_w2, sa_b2,
     ca_lnq_g, ca_lnq_b, ca_lnkv_g, ca_lnkv_b, ca_wqkv, ca_bqkv, ca_wo, ca_bo,
     ca_ln2_g, ca_ln2_b, ca_w1, ca_b1, ca_w2, ca_b2,
     lnf_g, lnf_b, proj) = raw

    # LayerNorm slab [2*NLN, D]: rows 0..NLN-1 gammas, NLN..2*NLN-1 betas.
    # Per-layer order: 0 sa_ln1, 1 sa_ln2, 2 ca_ln_q, 3 ca_ln_kv, 4 ca_ln2.
    g_rows, b_rows = [], []
    for l in range(L):
        for g, b in ((sa_ln1_g, sa_ln1_b), (sa_ln2_g, sa_ln2_b),
                     (ca_lnq_g, ca_lnq_b), (ca_lnkv_g, ca_lnkv_b),
                     (ca_ln2_g, ca_ln2_b)):
            g_rows.append(g[l])
            b_rows.append(b[l])
    g_rows.append(lnf_g)
    b_rows.append(lnf_b)
    lns = jnp.concatenate(g_rows + b_rows, axis=0)            # [2*NLN, D] f32

    t = lambda a: jnp.transpose(a, (0, 2, 1)).astype(jnp.bfloat16)
    qkv_w = jnp.stack([t(sa_wqkv), t(ca_wqkv)], axis=1)       # [L, 2, D, 3D]
    ow = jnp.stack([t(sa_wo), t(ca_wo)], axis=1)              # [L, 2, D, D] merged heads
    w1 = jnp.stack([t(sa_w1), t(ca_w1)], axis=1)              # [L, 2, D, MLP]
    w2 = jnp.stack([t(sa_w2), t(ca_w2)], axis=1)              # [L, 2, MLP, D]

    # Bias slab [L, 2, 4, BW] f32 (lane-aligned rows):
    #   row 0: qkv in_proj bias   row 1: mlp c_fc bias
    #   row 2: attn out bias      row 3: mlp c_proj bias
    def bias_block(bqkv, b1, bo, b2):
        blk = jnp.zeros((L, 4, BW), jnp.float32)
        blk = blk.at[:, 0, :3 * D].set(bqkv[:, 0, :])
        blk = blk.at[:, 1, :MLP].set(b1[:, 0, :])
        blk = blk.at[:, 2, :D].set(bo[:, 0, :])
        blk = blk.at[:, 3, :D].set(b2[:, 0, :])
        return blk
    biases = jnp.stack([bias_block(sa_bqkv, sa_b1, sa_bo, sa_b2),
                        bias_block(ca_bqkv, ca_b1, ca_bo, ca_b2)], axis=1)

    proj_p = (jnp.zeros((D, VP), jnp.float32).at[:, :V].set(proj)
              .astype(jnp.bfloat16))                          # lane-dense pad
    return (lns, qkv_w, ow, w1, w2, biases, proj_p)


# ------------------------- pure-JAX reference -------------------------------
def reference(image_embs, token_embs, raw):
    (sa_ln1_g, sa_ln1_b, sa_wqkv, sa_bqkv, sa_wo, sa_bo,
     sa_ln2_g, sa_ln2_b, sa_w1, sa_b1, sa_w2, sa_b2,
     ca_lnq_g, ca_lnq_b, ca_lnkv_g, ca_lnkv_b, ca_wqkv, ca_bqkv, ca_wo, ca_bo,
     ca_ln2_g, ca_ln2_b, ca_w1, ca_b1, ca_w2, ca_b2,
     lnf_g, lnf_b, proj) = raw

    def ln(x, g, b):
        mu = jnp.mean(x, -1, keepdims=True)
        var = jnp.mean((x - mu) ** 2, -1, keepdims=True)
        return (x - mu) * lax.rsqrt(var + EPS) * g + b

    def mha(q_in, kv_in, wqkv, bqkv, wo, bo, mask):
        wq, wk, wv = wqkv[:D], wqkv[D:2 * D], wqkv[2 * D:]
        bq, bk, bv = bqkv[:, :D], bqkv[:, D:2 * D], bqkv[:, 2 * D:]
        q = q_in @ wq.T + bq
        k = kv_in @ wk.T + bk
        v = kv_in @ wv.T + bv
        outs = []
        for h in range(H):
            qh = q[:, h * HD:(h + 1) * HD] * SCALE
            kh = k[:, h * HD:(h + 1) * HD]
            vh = v[:, h * HD:(h + 1) * HD]
            s = qh @ kh.T
            if mask is not None:
                s = s + mask
            outs.append(jax.nn.softmax(s, axis=-1) @ vh)
        return jnp.concatenate(outs, -1) @ wo.T + bo

    def mlp(x, w1, b1, w2, b2):
        h = x @ w1.T + b1
        h = jax.nn.gelu(h, approximate=False)    # exact erf GELU (torch.nn.GELU)
        return h @ w2.T + b2

    causal = jnp.where(jnp.arange(T)[None, :] <= jnp.arange(T)[:, None],
                       0.0, NEG)

    def one(img, tok):
        x = tok
        for l in range(L):
            h = ln(x, sa_ln1_g[l], sa_ln1_b[l])
            x = x + mha(h, h, sa_wqkv[l], sa_bqkv[l], sa_wo[l], sa_bo[l], causal)
            x = x + mlp(ln(x, sa_ln2_g[l], sa_ln2_b[l]),
                        sa_w1[l], sa_b1[l], sa_w2[l], sa_b2[l])
            qn = ln(x, ca_lnq_g[l], ca_lnq_b[l])
            kvn = ln(img, ca_lnkv_g[l], ca_lnkv_b[l])
            x = x + mha(qn, kvn, ca_wqkv[l], ca_bqkv[l], ca_wo[l], ca_bo[l], None)
            x = x + mlp(ln(x, ca_ln2_g[l], ca_ln2_b[l]),
                        ca_w1[l], ca_b1[l], ca_w2[l], ca_b2[l])
        x = ln(x, lnf_g, lnf_b)
        return x @ proj

    return jax.vmap(one)(image_embs, token_embs)


# ---------------------------------- main -----------------------------------
if __name__ == "__main__":
    key = jax.random.PRNGKey(0)
    k_img, k_tok, k_w = jax.random.split(key, 3)

    image_embs = jax.random.normal(k_img, (B, S, D), jnp.float32)
    token_embs = jax.random.normal(k_tok, (B, T, D), jnp.float32)
    raw_weights = init_weights(k_w)
    packed = pack_weights(raw_weights)

    logits = coca_text_decoder(image_embs, token_embs, packed)
    logits = jax.block_until_ready(logits)

    ref = jax.block_until_ready(reference(image_embs, token_embs, raw_weights))

    assert logits.shape == (B, T, V), logits.shape
    assert bool(jnp.all(jnp.isfinite(logits)))
    assert jnp.allclose(logits, ref, rtol=2e-2, atol=2e-2), (
        float(jnp.max(jnp.abs(logits - ref))))

    print("KERNEL_OK")
</pallas_src>

<mosaic_0001>
module attributes {stable_mosaic.version = 11 : i64} {
  func.func @coca_text_decoder_kernel(%arg0: i32, %arg1: memref<8x32xf32, #tpu.memory_space<vmem>>, %arg2: memref<8x32xf32, #tpu.memory_space<vmem>>, %arg3: memref<22x32xf32, #tpu.memory_space<vmem>>, %arg4: memref<2x2x32x96xbf16, #tpu.memory_space<vmem>>, %arg5: memref<2x2x32x32xbf16, #tpu.memory_space<vmem>>, %arg6: memref<2x2x32x128xbf16, #tpu.memory_space<vmem>>, %arg7: memref<2x2x128x32xbf16, #tpu.memory_space<vmem>>, %arg8: memref<2x2x4x128xf32, #tpu.memory_space<vmem>>, %arg9: memref<32x128xbf16, #tpu.memory_space<vmem>>, %arg10: memref<8x128xf32, #tpu.memory_space<vmem>>) attributes {dimension_semantics = [#tpu.dimension_semantics<parallel>], iteration_bounds = array<i64: 2>, scalar_prefetch = 0 : i64, scratch_operands = 0 : i64, tpu.core_type = #tpu.core_type<tc>, window_params = [{transform_indices = @transform_0, window_bounds = array<i64: 8, 32>}, {transform_indices = @transform_1, window_bounds = array<i64: 8, 32>}, {pipeline_mode = #tpu.pipeline_mode<synchronous>, transform_indices = @transform_2, window_bounds = array<i64: 22, 32>}, {pipeline_mode = #tpu.pipeline_mode<synchronous>, transform_indices = @transform_3, window_bounds = array<i64: 2, 2, 32, 96>}, {pipeline_mode = #tpu.pipeline_mode<synchronous>, transform_indices = @transform_4, window_bounds = array<i64: 2, 2, 32, 32>}, {pipeline_mode = #tpu.pipeline_mode<synchronous>, transform_indices = @transform_5, window_bounds = array<i64: 2, 2, 32, 128>}, {pipeline_mode = #tpu.pipeline_mode<synchronous>, transform_indices = @transform_6, window_bounds = array<i64: 2, 2, 128, 32>}, {pipeline_mode = #tpu.pipeline_mode<synchronous>, transform_indices = @transform_7, window_bounds = array<i64: 2, 2, 4, 128>}, {pipeline_mode = #tpu.pipeline_mode<synchronous>, transform_indices = @transform_8, window_bounds = array<i64: 32, 128>}, {transform_indices = @transform_9, window_bounds = array<i64: 8, 128>}]} {
    %0 = tpu.iota {dimensions = array<i32: 0>} : vector<8x8xi32>
    %1 = tpu.iota {dimensions = array<i32: 1>} : vector<8x8xi32>
    %2 = arith.cmpi sle, %1, %0 : vector<8x8xi32>
    %cst = arith.constant 0.000000e+00 : f32
    %cst_0 = arith.constant -1.000000e+30 : f32
    %3 = vector.broadcast %cst : f32 to vector<8x8xf32>
    %4 = vector.broadcast %cst_0 : f32 to vector<8x8xf32>
    %5 = arith.select %2, %3, %4 : vector<8x8xi1>, vector<8x8xf32>
    %c0 = arith.constant 0 : index
    %c0_1 = arith.constant 0 : index
    %6 = vector.load %arg1[%c0, %c0_1] : memref<8x32xf32, #tpu.memory_space<vmem>>, vector<8x32xf32>
    %c0_2 = arith.constant 0 : index
    %c0_3 = arith.constant 0 : index
    %7 = vector.load %arg2[%c0_2, %c0_3] : memref<8x32xf32, #tpu.memory_space<vmem>>, vector<8x32xf32>
    %c0_4 = arith.constant 0 : index
    %c0_5 = arith.constant 0 : index
    %8 = vector.load %arg3[%c0_4, %c0_5] : memref<22x32xf32, #tpu.memory_space<vmem>>, vector<1x32xf32>
    %9 = vector.shape_cast %8 : vector<1x32xf32> to vector<32xf32>
    %c11 = arith.constant 11 : index
    %c0_6 = arith.constant 0 : index
    %10 = vector.load %arg3[%c11, %c0_6] : memref<22x32xf32, #tpu.memory_space<vmem>>, vector<1x32xf32>
    %11 = vector.shape_cast %10 : vector<1x32xf32> to vector<32xf32>
    %cst_7 = arith.constant dense<0.000000e+00> : vector<8xf32>
    %12 = vector.multi_reduction <add>, %7, %cst_7 [1] : vector<8x32xf32> to vector<8xf32>
    %13 = vector.shape_cast %12 : vector<8xf32> to vector<8x1xf32>
    %cst_8 = arith.constant 3.200000e+01 : f32
    %14 = vector.broadcast %cst_8 : f32 to vector<8x1xf32>
    %15 = arith.divf %13, %14 : vector<8x1xf32>
    %16 = vector.broadcast %15 : vector<8x1xf32> to vector<8x32xf32>
    %17 = arith.subf %7, %16 : vector<8x32xf32>
    %18 = arith.mulf %17, %17 : vector<8x32xf32>
    %cst_9 = arith.constant dense<0.000000e+00> : vector<8xf32>
    %19 = vector.multi_reduction <add>, %18, %cst_9 [1] : vector<8x32xf32> to vector<8xf32>
    %20 = vector.shape_cast %19 : vector<8xf32> to vector<8x1xf32>
    %cst_10 = arith.constant 3.200000e+01 : f32
    %21 = vector.broadcast %cst_10 : f32 to vector<8x1xf32>
    %22 = arith.divf %20, %21 : vector<8x1xf32>
    %23 = vector.broadcast %15 : vector<8x1xf32> to vector<8x32xf32>
    %24 = arith.subf %7, %23 : vector<8x32xf32>
    %cst_11 = arith.constant 9.99999974E-6 : f32
    %25 = vector.broadcast %cst_11 : f32 to vector<8x1xf32>
    %26 = arith.addf %22, %25 : vector<8x1xf32>
    %27 = math.rsqrt %26 : vector<8x1xf32>
    %28 = vector.broadcast %27 : vector<8x1xf32> to vector<8x32xf32>
    %29 = arith.mulf %24, %28 : vector<8x32xf32>
    %30 = vector.shape_cast %9 : vector<32xf32> to vector<1x32xf32>
    %31 = vector.broadcast %30 : vector<1x32xf32> to vector<8x32xf32>
    %32 = arith.mulf %29, %31 : vector<8x32xf32>
    %33 = vector.shape_cast %11 : vector<32xf32> to vector<1x32xf32>
    %34 = vector.broadcast %33 : vector<1x32xf32> to vector<8x32xf32>
    %35 = arith.addf %32, %34 : vector<8x32xf32>
    %c0_12 = arith.constant 0 : index
    %c0_13 = arith.constant 0 : index
    %c0_14 = arith.constant 0 : index
    %c0_15 = arith.constant 0 : index
    %36 = vector.load %arg4[%c0_12, %c0_13, %c0_14, %c0_15] : memref<2x2x32x96xbf16, #tpu.memory_space<vmem>>, vector<1x1x32x96xbf16>
    %37 = vector.shape_cast %36 : vector<1x1x32x96xbf16> to vector<32x96xbf16>
    %c0_16 = arith.constant 0 : index
    %c0_17 = arith.constant 0 : index
    %c0_18 = arith.constant 0 : index
    %c0_19 = arith.constant 0 : index
    %38 = vector.load %arg8[%c0_16, %c0_17, %c0_18, %c0_19] : memref<2x2x4x128xf32, #tpu.memory_space<vmem>>, vector<1x1x4x128xf32>
    %39 = vector.shape_cast %38 : vector<1x1x4x128xf32> to vector<4x128xf32>
    %40 = vector.extract_strided_slice %39 {offsets = [0, 0], sizes = [1, 96], strides = [1, 1]} : vector<4x128xf32> to vector<1x96xf32>
    %41 = vector.shape_cast %40 : vector<1x96xf32> to vector<96xf32>
    %42 = vector.extract_strided_slice %39 {offsets = [2, 0], sizes = [1, 32], strides = [1, 1]} : vector<4x128xf32> to vector<1x32xf32>
    %43 = vector.shape_cast %42 : vector<1x32xf32> to vector<32xf32>
    %44 = arith.truncf %35 : vector<8x32xf32> to vector<8x32xbf16>
    %cst_20 = arith.constant dense<0.000000e+00> : vector<8x96xf32>
    %45 = tpu.matmul %44, %37, %cst_20 {dimension_numbers = #tpu.dot_dimension_numbers<[1], [0], [0], [1], [0, 0, 1, 1], [], []>} : vector<8x32xbf16>, vector<32x96xbf16>, vector<8x96xf32> -> vector<8x96xf32>
    %46 = vector.shape_cast %41 : vector<96xf32> to vector<1x96xf32>
    %47 = vector.broadcast %46 : vector<1x96xf32> to vector<8x96xf32>
    %48 = arith.addf %45, %47 : vector<8x96xf32>
    %49 = vector.extract_strided_slice %48 {offsets = [0, 0], sizes = [8, 32], strides = [1, 1]} : vector<8x96xf32> to vector<8x32xf32>
    %50 = vector.shape_cast %49 : vector<8x32xf32> to vector<8x4x8xf32>
    %51 = tpu.transpose %50, [1, 0, 2] : vector<8x4x8xf32> -> vector<4x8x8xf32>
    %52 = vector.extract_strided_slice %48 {offsets = [0, 32], sizes = [8, 32], strides = [1, 1]} : vector<8x96xf32> to vector<8x32xf32>
    %53 = vector.shape_cast %52 : vector<8x32xf32> to vector<8x4x8xf32>
    %54 = tpu.transpose %53, [1, 0, 2] : vector<8x4x8xf32> -> vector<4x8x8xf32>
    %55 = vector.extract_strided_slice %48 {offsets = [0, 64], sizes = [8, 32], strides = [1, 1]} : vector<8x96xf32> to vector<8x32xf32>
    %56 = vector.shape_cast %55 : vector<8x32xf32> to vector<8x4x8xf32>
    %57 = tpu.transpose %56, [1, 0, 2] : vector<8x4x8xf32> -> vector<4x8x8xf32>
    %cst_21 = arith.constant 0.353553385 : f32
    %58 = vector.broadcast %cst_21 : f32 to vector<4x8x8xf32>
    %59 = arith.mulf %51, %58 : vector<4x8x8xf32>
    %60 = arith.truncf %59 : vector<4x8x8xf32> to vector<4x8x8xbf16>
    %61 = arith.truncf %54 : vector<4x8x8xf32> to vector<4x8x8xbf16>
    "tpu.trace_start"() <{level = 10 : i32, message = "hnd,hmd->hnm"}> : () -> ()
    %cst_22 = arith.constant dense<0.000000e+00> : vector<4x8x8xf32>
    %62 = tpu.matmul %60, %61, %cst_22 {dimension_numbers = #tpu.dot_dimension_numbers<[2], [2], [1], [1], [0, 0, 0, 1, 1, 1], [0], [0]>} : vector<4x8x8xbf16>, vector<4x8x8xbf16>, vector<4x8x8xf32> -> vector<4x8x8xf32>
    "tpu.trace_stop"() : () -> ()
    %63 = vector.shape_cast %5 : vector<8x8xf32> to vector<1x8x8xf32>
    %64 = vector.broadcast %63 : vector<1x8x8xf32> to vector<4x8x8xf32>
    %65 = arith.addf %62, %64 : vector<4x8x8xf32>
    %cst_23 = arith.constant dense<0xFF800000> : vector<4x8xf32>
    %66 = vector.multi_reduction <maximumf>, %65, %cst_23 [2] : vector<4x8x8xf32> to vector<4x8xf32>
    %67 = vector.shape_cast %66 : vector<4x8xf32> to vector<4x8x1xf32>
    %68 = vector.broadcast %67 : vector<4x8x1xf32> to vector<4x8x8xf32>
    %69 = arith.subf %65, %68 : vector<4x8x8xf32>
    %70 = math.exp %69 : vector<4x8x8xf32>
    %cst_24 = arith.constant dense<0.000000e+00> : vector<4x8xf32>
    %71 = vector.multi_reduction <add>, %70, %cst_24 [2] : vector<4x8x8xf32> to vector<4x8xf32>
    %72 = vector.shape_cast %71 : vector<4x8xf32> to vector<4x8x1xf32>
    %73 = tpu.reciprocal %72 {approx = true} : vector<4x8x1xf32> -> vector<4x8x1xf32>
    %74 = vector.broadcast %73 : vector<4x8x1xf32> to vector<4x8x8xf32>
    %75 = arith.mulf %70, %74 : vector<4x8x8xf32>
    %76 = arith.truncf %75 : vector<4x8x8xf32> to vector<4x8x8xbf16>
    %77 = arith.truncf %57 : vector<4x8x8xf32> to vector<4x8x8xbf16>
    "tpu.trace_start"() <{level = 10 : i32, message = "hnm,hmd->hnd"}> : () -> ()
    %cst_25 = arith.constant dense<0.000000e+00> : vector<4x8x8xf32>
    %78 = tpu.matmul %76, %77, %cst_25 {dimension_numbers = #tpu.dot_dimension_numbers<[2], [1], [1], [2], [0, 0, 0, 1, 1, 2], [0], [0]>} : vector<4x8x8xbf16>, vector<4x8x8xbf16>, vector<4x8x8xf32> -> vector<4x8x8xf32>
    "tpu.trace_stop"() : () -> ()
    %79 = tpu.transpose %78, [1, 0, 2] : vector<4x8x8xf32> -> vector<8x4x8xf32>
    %80 = vector.shape_cast %79 : vector<8x4x8xf32> to vector<8x32xf32>
    %c0_26 = arith.constant 0 : index
    %c0_27 = arith.constant 0 : index
    %c0_28 = arith.constant 0 : index
    %c0_29 = arith.constant 0 : index
    %81 = vector.load %arg5[%c0_26, %c0_27, %c0_28, %c0_29] : memref<2x2x32x32xbf16, #tpu.memory_space<vmem>>, vector<1x1x32x32xbf16>
    %82 = vector.shape_cast %81 : vector<1x1x32x32xbf16> to vector<32x32xbf16>
    %83 = arith.truncf %80 : vector<8x32xf32> to vector<8x32xbf16>
    %cst_30 = arith.constant dense<0.000000e+00> : vector<8x32xf32>
    %84 = tpu.matmul %83, %82, %cst_30 {dimension_numbers = #tpu.dot_dimension_numbers<[1], [0], [0], [1], [0, 0, 1, 1], [], []>} : vector<8x32xbf16>, vector<32x32xbf16>, vector<8x32xf32> -> vector<8x32xf32>
    %85 = vector.shape_cast %43 : vector<32xf32> to vector<1x32xf32>
    %86 = vector.broadcast %85 : vector<1x32xf32> to vector<8x32xf32>
    %87 = arith.addf %84, %86 : vector<8x32xf32>
    %88 = arith.addf %7, %87 : vector<8x32xf32>
    %c1 = arith.constant 1 : index
    %c0_31 = arith.constant 0 : index
    %89 = vector.load %arg3[%c1, %c0_31] : memref<22x32xf32, #tpu.memory_space<vmem>>, vector<1x32xf32>
    %90 = vector.shape_cast %89 : vector<1x32xf32> to vector<32xf32>
    %c12 = arith.constant 12 : index
    %c0_32 = arith.constant 0 : index
    %91 = vector.load %arg3[%c12, %c0_32] : memref<22x32xf32, #tpu.memory_space<vmem>>, vector<1x32xf32>
    %92 = vector.shape_cast %91 : vector<1x32xf32> to vector<32xf32>
    %cst_33 = arith.constant dense<0.000000e+00> : vector<8xf32>
    %93 = vector.multi_reduction <add>, %88, %cst_33 [1] : vector<8x32xf32> to vector<8xf32>
    %94 = vector.shape_cast %93 : vector<8xf32> to vector<8x1xf32>
    %cst_34 = arith.constant 3.200000e+01 : f32
    %95 = vector.broadcast %cst_34 : f32 to vector<8x1xf32>
    %96 = arith.divf %94, %95 : vector<8x1xf32>
    %97 = vector.broadcast %96 : vector<8x1xf32> to vector<8x32xf32>
    %98 = arith.subf %88, %97 : vector<8x32xf32>
    %99 = arith.mulf %98, %98 : vector<8x32xf32>
    %cst_35 = arith.constant dense<0.000000e+00> : vector<8xf32>
    %100 = vector.multi_reduction <add>, %99, %cst_35 [1] : vector<8x32xf32> to vector<8xf32>
    %101 = vector.shape_cast %100 : vector<8xf32> to vector<8x1xf32>
    %cst_36 = arith.constant 3.200000e+01 : f32
    %102 = vector.broadcast %cst_36 : f32 to vector<8x1xf32>
    %103 = arith.divf %101, %102 : vector<8x1xf32>
    %104 = vector.broadcast %96 : vector<8x1xf32> to vector<8x32xf32>
    %105 = arith.subf %88, %104 : vector<8x32xf32>
    %cst_37 = arith.constant 9.99999974E-6 : f32
    %106 = vector.broadcast %cst_37 : f32 to vector<8x1xf32>
    %107 = arith.addf %103, %106 : vector<8x1xf32>
    %108 = math.rsqrt %107 : vector<8x1xf32>
    %109 = vector.broadcast %108 : vector<8x1xf32> to vector<8x32xf32>
    %110 = arith.mulf %105, %109 : vector<8x32xf32>
    %111 = vector.shape_cast %90 : vector<32xf32> to vector<1x32xf32>
    %112 = vector.broadcast %111 : vector<1x32xf32> to vector<8x32xf32>
    %113 = arith.mulf %110, %112 : vector<8x32xf32>
    %114 = vector.shape_cast %92 : vector<32xf32> to vector<1x32xf32>
    %115 = vector.broadcast %114 : vector<1x32xf32> to vector<8x32xf32>
    %116 = arith.addf %113, %115 : vector<8x32xf32>
    %c0_38 = arith.constant 0 : index
    %c0_39 = arith.constant 0 : index
    %c0_40 = arith.constant 0 : index
    %c0_41 = arith.constant 0 : index
    %117 = vector.load %arg8[%c0_38, %c0_39, %c0_40, %c0_41] : memref<2x2x4x128xf32, #tpu.memory_space<vmem>>, vector<1x1x4x128xf32>
    %118 = vector.shape_cast %117 : vector<1x1x4x128xf32> to vector<4x128xf32>
    %119 = vector.extract_strided_slice %118 {offsets = [1, 0], sizes = [1, 128], strides = [1, 1]} : vector<4x128xf32> to vector<1x128xf32>
    %120 = vector.shape_cast %119 : vector<1x128xf32> to vector<128xf32>
    %121 = vector.extract_strided_slice %118 {offsets = [3, 0], sizes = [1, 32], strides = [1, 1]} : vector<4x128xf32> to vector<1x32xf32>
    %122 = vector.shape_cast %121 : vector<1x32xf32> to vector<32xf32>
    %c0_42 = arith.constant 0 : index
    %c0_43 = arith.constant 0 : index
    %c0_44 = arith.constant 0 : index
    %c0_45 = arith.constant 0 : index
    %123 = vector.load %arg6[%c0_42, %c0_43, %c0_44, %c0_45] : memref<2x2x32x128xbf16, #tpu.memory_space<vmem>>, vector<1x1x32x128xbf16>
    %124 = vector.shape_cast %123 : vector<1x1x32x128xbf16> to vector<32x128xbf16>
    %125 = arith.truncf %116 : vector<8x32xf32> to vector<8x32xbf16>
    %cst_46 = arith.constant dense<0.000000e+00> : vector<8x128xf32>
    %126 = tpu.matmul %125, %124, %cst_46 {dimension_numbers = #tpu.dot_dimension_numbers<[1], [0], [0], [1], [0, 0, 1, 1], [], []>} : vector<8x32xbf16>, vector<32x128xbf16>, vector<8x128xf32> -> vector<8x128xf32>
    %127 = vector.shape_cast %120 : vector<128xf32> to vector<1x128xf32>
    %128 = vector.broadcast %127 : vector<1x128xf32> to vector<8x128xf32>
    %129 = arith.addf %126, %128 : vector<8x128xf32>
    %cst_47 = arith.constant 5.000000e-01 : f32
    %130 = vector.broadcast %cst_47 : f32 to vector<8x128xf32>
    %131 = arith.mulf %130, %129 : vector<8x128xf32>
    %cst_48 = arith.constant 0.707106769 : f32
    %132 = vector.broadcast %cst_48 : f32 to vector<8x128xf32>
    %133 = arith.mulf %129, %132 : vector<8x128xf32>
    %134 = math.absf %133 : vector<8x128xf32>
    %cst_49 = arith.constant 0.327591091 : f32
    %135 = vector.broadcast %cst_49 : f32 to vector<8x128xf32>
    %136 = arith.mulf %135, %134 : vector<8x128xf32>
    %cst_50 = arith.constant 1.000000e+00 : f32
    %137 = vector.broadcast %cst_50 : f32 to vector<8x128xf32>
    %138 = arith.addf %137, %136 : vector<8x128xf32>
    %139 = tpu.reciprocal %138 {approx = true} : vector<8x128xf32> -> vector<8x128xf32>
    %cst_51 = arith.constant 1.06140542 : f32
    %140 = vector.broadcast %cst_51 : f32 to vector<8x128xf32>
    %141 = arith.mulf %140, %139 : vector<8x128xf32>
    %cst_52 = arith.constant -1.45315206 : f32
    %142 = vector.broadcast %cst_52 : f32 to vector<8x128xf32>
    %143 = arith.addf %141, %142 : vector<8x128xf32>
    %144 = arith.mulf %143, %139 : vector<8x128xf32>
    %cst_53 = arith.constant 1.42141378 : f32
    %145 = vector.broadcast %cst_53 : f32 to vector<8x128xf32>
    %146 = arith.addf %144, %145 : vector<8x128xf32>
    %147 = arith.mulf %146, %139 : vector<8x128xf32>
    %cst_54 = arith.constant -0.284496725 : f32
    %148 = vector.broadcast %cst_54 : f32 to vector<8x128xf32>
    %149 = arith.addf %147, %148 : vector<8x128xf32>
    %150 = arith.mulf %149, %139 : vector<8x128xf32>
    %cst_55 = arith.constant 0.254829586 : f32
    %151 = vector.broadcast %cst_55 : f32 to vector<8x128xf32>
    %152 = arith.addf %150, %151 : vector<8x128xf32>
    %153 = arith.mulf %152, %139 : vector<8x128xf32>
    %cst_56 = arith.constant 0.000000e+00 : f32
    %154 = vector.broadcast %cst_56 : f32 to vector<8x128xf32>
    %155 = arith.subf %154, %134 : vector<8x128xf32>
    %156 = arith.mulf %155, %134 : vector<8x128xf32>
    %157 = math.exp %156 : vector<8x128xf32>
    %158 = arith.mulf %153, %157 : vector<8x128xf32>
    %cst_57 = arith.constant 1.000000e+00 : f32
    %159 = vector.broadcast %cst_57 : f32 to vector<8x128xf32>
    %160 = arith.subf %159, %158 : vector<8x128xf32>
    %cst_58 = arith.constant 0.000000e+00 : f32
    %161 = vector.broadcast %cst_58 : f32 to vector<8x128xf32>
    %162 = arith.cmpf oge, %133, %161 : vector<8x128xf32>
    %cst_59 = arith.constant 0.000000e+00 : f32
    %163 = vector.broadcast %cst_59 : f32 to vector<8x128xf32>
    %164 = arith.subf %163, %160 : vector<8x128xf32>
    %165 = arith.select %162, %160, %164 : vector<8x128xi1>, vector<8x128xf32>
    %cst_60 = arith.constant 1.000000e+00 : f32
    %166 = vector.broadcast %cst_60 : f32 to vector<8x128xf32>
    %167 = arith.addf %166, %165 : vector<8x128xf32>
    %168 = arith.mulf %131, %167 : vector<8x128xf32>
    %c0_61 = arith.constant 0 : index
    %c0_62 = arith.constant 0 : index
    %c0_63 = arith.constant 0 : index
    %c0_64 = arith.constant 0 : index
    %169 = vector.load %arg7[%c0_61, %c0_62, %c0_63, %c0_64] : memref<2x2x128x32xbf16, #tpu.memory_space<vmem>>, vector<1x1x128x32xbf16>
    %170 = vector.shape_cast %169 : vector<1x1x128x32xbf16> to vector<128x32xbf16>
    %171 = arith.truncf %168 : vector<8x128xf32> to vector<8x128xbf16>
    %cst_65 = arith.constant dense<0.000000e+00> : vector<8x32xf32>
    %172 = tpu.matmul %171, %170, %cst_65 {dimension_numbers = #tpu.dot_dimension_numbers<[1], [0], [0], [1], [0, 0, 1, 1], [], []>} : vector<8x128xbf16>, vector<128x32xbf16>, vector<8x32xf32> -> vector<8x32xf32>
    %173 = vector.shape_cast %122 : vector<32xf32> to vector<1x32xf32>
    %174 = vector.broadcast %173 : vector<1x32xf32> to vector<8x32xf32>
    %175 = arith.addf %172, %174 : vector<8x32xf32>
    %176 = arith.addf %88, %175 : vector<8x32xf32>
    %c2 = arith.constant 2 : index
    %c0_66 = arith.constant 0 : index
    %177 = vector.load %arg3[%c2, %c0_66] : memref<22x32xf32, #tpu.memory_space<vmem>>, vector<1x32xf32>
    %178 = vector.shape_cast %177 : vector<1x32xf32> to vector<32xf32>
    %c13 = arith.constant 13 : index
    %c0_67 = arith.constant 0 : index
    %179 = vector.load %arg3[%c13, %c0_67] : memref<22x32xf32, #tpu.memory_space<vmem>>, vector<1x32xf32>
    %180 = vector.shape_cast %179 : vector<1x32xf32> to vector<32xf32>
    %cst_68 = arith.constant dense<0.000000e+00> : vector<8xf32>
    %181 = vector.multi_reduction <add>, %176, %cst_68 [1] : vector<8x32xf32> to vector<8xf32>
    %182 = vector.shape_cast %181 : vector<8xf32> to vector<8x1xf32>
    %cst_69 = arith.constant 3.200000e+01 : f32
    %183 = vector.broadcast %cst_69 : f32 to vector<8x1xf32>
    %184 = arith.divf %182, %183 : vector<8x1xf32>
    %185 = vector.broadcast %184 : vector<8x1xf32> to vector<8x32xf32>
    %186 = arith.subf %176, %185 : vector<8x32xf32>
    %187 = arith.mulf %186, %186 : vector<8x32xf32>
    %cst_70 = arith.constant dense<0.000000e+00> : vector<8xf32>
    %188 = vector.multi_reduction <add>, %187, %cst_70 [1] : vector<8x32xf32> to vector<8xf32>
    %189 = vector.shape_cast %188 : vector<8xf32> to vector<8x1xf32>
    %cst_71 = arith.constant 3.200000e+01 : f32
    %190 = vector.broadcast %cst_71 : f32 to vector<8x1xf32>
    %191 = arith.divf %189, %190 : vector<8x1xf32>
    %192 = vector.broadcast %184 : vector<8x1xf32> to vector<8x32xf32>
    %193 = arith.subf %176, %192 : vector<8x32xf32>
    %cst_72 = arith.constant 9.99999974E-6 : f32
    %194 = vector.broadcast %cst_72 : f32 to vector<8x1xf32>
    %195 = arith.addf %191, %194 : vector<8x1xf32>
    %196 = math.rsqrt %195 : vector<8x1xf32>
    %197 = vector.broadcast %196 : vector<8x1xf32> to vector<8x32xf32>
    %198 = arith.mulf %193, %197 : vector<8x32xf32>
    %199 = vector.shape_cast %178 : vector<32xf32> to vector<1x32xf32>
    %200 = vector.broadcast %199 : vector<1x32xf32> to vector<8x32xf32>
    %201 = arith.mulf %198, %200 : vector<8x32xf32>
    %202 = vector.shape_cast %180 : vector<32xf32> to vector<1x32xf32>
    %203 = vector.broadcast %202 : vector<1x32xf32> to vector<8x32xf32>
    %204 = arith.addf %201, %203 : vector<8x32xf32>
    %c3 = arith.constant 3 : index
    %c0_73 = arith.constant 0 : index
    %205 = vector.load %arg3[%c3, %c0_73] : memref<22x32xf32, #tpu.memory_space<vmem>>, vector<1x32xf32>
    %206 = vector.shape_cast %205 : vector<1x32xf32> to vector<32xf32>
    %c14 = arith.constant 14 : index
    %c0_74 = arith.constant 0 : index
    %207 = vector.load %arg3[%c14, %c0_74] : memref<22x32xf32, #tpu.memory_space<vmem>>, vector<1x32xf32>
    %208 = vector.shape_cast %207 : vector<1x32xf32> to vector<32xf32>
    %cst_75 = arith.constant dense<0.000000e+00> : vector<8xf32>
    %209 = vector.multi_reduction <add>, %6, %cst_75 [1] : vector<8x32xf32> to vector<8xf32>
    %210 = vector.shape_cast %209 : vector<8xf32> to vector<8x1xf32>
    %cst_76 = arith.constant 3.200000e+01 : f32
    %211 = vector.broadcast %cst_76 : f32 to vector<8x1xf32>
    %212 = arith.divf %210, %211 : vector<8x1xf32>
    %213 = vector.broadcast %212 : vector<8x1xf32> to vector<8x32xf32>
    %214 = arith.subf %6, %213 : vector<8x32xf32>
    %215 = arith.mulf %214, %214 : vector<8x32xf32>
    %cst_77 = arith.constant dense<0.000000e+00> : vector<8xf32>
    %216 = vector.multi_reduction <add>, %215, %cst_77 [1] : vector<8x32xf32> to vector<8xf32>
    %217 = vector.shape_cast %216 : vector<8xf32> to vector<8x1xf32>
    %cst_78 = arith.constant 3.200000e+01 : f32
    %218 = vector.broadcast %cst_78 : f32 to vector<8x1xf32>
    %219 = arith.divf %217, %218 : vector<8x1xf32>
    %220 = vector.broadcast %212 : vector<8x1xf32> to vector<8x32xf32>
    %221 = arith.subf %6, %220 : vector<8x32xf32>
    %cst_79 = arith.constant 9.99999974E-6 : f32
    %222 = vector.broadcast %cst_79 : f32 to vector<8x1xf32>
    %223 = arith.addf %219, %222 : vector<8x1xf32>
    %224 = math.rsqrt %223 : vector<8x1xf32>
    %225 = vector.broadcast %224 : vector<8x1xf32> to vector<8x32xf32>
    %226 = arith.mulf %221, %225 : vector<8x32xf32>
    %227 = vector.shape_cast %206 : vector<32xf32> to vector<1x32xf32>
    %228 = vector.broadcast %227 : vector<1x32xf32> to vector<8x32xf32>
    %229 = arith.mulf %226, %228 : vector<8x32xf32>
    %230 = vector.shape_cast %208 : vector<32xf32> to vector<1x32xf32>
    %231 = vector.broadcast %230 : vector<1x32xf32> to vector<8x32xf32>
    %232 = arith.addf %229, %231 : vector<8x32xf32>
    %c0_80 = arith.constant 0 : index
    %c1_81 = arith.constant 1 : index
    %c0_82 = arith.constant 0 : index
    %c0_83 = arith.constant 0 : index
    %233 = vector.load %arg4[%c0_80, %c1_81, %c0_82, %c0_83] : memref<2x2x32x96xbf16, #tpu.memory_space<vmem>>, vector<1x1x32x96xbf16>
    %234 = vector.shape_cast %233 : vector<1x1x32x96xbf16> to vector<32x96xbf16>
    %c0_84 = arith.constant 0 : index
    %c1_85 = arith.constant 1 : index
    %c0_86 = arith.constant 0 : index
    %c0_87 = arith.constant 0 : index
    %235 = vector.load %arg8[%c0_84, %c1_85, %c0_86, %c0_87] : memref<2x2x4x128xf32, #tpu.memory_space<vmem>>, vector<1x1x4x128xf32>
    %236 = vector.shape_cast %235 : vector<1x1x4x128xf32> to vector<4x128xf32>
    %237 = vector.extract_strided_slice %236 {offsets = [0, 0], sizes = [1, 96], strides = [1, 1]} : vector<4x128xf32> to vector<1x96xf32>
    %238 = vector.shape_cast %237 : vector<1x96xf32> to vector<96xf32>
    %239 = vector.extract_strided_slice %236 {offsets = [2, 0], sizes = [1, 32], strides = [1, 1]} : vector<4x128xf32> to vector<1x32xf32>
    %240 = vector.shape_cast %239 : vector<1x32xf32> to vector<32xf32>
    %241 = vector.extract_strided_slice %234 {offsets = [0, 0], sizes = [32, 32], strides = [1, 1]} : vector<32x96xbf16> to vector<32x32xbf16>
    %242 = arith.truncf %204 : vector<8x32xf32> to vector<8x32xbf16>
    %cst_88 = arith.constant dense<0.000000e+00> : vector<8x32xf32>
    %243 = tpu.matmul %242, %241, %cst_88 {dimension_numbers = #tpu.dot_dimension_numbers<[1], [0], [0], [1], [0, 0, 1, 1], [], []>} : vector<8x32xbf16>, vector<32x32xbf16>, vector<8x32xf32> -> vector<8x32xf32>
    %244 = vector.extract_strided_slice %238 {offsets = [0], sizes = [32], strides = [1]} : vector<96xf32> to vector<32xf32>
    %245 = vector.shape_cast %244 : vector<32xf32> to vector<1x32xf32>
    %246 = vector.broadcast %245 : vector<1x32xf32> to vector<8x32xf32>
    %247 = arith.addf %243, %246 : vector<8x32xf32>
    %248 = vector.shape_cast %247 : vector<8x32xf32> to vector<8x4x8xf32>
    %249 = tpu.transpose %248, [1, 0, 2] : vector<8x4x8xf32> -> vector<4x8x8xf32>
    %250 = vector.extract_strided_slice %234 {offsets = [0, 32], sizes = [32, 64], strides = [1, 1]} : vector<32x96xbf16> to vector<32x64xbf16>
    %251 = arith.truncf %232 : vector<8x32xf32> to vector<8x32xbf16>
    %cst_89 = arith.constant dense<0.000000e+00> : vector<8x64xf32>
    %252 = tpu.matmul %251, %250, %cst_89 {dimension_numbers = #tpu.dot_dimension_numbers<[1], [0], [0], [1], [0, 0, 1, 1], [], []>} : vector<8x32xbf16>, vector<32x64xbf16>, vector<8x64xf32> -> vector<8x64xf32>
    %253 = vector.extract_strided_slice %238 {offsets = [32], sizes = [64], strides = [1]} : vector<96xf32> to vector<64xf32>
    %254 = vector.shape_cast %253 : vector<64xf32> to vector<1x64xf32>
    %255 = vector.broadcast %254 : vector<1x64xf32> to vector<8x64xf32>
    %256 = arith.addf %252, %255 : vector<8x64xf32>
    %257 = vector.extract_strided_slice %256 {offsets = [0, 0], sizes = [8, 32], strides = [1, 1]} : vector<8x64xf32> to vector<8x32xf32>
    %258 = vector.shape_cast %257 : vector<8x32xf32> to vector<8x4x8xf32>
    %259 = tpu.transpose %258, [1, 0, 2] : vector<8x4x8xf32> -> vector<4x8x8xf32>
    %260 = vector.extract_strided_slice %256 {offsets = [0, 32], sizes = [8, 32], strides = [1, 1]} : vector<8x64xf32> to vector<8x32xf32>
    %261 = vector.shape_cast %260 : vector<8x32xf32> to vector<8x4x8xf32>
    %262 = tpu.transpose %261, [1, 0, 2] : vector<8x4x8xf32> -> vector<4x8x8xf32>
    %cst_90 = arith.constant 0.353553385 : f32
    %263 = vector.broadcast %cst_90 : f32 to vector<4x8x8xf32>
    %264 = arith.mulf %249, %263 : vector<4x8x8xf32>
    %265 = arith.truncf %264 : vector<4x8x8xf32> to vector<4x8x8xbf16>
    %266 = arith.truncf %259 : vector<4x8x8xf32> to vector<4x8x8xbf16>
    "tpu.trace_start"() <{level = 10 : i32, message = "hnd,hmd->hnm"}> : () -> ()
    %cst_91 = arith.constant dense<0.000000e+00> : vector<4x8x8xf32>
    %267 = tpu.matmul %265, %266, %cst_91 {dimension_numbers = #tpu.dot_dimension_numbers<[2], [2], [1], [1], [0, 0, 0, 1, 1, 1], [0], [0]>} : vector<4x8x8xbf16>, vector<4x8x8xbf16>, vector<4x8x8xf32> -> vector<4x8x8xf32>
    "tpu.trace_stop"() : () -> ()
    %cst_92 = arith.constant dense<0xFF800000> : vector<4x8xf32>
    %268 = vector.multi_reduction <maximumf>, %267, %cst_92 [2] : vector<4x8x8xf32> to vector<4x8xf32>
    %269 = vector.shape_cast %268 : vector<4x8xf32> to vector<4x8x1xf32>
    %270 = vector.broadcast %269 : vector<4x8x1xf32> to vector<4x8x8xf32>
    %271 = arith.subf %267, %270 : vector<4x8x8xf32>
    %272 = math.exp %271 : vector<4x8x8xf32>
    %cst_93 = arith.constant dense<0.000000e+00> : vector<4x8xf32>
    %273 = vector.multi_reduction <add>, %272, %cst_93 [2] : vector<4x8x8xf32> to vector<4x8xf32>
    %274 = vector.shape_cast %273 : vector<4x8xf32> to vector<4x8x1xf32>
    %275 = tpu.reciprocal %274 {approx = true} : vector<4x8x1xf32> -> vector<4x8x1xf32>
    %276 = vector.broadcast %275 : vector<4x8x1xf32> to vector<4x8x8xf32>
    %277 = arith.mulf %272, %276 : vector<4x8x8xf32>
    %278 = arith.truncf %277 : vector<4x8x8xf32> to vector<4x8x8xbf16>
    %279 = arith.truncf %262 : vector<4x8x8xf32> to vector<4x8x8xbf16>
    "tpu.trace_start"() <{level = 10 : i32, message = "hnm,hmd->hnd"}> : () -> ()
    %cst_94 = arith.constant dense<0.000000e+00> : vector<4x8x8xf32>
    %280 = tpu.matmul %278, %279, %cst_94 {dimension_numbers = #tpu.dot_dimension_numbers<[2], [1], [1], [2], [0, 0, 0, 1, 1, 2], [0], [0]>} : vector<4x8x8xbf16>, vector<4x8x8xbf16>, vector<4x8x8xf32> -> vector<4x8x8xf32>
    "tpu.trace_stop"() : () -> ()
    %281 = tpu.transpose %280, [1, 0, 2] : vector<4x8x8xf32> -> vector<8x4x8xf32>
    %282 = vector.shape_cast %281 : vector<8x4x8xf32> to vector<8x32xf32>
    %c0_95 = arith.constant 0 : index
    %c1_96 = arith.constant 1 : index
    %c0_97 = arith.constant 0 : index
    %c0_98 = arith.constant 0 : index
    %283 = vector.load %arg5[%c0_95, %c1_96, %c0_97, %c0_98] : memref<2x2x32x32xbf16, #tpu.memory_space<vmem>>, vector<1x1x32x32xbf16>
    %284 = vector.shape_cast %283 : vector<1x1x32x32xbf16> to vector<32x32xbf16>
    %285 = arith.truncf %282 : vector<8x32xf32> to vector<8x32xbf16>
    %cst_99 = arith.constant dense<0.000000e+00> : vector<8x32xf32>
    %286 = tpu.matmul %285, %284, %cst_99 {dimension_numbers = #tpu.dot_dimension_numbers<[1], [0], [0], [1], [0, 0, 1, 1], [], []>} : vector<8x32xbf16>, vector<32x32xbf16>, vector<8x32xf32> -> vector<8x32xf32>
    %287 = vector.shape_cast %240 : vector<32xf32> to vector<1x32xf32>
    %288 = vector.broadcast %287 : vector<1x32xf32> to vector<8x32xf32>
    %289 = arith.addf %286, %288 : vector<8x32xf32>
    %290 = arith.addf %176, %289 : vector<8x32xf32>
    %c4 = arith.constant 4 : index
    %c0_100 = arith.constant 0 : index
    %291 = vector.load %arg3[%c4, %c0_100] : memref<22x32xf32, #tpu.memory_space<vmem>>, vector<1x32xf32>
    %292 = vector.shape_cast %291 : vector<1x32xf32> to vector<32xf32>
    %c15 = arith.constant 15 : index
    %c0_101 = arith.constant 0 : index
    %293 = vector.load %arg3[%c15, %c0_101] : memref<22x32xf32, #tpu.memory_space<vmem>>, vector<1x32xf32>
    %294 = vector.shape_cast %293 : vector<1x32xf32> to vector<32xf32>
    %cst_102 = arith.constant dense<0.000000e+00> : vector<8xf32>
    %295 = vector.multi_reduction <add>, %290, %cst_102 [1] : vector<8x32xf32> to vector<8xf32>
    %296 = vector.shape_cast %295 : vector<8xf32> to vector<8x1xf32>
    %cst_103 = arith.constant 3.200000e+01 : f32
    %297 = vector.broadcast %cst_103 : f32 to vector<8x1xf32>
    %298 = arith.divf %296, %297 : vector<8x1xf32>
    %299 = vector.broadcast %298 : vector<8x1xf32> to vector<8x32xf32>
    %300 = arith.subf %290, %299 : vector<8x32xf32>
    %301 = arith.mulf %300, %300 : vector<8x32xf32>
    %cst_104 = arith.constant dense<0.000000e+00> : vector<8xf32>
    %302 = vector.multi_reduction <add>, %301, %cst_104 [1] : vector<8x32xf32> to vector<8xf32>
    %303 = vector.shape_cast %302 : vector<8xf32> to vector<8x1xf32>
    %cst_105 = arith.constant 3.200000e+01 : f32
    %304 = vector.broadcast %cst_105 : f32 to vector<8x1xf32>
    %305 = arith.divf %303, %304 : vector<8x1xf32>
    %306 = vector.broadcast %298 : vector<8x1xf32> to vector<8x32xf32>
    %307 = arith.subf %290, %306 : vector<8x32xf32>
    %cst_106 = arith.constant 9.99999974E-6 : f32
    %308 = vector.broadcast %cst_106 : f32 to vector<8x1xf32>
    %309 = arith.addf %305, %308 : vector<8x1xf32>
    %310 = math.rsqrt %309 : vector<8x1xf32>
    %311 = vector.broadcast %310 : vector<8x1xf32> to vector<8x32xf32>
    %312 = arith.mulf %307, %311 : vector<8x32xf32>
    %313 = vector.shape_cast %292 : vector<32xf32> to vector<1x32xf32>
    %314 = vector.broadcast %313 : vector<1x32xf32> to vector<8x32xf32>
    %315 = arith.mulf %312, %314 : vector<8x32xf32>
    %316 = vector.shape_cast %294 : vector<32xf32> to vector<1x32xf32>
    %317 = vector.broadcast %316 : vector<1x32xf32> to vector<8x32xf32>
    %318 = arith.addf %315, %317 : vector<8x32xf32>
    %c0_107 = arith.constant 0 : index
    %c1_108 = arith.constant 1 : index
    %c0_109 = arith.constant 0 : index
    %c0_110 = arith.constant 0 : index
    %319 = vector.load %arg8[%c0_107, %c1_108, %c0_109, %c0_110] : memref<2x2x4x128xf32, #tpu.memory_space<vmem>>, vector<1x1x4x128xf32>
    %320 = vector.shape_cast %319 : vector<1x1x4x128xf32> to vector<4x128xf32>
    %321 = vector.extract_strided_slice %320 {offsets = [1, 0], sizes = [1, 128], strides = [1, 1]} : vector<4x128xf32> to vector<1x128xf32>
    %322 = vector.shape_cast %321 : vector<1x128xf32> to vector<128xf32>
    %323 = vector.extract_strided_slice %320 {offsets = [3, 0], sizes = [1, 32], strides = [1, 1]} : vector<4x128xf32> to vector<1x32xf32>
    %324 = vector.shape_cast %323 : vector<1x32xf32> to vector<32xf32>
    %c0_111 = arith.constant 0 : index
    %c1_112 = arith.constant 1 : index
    %c0_113 = arith.constant 0 : index
    %c0_114 = arith.constant 0 : index
    %325 = vector.load %arg6[%c0_111, %c1_112, %c0_113, %c0_114] : memref<2x2x32x128xbf16, #tpu.memory_space<vmem>>, vector<1x1x32x128xbf16>
    %326 = vector.shape_cast %325 : vector<1x1x32x128xbf16> to vector<32x128xbf16>
    %327 = arith.truncf %318 : vector<8x32xf32> to vector<8x32xbf16>
    %cst_115 = arith.constant dense<0.000000e+00> : vector<8x128xf32>
    %328 = tpu.matmul %327, %326, %cst_115 {dimension_numbers = #tpu.dot_dimension_numbers<[1], [0], [0], [1], [0, 0, 1, 1], [], []>} : vector<8x32xbf16>, vector<32x128xbf16>, vector<8x128xf32> -> vector<8x128xf32>
    %329 = vector.shape_cast %322 : vector<128xf32> to vector<1x128xf32>
    %330 = vector.broadcast %329 : vector<1x128xf32> to vector<8x128xf32>
    %331 = arith.addf %328, %330 : vector<8x128xf32>
    %cst_116 = arith.constant 5.000000e-01 : f32
    %332 = vector.broadcast %cst_116 : f32 to vector<8x128xf32>
    %333 = arith.mulf %332, %331 : vector<8x128xf32>
    %cst_117 = arith.constant 0.707106769 : f32
    %334 = vector.broadcast %cst_117 : f32 to vector<8x128xf32>
    %335 = arith.mulf %331, %334 : vector<8x128xf32>
    %336 = math.absf %335 : vector<8x128xf32>
    %cst_118 = arith.constant 0.327591091 : f32
    %337 = vector.broadcast %cst_118 : f32 to vector<8x128xf32>
    %338 = arith.mulf %337, %336 : vector<8x128xf32>
    %cst_119 = arith.constant 1.000000e+00 : f32
    %339 = vector.broadcast %cst_119 : f32 to vector<8x128xf32>
    %340 = arith.addf %339, %338 : vector<8x128xf32>
    %341 = tpu.reciprocal %340 {approx = true} : vector<8x128xf32> -> vector<8x128xf32>
    %cst_120 = arith.constant 1.06140542 : f32
    %342 = vector.broadcast %cst_120 : f32 to vector<8x128xf32>
    %343 = arith.mulf %342, %341 : vector<8x128xf32>
    %cst_121 = arith.constant -1.45315206 : f32
    %344 = vector.broadcast %cst_121 : f32 to vector<8x128xf32>
    %345 = arith.addf %343, %344 : vector<8x128xf32>
    %346 = arith.mulf %345, %341 : vector<8x128xf32>
    %cst_122 = arith.constant 1.42141378 : f32
    %347 = vector.broadcast %cst_122 : f32 to vector<8x128xf32>
    %348 = arith.addf %346, %347 : vector<8x128xf32>
    %349 = arith.mulf %348, %341 : vector<8x128xf32>
    %cst_123 = arith.constant -0.284496725 : f32
    %350 = vector.broadcast %cst_123 : f32 to vector<8x128xf32>
    %351 = arith.addf %349, %350 : vector<8x128xf32>
    %352 = arith.mulf %351, %341 : vector<8x128xf32>
    %cst_124 = arith.constant 0.254829586 : f32
    %353 = vector.broadcast %cst_124 : f32 to vector<8x128xf32>
    %354 = arith.addf %352, %353 : vector<8x128xf32>
    %355 = arith.mulf %354, %341 : vector<8x128xf32>
    %cst_125 = arith.constant 0.000000e+00 : f32
    %356 = vector.broadcast %cst_125 : f32 to vector<8x128xf32>
    %357 = arith.subf %356, %336 : vector<8x128xf32>
    %358 = arith.mulf %357, %336 : vector<8x128xf32>
    %359 = math.exp %358 : vector<8x128xf32>
    %360 = arith.mulf %355, %359 : vector<8x128xf32>
    %cst_126 = arith.constant 1.000000e+00 : f32
    %361 = vector.broadcast %cst_126 : f32 to vector<8x128xf32>
    %362 = arith.subf %361, %360 : vector<8x128xf32>
    %cst_127 = arith.constant 0.000000e+00 : f32
    %363 = vector.broadcast %cst_127 : f32 to vector<8x128xf32>
    %364 = arith.cmpf oge, %335, %363 : vector<8x128xf32>
    %cst_128 = arith.constant 0.000000e+00 : f32
    %365 = vector.broadcast %cst_128 : f32 to vector<8x128xf32>
    %366 = arith.subf %365, %362 : vector<8x128xf32>
    %367 = arith.select %364, %362, %366 : vector<8x128xi1>, vector<8x128xf32>
    %cst_129 = arith.constant 1.000000e+00 : f32
    %368 = vector.broadcast %cst_129 : f32 to vector<8x128xf32>
    %369 = arith.addf %368, %367 : vector<8x128xf32>
    %370 = arith.mulf %333, %369 : vector<8x128xf32>
    %c0_130 = arith.constant 0 : index
    %c1_131 = arith.constant 1 : index
    %c0_132 = arith.constant 0 : index
    %c0_133 = arith.constant 0 : index
    %371 = vector.load %arg7[%c0_130, %c1_131, %c0_132, %c0_133] : memref<2x2x128x32xbf16, #tpu.memory_space<vmem>>, vector<1x1x128x32xbf16>
    %372 = vector.shape_cast %371 : vector<1x1x128x32xbf16> to vector<128x32xbf16>
    %373 = arith.truncf %370 : vector<8x128xf32> to vector<8x128xbf16>
    %cst_134 = arith.constant dense<0.000000e+00> : vector<8x32xf32>
    %374 = tpu.matmul %373, %372, %cst_134 {dimension_numbers = #tpu.dot_dimension_numbers<[1], [0], [0], [1], [0, 0, 1, 1], [], []>} : vector<8x128xbf16>, vector<128x32xbf16>, vector<8x32xf32> -> vector<8x32xf32>
    %375 = vector.shape_cast %324 : vector<32xf32> to vector<1x32xf32>
    %376 = vector.broadcast %375 : vector<1x32xf32> to vector<8x32xf32>
    %377 = arith.addf %374, %376 : vector<8x32xf32>
    %378 = arith.addf %290, %377 : vector<8x32xf32>
    %c5 = arith.constant 5 : index
    %c0_135 = arith.constant 0 : index
    %379 = vector.load %arg3[%c5, %c0_135] : memref<22x32xf32, #tpu.memory_space<vmem>>, vector<1x32xf32>
    %380 = vector.shape_cast %379 : vector<1x32xf32> to vector<32xf32>
    %c16 = arith.constant 16 : index
    %c0_136 = arith.constant 0 : index
    %381 = vector.load %arg3[%c16, %c0_136] : memref<22x32xf32, #tpu.memory_space<vmem>>, vector<1x32xf32>
    %382 = vector.shape_cast %381 : vector<1x32xf32> to vector<32xf32>
    %cst_137 = arith.constant dense<0.000000e+00> : vector<8xf32>
    %383 = vector.multi_reduction <add>, %378, %cst_137 [1] : vector<8x32xf32> to vector<8xf32>
    %384 = vector.shape_cast %383 : vector<8xf32> to vector<8x1xf32>
    %cst_138 = arith.constant 3.200000e+01 : f32
    %385 = vector.broadcast %cst_138 : f32 to vector<8x1xf32>
    %386 = arith.divf %384, %385 : vector<8x1xf32>
    %387 = vector.broadcast %386 : vector<8x1xf32> to vector<8x32xf32>
    %388 = arith.subf %378, %387 : vector<8x32xf32>
    %389 = arith.mulf %388, %388 : vector<8x32xf32>
    %cst_139 = arith.constant dense<0.000000e+00> : vector<8xf32>
    %390 = vector.multi_reduction <add>, %389, %cst_139 [1] : vector<8x32xf32> to vector<8xf32>
    %391 = vector.shape_cast %390 : vector<8xf32> to vector<8x1xf32>
    %cst_140 = arith.constant 3.200000e+01 : f32
    %392 = vector.broadcast %cst_140 : f32 to vector<8x1xf32>
    %393 = arith.divf %391, %392 : vector<8x1xf32>
    %394 = vector.broadcast %386 : vector<8x1xf32> to vector<8x32xf32>
    %395 = arith.subf %378, %394 : vector<8x32xf32>
    %cst_141 = arith.constant 9.99999974E-6 : f32
    %396 = vector.broadcast %cst_141 : f32 to vector<8x1xf32>
    %397 = arith.addf %393, %396 : vector<8x1xf32>
    %398 = math.rsqrt %397 : vector<8x1xf32>
    %399 = vector.broadcast %398 : vector<8x1xf32> to vector<8x32xf32>
    %400 = arith.mulf %395, %399 : vector<8x32xf32>
    %401 = vector.shape_cast %380 : vector<32xf32> to vector<1x32xf32>
    %402 = vector.broadcast %401 : vector<1x32xf32> to vector<8x32xf32>
    %403 = arith.mulf %400, %402 : vector<8x32xf32>
    %404 = vector.shape_cast %382 : vector<32xf32> to vector<1x32xf32>
    %405 = vector.broadcast %404 : vector<1x32xf32> to vector<8x32xf32>
    %406 = arith.addf %403, %405 : vector<8x32xf32>
    %c1_142 = arith.constant 1 : index
    %c0_143 = arith.constant 0 : index
    %c0_144 = arith.constant 0 : index
    %c0_145 = arith.constant 0 : index
    %407 = vector.load %arg4[%c1_142, %c0_143, %c0_144, %c0_145] : memref<2x2x32x96xbf16, #tpu.memory_space<vmem>>, vector<1x1x32x96xbf16>
    %408 = vector.shape_cast %407 : vector<1x1x32x96xbf16> to vector<32x96xbf16>
    %c1_146 = arith.constant 1 : index
    %c0_147 = arith.constant 0 : index
    %c0_148 = arith.constant 0 : index
    %c0_149 = arith.constant 0 : index
    %409 = vector.load %arg8[%c1_146, %c0_147, %c0_148, %c0_149] : memref<2x2x4x128xf32, #tpu.memory_space<vmem>>, vector<1x1x4x128xf32>
    %410 = vector.shape_cast %409 : vector<1x1x4x128xf32> to vector<4x128xf32>
    %411 = vector.extract_strided_slice %410 {offsets = [0, 0], sizes = [1, 96], strides = [1, 1]} : vector<4x128xf32> to vector<1x96xf32>
    %412 = vector.shape_cast %411 : vector<1x96xf32> to vector<96xf32>
    %413 = vector.extract_strided_slice %410 {offsets = [2, 0], sizes = [1, 32], strides = [1, 1]} : vector<4x128xf32> to vector<1x32xf32>
    %414 = vector.shape_cast %413 : vector<1x32xf32> to vector<32xf32>
    %415 = arith.truncf %406 : vector<8x32xf32> to vector<8x32xbf16>
    %cst_150 = arith.constant dense<0.000000e+00> : vector<8x96xf32>
    %416 = tpu.matmul %415, %408, %cst_150 {dimension_numbers = #tpu.dot_dimension_numbers<[1], [0], [0], [1], [0, 0, 1, 1], [], []>} : vector<8x32xbf16>, vector<32x96xbf16>, vector<8x96xf32> -> vector<8x96xf32>
    %417 = vector.shape_cast %412 : vector<96xf32> to vector<1x96xf32>
    %418 = vector.broadcast %417 : vector<1x96xf32> to vector<8x96xf32>
    %419 = arith.addf %416, %418 : vector<8x96xf32>
    %420 = vector.extract_strided_slice %419 {offsets = [0, 0], sizes = [8, 32], strides = [1, 1]} : vector<8x96xf32> to vector<8x32xf32>
    %421 = vector.shape_cast %420 : vector<8x32xf32> to vector<8x4x8xf32>
    %422 = tpu.transpose %421, [1, 0, 2] : vector<8x4x8xf32> -> vector<4x8x8xf32>
    %423 = vector.extract_strided_slice %419 {offsets = [0, 32], sizes = [8, 32], strides = [1, 1]} : vector<8x96xf32> to vector<8x32xf32>
    %424 = vector.shape_cast %423 : vector<8x32xf32> to vector<8x4x8xf32>
    %425 = tpu.transpose %424, [1, 0, 2] : vector<8x4x8xf32> -> vector<4x8x8xf32>
    %426 = vector.extract_strided_slice %419 {offsets = [0, 64], sizes = [8, 32], strides = [1, 1]} : vector<8x96xf32> to vector<8x32xf32>
    %427 = vector.shape_cast %426 : vector<8x32xf32> to vector<8x4x8xf32>
    %428 = tpu.transpose %427, [1, 0, 2] : vector<8x4x8xf32> -> vector<4x8x8xf32>
    %cst_151 = arith.constant 0.353553385 : f32
    %429 = vector.broadcast %cst_151 : f32 to vector<4x8x8xf32>
    %430 = arith.mulf %422, %429 : vector<4x8x8xf32>
    %431 = arith.truncf %430 : vector<4x8x8xf32> to vector<4x8x8xbf16>
    %432 = arith.truncf %425 : vector<4x8x8xf32> to vector<4x8x8xbf16>
    "tpu.trace_start"() <{level = 10 : i32, message = "hnd,hmd->hnm"}> : () -> ()
    %cst_152 = arith.constant dense<0.000000e+00> : vector<4x8x8xf32>
    %433 = tpu.matmul %431, %432, %cst_152 {dimension_numbers = #tpu.dot_dimension_numbers<[2], [2], [1], [1], [0, 0, 0, 1, 1, 1], [0], [0]>} : vector<4x8x8xbf16>, vector<4x8x8xbf16>, vector<4x8x8xf32> -> vector<4x8x8xf32>
    "tpu.trace_stop"() : () -> ()
    %434 = vector.shape_cast %5 : vector<8x8xf32> to vector<1x8x8xf32>
    %435 = vector.broadcast %434 : vector<1x8x8xf32> to vector<4x8x8xf32>
    %436 = arith.addf %433, %435 : vector<4x8x8xf32>
    %cst_153 = arith.constant dense<0xFF800000> : vector<4x8xf32>
    %437 = vector.multi_reduction <maximumf>, %436, %cst_153 [2] : vector<4x8x8xf32> to vector<4x8xf32>
    %438 = vector.shape_cast %437 : vector<4x8xf32> to vector<4x8x1xf32>
    %439 = vector.broadcast %438 : vector<4x8x1xf32> to vector<4x8x8xf32>
    %440 = arith.subf %436, %439 : vector<4x8x8xf32>
    %441 = math.exp %440 : vector<4x8x8xf32>
    %cst_154 = arith.constant dense<0.000000e+00> : vector<4x8xf32>
    %442 = vector.multi_reduction <add>, %441, %cst_154 [2] : vector<4x8x8xf32> to vector<4x8xf32>
    %443 = vector.shape_cast %442 : vector<4x8xf32> to vector<4x8x1xf32>
    %444 = tpu.reciprocal %443 {approx = true} : vector<4x8x1xf32> -> vector<4x8x1xf32>
    %445 = vector.broadcast %444 : vector<4x8x1xf32> to vector<4x8x8xf32>
    %446 = arith.mulf %441, %445 : vector<4x8x8xf32>
    %447 = arith.truncf %446 : vector<4x8x8xf32> to vector<4x8x8xbf16>
    %448 = arith.truncf %428 : vector<4x8x8xf32> to vector<4x8x8xbf16>
    "tpu.trace_start"() <{level = 10 : i32, message = "hnm,hmd->hnd"}> : () -> ()
    %cst_155 = arith.constant dense<0.000000e+00> : vector<4x8x8xf32>
    %449 = tpu.matmul %447, %448, %cst_155 {dimension_numbers = #tpu.dot_dimension_numbers<[2], [1], [1], [2], [0, 0, 0, 1, 1, 2], [0], [0]>} : vector<4x8x8xbf16>, vector<4x8x8xbf16>, vector<4x8x8xf32> -> vector<4x8x8xf32>
    "tpu.trace_stop"() : () -> ()
    %450 = tpu.transpose %449, [1, 0, 2] : vector<4x8x8xf32> -> vector<8x4x8xf32>
    %451 = vector.shape_cast %450 : vector<8x4x8xf32> to vector<8x32xf32>
    %c1_156 = arith.constant 1 : index
    %c0_157 = arith.constant 0 : index
    %c0_158 = arith.constant 0 : index
    %c0_159 = arith.constant 0 : index
    %452 = vector.load %arg5[%c1_156, %c0_157, %c0_158, %c0_159] : memref<2x2x32x32xbf16, #tpu.memory_space<vmem>>, vector<1x1x32x32xbf16>
    %453 = vector.shape_cast %452 : vector<1x1x32x32xbf16> to vector<32x32xbf16>
    %454 = arith.truncf %451 : vector<8x32xf32> to vector<8x32xbf16>
    %cst_160 = arith.constant dense<0.000000e+00> : vector<8x32xf32>
    %455 = tpu.matmul %454, %453, %cst_160 {dimension_numbers = #tpu.dot_dimension_numbers<[1], [0], [0], [1], [0, 0, 1, 1], [], []>} : vector<8x32xbf16>, vector<32x32xbf16>, vector<8x32xf32> -> vector<8x32xf32>
    %456 = vector.shape_cast %414 : vector<32xf32> to vector<1x32xf32>
    %457 = vector.broadcast %456 : vector<1x32xf32> to vector<8x32xf32>
    %458 = arith.addf %455, %457 : vector<8x32xf32>
    %459 = arith.addf %378, %458 : vector<8x32xf32>
    %c6 = arith.constant 6 : index
    %c0_161 = arith.constant 0 : index
    %460 = vector.load %arg3[%c6, %c0_161] : memref<22x32xf32, #tpu.memory_space<vmem>>, vector<1x32xf32>
    %461 = vector.shape_cast %460 : vector<1x32xf32> to vector<32xf32>
    %c17 = arith.constant 17 : index
    %c0_162 = arith.constant 0 : index
    %462 = vector.load %arg3[%c17, %c0_162] : memref<22x32xf32, #tpu.memory_space<vmem>>, vector<1x32xf32>
    %463 = vector.shape_cast %462 : vector<1x32xf32> to vector<32xf32>
    %cst_163 = arith.constant dense<0.000000e+00> : vector<8xf32>
    %464 = vector.multi_reduction <add>, %459, %cst_163 [1] : vector<8x32xf32> to vector<8xf32>
    %465 = vector.shape_cast %464 : vector<8xf32> to vector<8x1xf32>
    %cst_164 = arith.constant 3.200000e+01 : f32
    %466 = vector.broadcast %cst_164 : f32 to vector<8x1xf32>
    %467 = arith.divf %465, %466 : vector<8x1xf32>
    %468 = vector.broadcast %467 : vector<8x1xf32> to vector<8x32xf32>
    %469 = arith.subf %459, %468 : vector<8x32xf32>
    %470 = arith.mulf %469, %469 : vector<8x32xf32>
    %cst_165 = arith.constant dense<0.000000e+00> : vector<8xf32>
    %471 = vector.multi_reduction <add>, %470, %cst_165 [1] : vector<8x32xf32> to vector<8xf32>
    %472 = vector.shape_cast %471 : vector<8xf32> to vector<8x1xf32>
    %cst_166 = arith.constant 3.200000e+01 : f32
    %473 = vector.broadcast %cst_166 : f32 to vector<8x1xf32>
    %474 = arith.divf %472, %473 : vector<8x1xf32>
    %475 = vector.broadcast %467 : vector<8x1xf32> to vector<8x32xf32>
    %476 = arith.subf %459, %475 : vector<8x32xf32>
    %cst_167 = arith.constant 9.99999974E-6 : f32
    %477 = vector.broadcast %cst_167 : f32 to vector<8x1xf32>
    %478 = arith.addf %474, %477 : vector<8x1xf32>
    %479 = math.rsqrt %478 : vector<8x1xf32>
    %480 = vector.broadcast %479 : vector<8x1xf32> to vector<8x32xf32>
    %481 = arith.mulf %476, %480 : vector<8x32xf32>
    %482 = vector.shape_cast %461 : vector<32xf32> to vector<1x32xf32>
    %483 = vector.broadcast %482 : vector<1x32xf32> to vector<8x32xf32>
    %484 = arith.mulf %481, %483 : vector<8x32xf32>
    %485 = vector.shape_cast %463 : vector<32xf32> to vector<1x32xf32>
    %486 = vector.broadcast %485 : vector<1x32xf32> to vector<8x32xf32>
    %487 = arith.addf %484, %486 : vector<8x32xf32>
    %c1_168 = arith.constant 1 : index
    %c0_169 = arith.constant 0 : index
    %c0_170 = arith.constant 0 : index
    %c0_171 = arith.constant 0 : index
    %488 = vector.load %arg8[%c1_168, %c0_169, %c0_170, %c0_171] : memref<2x2x4x128xf32, #tpu.memory_space<vmem>>, vector<1x1x4x128xf32>
    %489 = vector.shape_cast %488 : vector<1x1x4x128xf32> to vector<4x128xf32>
    %490 = vector.extract_strided_slice %489 {offsets = [1, 0], sizes = [1, 128], strides = [1, 1]} : vector<4x128xf32> to vector<1x128xf32>
    %491 = vector.shape_cast %490 : vector<1x128xf32> to vector<128xf32>
    %492 = vector.extract_strided_slice %489 {offsets = [3, 0], sizes = [1, 32], strides = [1, 1]} : vector<4x128xf32> to vector<1x32xf32>
    %493 = vector.shape_cast %492 : vector<1x32xf32> to vector<32xf32>
    %c1_172 = arith.constant 1 : index
    %c0_173 = arith.constant 0 : index
    %c0_174 = arith.constant 0 : index
    %c0_175 = arith.constant 0 : index
    %494 = vector.load %arg6[%c1_172, %c0_173, %c0_174, %c0_175] : memref<2x2x32x128xbf16, #tpu.memory_space<vmem>>, vector<1x1x32x128xbf16>
    %495 = vector.shape_cast %494 : vector<1x1x32x128xbf16> to vector<32x128xbf16>
    %496 = arith.truncf %487 : vector<8x32xf32> to vector<8x32xbf16>
    %cst_176 = arith.constant dense<0.000000e+00> : vector<8x128xf32>
    %497 = tpu.matmul %496, %495, %cst_176 {dimension_numbers = #tpu.dot_dimension_numbers<[1], [0], [0], [1], [0, 0, 1, 1], [], []>} : vector<8x32xbf16>, vector<32x128xbf16>, vector<8x128xf32> -> vector<8x128xf32>
    %498 = vector.shape_cast %491 : vector<128xf32> to vector<1x128xf32>
    %499 = vector.broadcast %498 : vector<1x128xf32> to vector<8x128xf32>
    %500 = arith.addf %497, %499 : vector<8x128xf32>
    %cst_177 = arith.constant 5.000000e-01 : f32
    %501 = vector.broadcast %cst_177 : f32 to vector<8x128xf32>
    %502 = arith.mulf %501, %500 : vector<8x128xf32>
    %cst_178 = arith.constant 0.707106769 : f32
    %503 = vector.broadcast %cst_178 : f32 to vector<8x128xf32>
    %504 = arith.mulf %500, %503 : vector<8x128xf32>
    %505 = math.absf %504 : vector<8x128xf32>
    %cst_179 = arith.constant 0.327591091 : f32
    %506 = vector.broadcast %cst_179 : f32 to vector<8x128xf32>
    %507 = arith.mulf %506, %505 : vector<8x128xf32>
    %cst_180 = arith.constant 1.000000e+00 : f32
    %508 = vector.broadcast %cst_180 : f32 to vector<8x128xf32>
    %509 = arith.addf %508, %507 : vector<8x128xf32>
    %510 = tpu.reciprocal %509 {approx = true} : vector<8x128xf32> -> vector<8x128xf32>
    %cst_181 = arith.constant 1.06140542 : f32
    %511 = vector.broadcast %cst_181 : f32 to vector<8x128xf32>
    %512 = arith.mulf %511, %510 : vector<8x128xf32>
    %cst_182 = arith.constant -1.45315206 : f32
    %513 = vector.broadcast %cst_182 : f32 to vector<8x128xf32>
    %514 = arith.addf %512, %513 : vector<8x128xf32>
    %515 = arith.mulf %514, %510 : vector<8x128xf32>
    %cst_183 = arith.constant 1.42141378 : f32
    %516 = vector.broadcast %cst_183 : f32 to vector<8x128xf32>
    %517 = arith.addf %515, %516 : vector<8x128xf32>
    %518 = arith.mulf %517, %510 : vector<8x128xf32>
    %cst_184 = arith.constant -0.284496725 : f32
    %519 = vector.broadcast %cst_184 : f32 to vector<8x128xf32>
    %520 = arith.addf %518, %519 : vector<8x128xf32>
    %521 = arith.mulf %520, %510 : vector<8x128xf32>
    %cst_185 = arith.constant 0.254829586 : f32
    %522 = vector.broadcast %cst_185 : f32 to vector<8x128xf32>
    %523 = arith.addf %521, %522 : vector<8x128xf32>
    %524 = arith.mulf %523, %510 : vector<8x128xf32>
    %cst_186 = arith.constant 0.000000e+00 : f32
    %525 = vector.broadcast %cst_186 : f32 to vector<8x128xf32>
    %526 = arith.subf %525, %505 : vector<8x128xf32>
    %527 = arith.mulf %526, %505 : vector<8x128xf32>
    %528 = math.exp %527 : vector<8x128xf32>
    %529 = arith.mulf %524, %528 : vector<8x128xf32>
    %cst_187 = arith.constant 1.000000e+00 : f32
    %530 = vector.broadcast %cst_187 : f32 to vector<8x128xf32>
    %531 = arith.subf %530, %529 : vector<8x128xf32>
    %cst_188 = arith.constant 0.000000e+00 : f32
    %532 = vector.broadcast %cst_188 : f32 to vector<8x128xf32>
    %533 = arith.cmpf oge, %504, %532 : vector<8x128xf32>
    %cst_189 = arith.constant 0.000000e+00 : f32
    %534 = vector.broadcast %cst_189 : f32 to vector<8x128xf32>
    %535 = arith.subf %534, %531 : vector<8x128xf32>
    %536 = arith.select %533, %531, %535 : vector<8x128xi1>, vector<8x128xf32>
    %cst_190 = arith.constant 1.000000e+00 : f32
    %537 = vector.broadcast %cst_190 : f32 to vector<8x128xf32>
    %538 = arith.addf %537, %536 : vector<8x128xf32>
    %539 = arith.mulf %502, %538 : vector<8x128xf32>
    %c1_191 = arith.constant 1 : index
    %c0_192 = arith.constant 0 : index
    %c0_193 = arith.constant 0 : index
    %c0_194 = arith.constant 0 : index
    %540 = vector.load %arg7[%c1_191, %c0_192, %c0_193, %c0_194] : memref<2x2x128x32xbf16, #tpu.memory_space<vmem>>, vector<1x1x128x32xbf16>
    %541 = vector.shape_cast %540 : vector<1x1x128x32xbf16> to vector<128x32xbf16>
    %542 = arith.truncf %539 : vector<8x128xf32> to vector<8x128xbf16>
    %cst_195 = arith.constant dense<0.000000e+00> : vector<8x32xf32>
    %543 = tpu.matmul %542, %541, %cst_195 {dimension_numbers = #tpu.dot_dimension_numbers<[1], [0], [0], [1], [0, 0, 1, 1], [], []>} : vector<8x128xbf16>, vector<128x32xbf16>, vector<8x32xf32> -> vector<8x32xf32>
    %544 = vector.shape_cast %493 : vector<32xf32> to vector<1x32xf32>
    %545 = vector.broadcast %544 : vector<1x32xf32> to vector<8x32xf32>
    %546 = arith.addf %543, %545 : vector<8x32xf32>
    %547 = arith.addf %459, %546 : vector<8x32xf32>
    %c7 = arith.constant 7 : index
    %c0_196 = arith.constant 0 : index
    %548 = vector.load %arg3[%c7, %c0_196] : memref<22x32xf32, #tpu.memory_space<vmem>>, vector<1x32xf32>
    %549 = vector.shape_cast %548 : vector<1x32xf32> to vector<32xf32>
    %c18 = arith.constant 18 : index
    %c0_197 = arith.constant 0 : index
    %550 = vector.load %arg3[%c18, %c0_197] : memref<22x32xf32, #tpu.memory_space<vmem>>, vector<1x32xf32>
    %551 = vector.shape_cast %550 : vector<1x32xf32> to vector<32xf32>
    %cst_198 = arith.constant dense<0.000000e+00> : vector<8xf32>
    %552 = vector.multi_reduction <add>, %547, %cst_198 [1] : vector<8x32xf32> to vector<8xf32>
    %553 = vector.shape_cast %552 : vector<8xf32> to vector<8x1xf32>
    %cst_199 = arith.constant 3.200000e+01 : f32
    %554 = vector.broadcast %cst_199 : f32 to vector<8x1xf32>
    %555 = arith.divf %553, %554 : vector<8x1xf32>
    %556 = vector.broadcast %555 : vector<8x1xf32> to vector<8x32xf32>
    %557 = arith.subf %547, %556 : vector<8x32xf32>
    %558 = arith.mulf %557, %557 : vector<8x32xf32>
    %cst_200 = arith.constant dense<0.000000e+00> : vector<8xf32>
    %559 = vector.multi_reduction <add>, %558, %cst_200 [1] : vector<8x32xf32> to vector<8xf32>
    %560 = vector.shape_cast %559 : vector<8xf32> to vector<8x1xf32>
    %cst_201 = arith.constant 3.200000e+01 : f32
    %561 = vector.broadcast %cst_201 : f32 to vector<8x1xf32>
    %562 = arith.divf %560, %561 : vector<8x1xf32>
    %563 = vector.broadcast %555 : vector<8x1xf32> to vector<8x32xf32>
    %564 = arith.subf %547, %563 : vector<8x32xf32>
    %cst_202 = arith.constant 9.99999974E-6 : f32
    %565 = vector.broadcast %cst_202 : f32 to vector<8x1xf32>
    %566 = arith.addf %562, %565 : vector<8x1xf32>
    %567 = math.rsqrt %566 : vector<8x1xf32>
    %568 = vector.broadcast %567 : vector<8x1xf32> to vector<8x32xf32>
    %569 = arith.mulf %564, %568 : vector<8x32xf32>
    %570 = vector.shape_cast %549 : vector<32xf32> to vector<1x32xf32>
    %571 = vector.broadcast %570 : vector<1x32xf32> to vector<8x32xf32>
    %572 = arith.mulf %569, %571 : vector<8x32xf32>
    %573 = vector.shape_cast %551 : vector<32xf32> to vector<1x32xf32>
    %574 = vector.broadcast %573 : vector<1x32xf32> to vector<8x32xf32>
    %575 = arith.addf %572, %574 : vector<8x32xf32>
    %c8 = arith.constant 8 : index
    %c0_203 = arith.constant 0 : index
    %576 = vector.load %arg3[%c8, %c0_203] : memref<22x32xf32, #tpu.memory_space<vmem>>, vector<1x32xf32>
    %577 = vector.shape_cast %576 : vector<1x32xf32> to vector<32xf32>
    %c19 = arith.constant 19 : index
    %c0_204 = arith.constant 0 : index
    %578 = vector.load %arg3[%c19, %c0_204] : memref<22x32xf32, #tpu.memory_space<vmem>>, vector<1x32xf32>
    %579 = vector.shape_cast %578 : vector<1x32xf32> to vector<32xf32>
    %cst_205 = arith.constant dense<0.000000e+00> : vector<8xf32>
    %580 = vector.multi_reduction <add>, %6, %cst_205 [1] : vector<8x32xf32> to vector<8xf32>
    %581 = vector.shape_cast %580 : vector<8xf32> to vector<8x1xf32>
    %cst_206 = arith.constant 3.200000e+01 : f32
    %582 = vector.broadcast %cst_206 : f32 to vector<8x1xf32>
    %583 = arith.divf %581, %582 : vector<8x1xf32>
    %584 = vector.broadcast %583 : vector<8x1xf32> to vector<8x32xf32>
    %585 = arith.subf %6, %584 : vector<8x32xf32>
    %586 = arith.mulf %585, %585 : vector<8x32xf32>
    %cst_207 = arith.constant dense<0.000000e+00> : vector<8xf32>
    %587 = vector.multi_reduction <add>, %586, %cst_207 [1] : vector<8x32xf32> to vector<8xf32>
    %588 = vector.shape_cast %587 : vector<8xf32> to vector<8x1xf32>
    %cst_208 = arith.constant 3.200000e+01 : f32
    %589 = vector.broadcast %cst_208 : f32 to vector<8x1xf32>
    %590 = arith.divf %588, %589 : vector<8x1xf32>
    %591 = vector.broadcast %583 : vector<8x1xf32> to vector<8x32xf32>
    %592 = arith.subf %6, %591 : vector<8x32xf32>
    %cst_209 = arith.constant 9.99999974E-6 : f32
    %593 = vector.broadcast %cst_209 : f32 to vector<8x1xf32>
    %594 = arith.addf %590, %593 : vector<8x1xf32>
    %595 = math.rsqrt %594 : vector<8x1xf32>
    %596 = vector.broadcast %595 : vector<8x1xf32> to vector<8x32xf32>
    %597 = arith.mulf %592, %596 : vector<8x32xf32>
    %598 = vector.shape_cast %577 : vector<32xf32> to vector<1x32xf32>
    %599 = vector.broadcast %598 : vector<1x32xf32> to vector<8x32xf32>
    %600 = arith.mulf %597, %599 : vector<8x32xf32>
    %601 = vector.shape_cast %579 : vector<32xf32> to vector<1x32xf32>
    %602 = vector.broadcast %601 : vector<1x32xf32> to vector<8x32xf32>
    %603 = arith.addf %600, %602 : vector<8x32xf32>
    %c1_210 = arith.constant 1 : index
    %c1_211 = arith.constant 1 : index
    %c0_212 = arith.constant 0 : index
    %c0_213 = arith.constant 0 : index
    %604 = vector.load %arg4[%c1_210, %c1_211, %c0_212, %c0_213] : memref<2x2x32x96xbf16, #tpu.memory_space<vmem>>, vector<1x1x32x96xbf16>
    %605 = vector.shape_cast %604 : vector<1x1x32x96xbf16> to vector<32x96xbf16>
    %c1_214 = arith.constant 1 : index
    %c1_215 = arith.constant 1 : index
    %c0_216 = arith.constant 0 : index
    %c0_217 = arith.constant 0 : index
    %606 = vector.load %arg8[%c1_214, %c1_215, %c0_216, %c0_217] : memref<2x2x4x128xf32, #tpu.memory_space<vmem>>, vector<1x1x4x128xf32>
    %607 = vector.shape_cast %606 : vector<1x1x4x128xf32> to vector<4x128xf32>
    %608 = vector.extract_strided_slice %607 {offsets = [0, 0], sizes = [1, 96], strides = [1, 1]} : vector<4x128xf32> to vector<1x96xf32>
    %609 = vector.shape_cast %608 : vector<1x96xf32> to vector<96xf32>
    %610 = vector.extract_strided_slice %607 {offsets = [2, 0], sizes = [1, 32], strides = [1, 1]} : vector<4x128xf32> to vector<1x32xf32>
    %611 = vector.shape_cast %610 : vector<1x32xf32> to vector<32xf32>
    %612 = vector.extract_strided_slice %605 {offsets = [0, 0], sizes = [32, 32], strides = [1, 1]} : vector<32x96xbf16> to vector<32x32xbf16>
    %613 = arith.truncf %575 : vector<8x32xf32> to vector<8x32xbf16>
    %cst_218 = arith.constant dense<0.000000e+00> : vector<8x32xf32>
    %614 = tpu.matmul %613, %612, %cst_218 {dimension_numbers = #tpu.dot_dimension_numbers<[1], [0], [0], [1], [0, 0, 1, 1], [], []>} : vector<8x32xbf16>, vector<32x32xbf16>, vector<8x32xf32> -> vector<8x32xf32>
    %615 = vector.extract_strided_slice %609 {offsets = [0], sizes = [32], strides = [1]} : vector<96xf32> to vector<32xf32>
    %616 = vector.shape_cast %615 : vector<32xf32> to vector<1x32xf32>
    %617 = vector.broadcast %616 : vector<1x32xf32> to vector<8x32xf32>
    %618 = arith.addf %614, %617 : vector<8x32xf32>
    %619 = vector.shape_cast %618 : vector<8x32xf32> to vector<8x4x8xf32>
    %620 = tpu.transpose %619, [1, 0, 2] : vector<8x4x8xf32> -> vector<4x8x8xf32>
    %621 = vector.extract_strided_slice %605 {offsets = [0, 32], sizes = [32, 64], strides = [1, 1]} : vector<32x96xbf16> to vector<32x64xbf16>
    %622 = arith.truncf %603 : vector<8x32xf32> to vector<8x32xbf16>
    %cst_219 = arith.constant dense<0.000000e+00> : vector<8x64xf32>
    %623 = tpu.matmul %622, %621, %cst_219 {dimension_numbers = #tpu.dot_dimension_numbers<[1], [0], [0], [1], [0, 0, 1, 1], [], []>} : vector<8x32xbf16>, vector<32x64xbf16>, vector<8x64xf32> -> vector<8x64xf32>
    %624 = vector.extract_strided_slice %609 {offsets = [32], sizes = [64], strides = [1]} : vector<96xf32> to vector<64xf32>
    %625 = vector.shape_cast %624 : vector<64xf32> to vector<1x64xf32>
    %626 = vector.broadcast %625 : vector<1x64xf32> to vector<8x64xf32>
    %627 = arith.addf %623, %626 : vector<8x64xf32>
    %628 = vector.extract_strided_slice %627 {offsets = [0, 0], sizes = [8, 32], strides = [1, 1]} : vector<8x64xf32> to vector<8x32xf32>
    %629 = vector.shape_cast %628 : vector<8x32xf32> to vector<8x4x8xf32>
    %630 = tpu.transpose %629, [1, 0, 2] : vector<8x4x8xf32> -> vector<4x8x8xf32>
    %631 = vector.extract_strided_slice %627 {offsets = [0, 32], sizes = [8, 32], strides = [1, 1]} : vector<8x64xf32> to vector<8x32xf32>
    %632 = vector.shape_cast %631 : vector<8x32xf32> to vector<8x4x8xf32>
    %633 = tpu.transpose %632, [1, 0, 2] : vector<8x4x8xf32> -> vector<4x8x8xf32>
    %cst_220 = arith.constant 0.353553385 : f32
    %634 = vector.broadcast %cst_220 : f32 to vector<4x8x8xf32>
    %635 = arith.mulf %620, %634 : vector<4x8x8xf32>
    %636 = arith.truncf %635 : vector<4x8x8xf32> to vector<4x8x8xbf16>
    %637 = arith.truncf %630 : vector<4x8x8xf32> to vector<4x8x8xbf16>
    "tpu.trace_start"() <{level = 10 : i32, message = "hnd,hmd->hnm"}> : () -> ()
    %cst_221 = arith.constant dense<0.000000e+00> : vector<4x8x8xf32>
    %638 = tpu.matmul %636, %637, %cst_221 {dimension_numbers = #tpu.dot_dimension_numbers<[2], [2], [1], [1], [0, 0, 0, 1, 1, 1], [0], [0]>} : vector<4x8x8xbf16>, vector<4x8x8xbf16>, vector<4x8x8xf32> -> vector<4x8x8xf32>
    "tpu.trace_stop"() : () -> ()
    %cst_222 = arith.constant dense<0xFF800000> : vector<4x8xf32>
    %639 = vector.multi_reduction <maximumf>, %638, %cst_222 [2] : vector<4x8x8xf32> to vector<4x8xf32>
    %640 = vector.shape_cast %639 : vector<4x8xf32> to vector<4x8x1xf32>
    %641 = vector.broadcast %640 : vector<4x8x1xf32> to vector<4x8x8xf32>
    %642 = arith.subf %638, %641 : vector<4x8x8xf32>
    %643 = math.exp %642 : vector<4x8x8xf32>
    %cst_223 = arith.constant dense<0.000000e+00> : vector<4x8xf32>
    %644 = vector.multi_reduction <add>, %643, %cst_223 [2] : vector<4x8x8xf32> to vector<4x8xf32>
    %645 = vector.shape_cast %644 : vector<4x8xf32> to vector<4x8x1xf32>
    %646 = tpu.reciprocal %645 {approx = true} : vector<4x8x1xf32> -> vector<4x8x1xf32>
    %647 = vector.broadcast %646 : vector<4x8x1xf32> to vector<4x8x8xf32>
    %648 = arith.mulf %643, %647 : vector<4x8x8xf32>
    %649 = arith.truncf %648 : vector<4x8x8xf32> to vector<4x8x8xbf16>
    %650 = arith.truncf %633 : vector<4x8x8xf32> to vector<4x8x8xbf16>
    "tpu.trace_start"() <{level = 10 : i32, message = "hnm,hmd->hnd"}> : () -> ()
    %cst_224 = arith.constant dense<0.000000e+00> : vector<4x8x8xf32>
    %651 = tpu.matmul %649, %650, %cst_224 {dimension_numbers = #tpu.dot_dimension_numbers<[2], [1], [1], [2], [0, 0, 0, 1, 1, 2], [0], [0]>} : vector<4x8x8xbf16>, vector<4x8x8xbf16>, vector<4x8x8xf32> -> vector<4x8x8xf32>
    "tpu.trace_stop"() : () -> ()
    %652 = tpu.transpose %651, [1, 0, 2] : vector<4x8x8xf32> -> vector<8x4x8xf32>
    %653 = vector.shape_cast %652 : vector<8x4x8xf32> to vector<8x32xf32>
    %c1_225 = arith.constant 1 : index
    %c1_226 = arith.constant 1 : index
    %c0_227 = arith.constant 0 : index
    %c0_228 = arith.constant 0 : index
    %654 = vector.load %arg5[%c1_225, %c1_226, %c0_227, %c0_228] : memref<2x2x32x32xbf16, #tpu.memory_space<vmem>>, vector<1x1x32x32xbf16>
    %655 = vector.shape_cast %654 : vector<1x1x32x32xbf16> to vector<32x32xbf16>
    %656 = arith.truncf %653 : vector<8x32xf32> to vector<8x32xbf16>
    %cst_229 = arith.constant dense<0.000000e+00> : vector<8x32xf32>
    %657 = tpu.matmul %656, %655, %cst_229 {dimension_numbers = #tpu.dot_dimension_numbers<[1], [0], [0], [1], [0, 0, 1, 1], [], []>} : vector<8x32xbf16>, vector<32x32xbf16>, vector<8x32xf32> -> vector<8x32xf32>
    %658 = vector.shape_cast %611 : vector<32xf32> to vector<1x32xf32>
    %659 = vector.broadcast %658 : vector<1x32xf32> to vector<8x32xf32>
    %660 = arith.addf %657, %659 : vector<8x32xf32>
    %661 = arith.addf %547, %660 : vector<8x32xf32>
    %c9 = arith.constant 9 : index
    %c0_230 = arith.constant 0 : index
    %662 = vector.load %arg3[%c9, %c0_230] : memref<22x32xf32, #tpu.memory_space<vmem>>, vector<1x32xf32>
    %663 = vector.shape_cast %662 : vector<1x32xf32> to vector<32xf32>
    %c20 = arith.constant 20 : index
    %c0_231 = arith.constant 0 : index
    %664 = vector.load %arg3[%c20, %c0_231] : memref<22x32xf32, #tpu.memory_space<vmem>>, vector<1x32xf32>
    %665 = vector.shape_cast %664 : vector<1x32xf32> to vector<32xf32>
    %cst_232 = arith.constant dense<0.000000e+00> : vector<8xf32>
    %666 = vector.multi_reduction <add>, %661, %cst_232 [1] : vector<8x32xf32> to vector<8xf32>
    %667 = vector.shape_cast %666 : vector<8xf32> to vector<8x1xf32>
    %cst_233 = arith.constant 3.200000e+01 : f32
    %668 = vector.broadcast %cst_233 : f32 to vector<8x1xf32>
    %669 = arith.divf %667, %668 : vector<8x1xf32>
    %670 = vector.broadcast %669 : vector<8x1xf32> to vector<8x32xf32>
    %671 = arith.subf %661, %670 : vector<8x32xf32>
    %672 = arith.mulf %671, %671 : vector<8x32xf32>
    %cst_234 = arith.constant dense<0.000000e+00> : vector<8xf32>
    %673 = vector.multi_reduction <add>, %672, %cst_234 [1] : vector<8x32xf32> to vector<8xf32>
    %674 = vector.shape_cast %673 : vector<8xf32> to vector<8x1xf32>
    %cst_235 = arith.constant 3.200000e+01 : f32
    %675 = vector.broadcast %cst_235 : f32 to vector<8x1xf32>
    %676 = arith.divf %674, %675 : vector<8x1xf32>
    %677 = vector.broadcast %669 : vector<8x1xf32> to vector<8x32xf32>
    %678 = arith.subf %661, %677 : vector<8x32xf32>
    %cst_236 = arith.constant 9.99999974E-6 : f32
    %679 = vector.broadcast %cst_236 : f32 to vector<8x1xf32>
    %680 = arith.addf %676, %679 : vector<8x1xf32>
    %681 = math.rsqrt %680 : vector<8x1xf32>
    %682 = vector.broadcast %681 : vector<8x1xf32> to vector<8x32xf32>
    %683 = arith.mulf %678, %682 : vector<8x32xf32>
    %684 = vector.shape_cast %663 : vector<32xf32> to vector<1x32xf32>
    %685 = vector.broadcast %684 : vector<1x32xf32> to vector<8x32xf32>
    %686 = arith.mulf %683, %685 : vector<8x32xf32>
    %687 = vector.shape_cast %665 : vector<32xf32> to vector<1x32xf32>
    %688 = vector.broadcast %687 : vector<1x32xf32> to vector<8x32xf32>
    %689 = arith.addf %686, %688 : vector<8x32xf32>
    %c1_237 = arith.constant 1 : index
    %c1_238 = arith.constant 1 : index
    %c0_239 = arith.constant 0 : index
    %c0_240 = arith.constant 0 : index
    %690 = vector.load %arg8[%c1_237, %c1_238, %c0_239, %c0_240] : memref<2x2x4x128xf32, #tpu.memory_space<vmem>>, vector<1x1x4x128xf32>
    %691 = vector.shape_cast %690 : vector<1x1x4x128xf32> to vector<4x128xf32>
    %692 = vector.extract_strided_slice %691 {offsets = [1, 0], sizes = [1, 128], strides = [1, 1]} : vector<4x128xf32> to vector<1x128xf32>
    %693 = vector.shape_cast %692 : vector<1x128xf32> to vector<128xf32>
    %694 = vector.extract_strided_slice %691 {offsets = [3, 0], sizes = [1, 32], strides = [1, 1]} : vector<4x128xf32> to vector<1x32xf32>
    %695 = vector.shape_cast %694 : vector<1x32xf32> to vector<32xf32>
    %c1_241 = arith.constant 1 : index
    %c1_242 = arith.constant 1 : index
    %c0_243 = arith.constant 0 : index
    %c0_244 = arith.constant 0 : index
    %696 = vector.load %arg6[%c1_241, %c1_242, %c0_243, %c0_244] : memref<2x2x32x128xbf16, #tpu.memory_space<vmem>>, vector<1x1x32x128xbf16>
    %697 = vector.shape_cast %696 : vector<1x1x32x128xbf16> to vector<32x128xbf16>
    %698 = arith.truncf %689 : vector<8x32xf32> to vector<8x32xbf16>
    %cst_245 = arith.constant dense<0.000000e+00> : vector<8x128xf32>
    %699 = tpu.matmul %698, %697, %cst_245 {dimension_numbers = #tpu.dot_dimension_numbers<[1], [0], [0], [1], [0, 0, 1, 1], [], []>} : vector<8x32xbf16>, vector<32x128xbf16>, vector<8x128xf32> -> vector<8x128xf32>
    %700 = vector.shape_cast %693 : vector<128xf32> to vector<1x128xf32>
    %701 = vector.broadcast %700 : vector<1x128xf32> to vector<8x128xf32>
    %702 = arith.addf %699, %701 : vector<8x128xf32>
    %cst_246 = arith.constant 5.000000e-01 : f32
    %703 = vector.broadcast %cst_246 : f32 to vector<8x128xf32>
    %704 = arith.mulf %703, %702 : vector<8x128xf32>
    %cst_247 = arith.constant 0.707106769 : f32
    %705 = vector.broadcast %cst_247 : f32 to vector<8x128xf32>
    %706 = arith.mulf %702, %705 : vector<8x128xf32>
    %707 = math.absf %706 : vector<8x128xf32>
    %cst_248 = arith.constant 0.327591091 : f32
    %708 = vector.broadcast %cst_248 : f32 to vector<8x128xf32>
    %709 = arith.mulf %708, %707 : vector<8x128xf32>
    %cst_249 = arith.constant 1.000000e+00 : f32
    %710 = vector.broadcast %cst_249 : f32 to vector<8x128xf32>
    %711 = arith.addf %710, %709 : vector<8x128xf32>
    %712 = tpu.reciprocal %711 {approx = true} : vector<8x128xf32> -> vector<8x128xf32>
    %cst_250 = arith.constant 1.06140542 : f32
    %713 = vector.broadcast %cst_250 : f32 to vector<8x128xf32>
    %714 = arith.mulf %713, %712 : vector<8x128xf32>
    %cst_251 = arith.constant -1.45315206 : f32
    %715 = vector.broadcast %cst_251 : f32 to vector<8x128xf32>
    %716 = arith.addf %714, %715 : vector<8x128xf32>
    %717 = arith.mulf %716, %712 : vector<8x128xf32>
    %cst_252 = arith.constant 1.42141378 : f32
    %718 = vector.broadcast %cst_252 : f32 to vector<8x128xf32>
    %719 = arith.addf %717, %718 : vector<8x128xf32>
    %720 = arith.mulf %719, %712 : vector<8x128xf32>
    %cst_253 = arith.constant -0.284496725 : f32
    %721 = vector.broadcast %cst_253 : f32 to vector<8x128xf32>
    %722 = arith.addf %720, %721 : vector<8x128xf32>
    %723 = arith.mulf %722, %712 : vector<8x128xf32>
    %cst_254 = arith.constant 0.254829586 : f32
    %724 = vector.broadcast %cst_254 : f32 to vector<8x128xf32>
    %725 = arith.addf %723, %724 : vector<8x128xf32>
    %726 = arith.mulf %725, %712 : vector<8x128xf32>
    %cst_255 = arith.constant 0.000000e+00 : f32
    %727 = vector.broadcast %cst_255 : f32 to vector<8x128xf32>
    %728 = arith.subf %727, %707 : vector<8x128xf32>
    %729 = arith.mulf %728, %707 : vector<8x128xf32>
    %730 = math.exp %729 : vector<8x128xf32>
    %731 = arith.mulf %726, %730 : vector<8x128xf32>
    %cst_256 = arith.constant 1.000000e+00 : f32
    %732 = vector.broadcast %cst_256 : f32 to vector<8x128xf32>
    %733 = arith.subf %732, %731 : vector<8x128xf32>
    %cst_257 = arith.constant 0.000000e+00 : f32
    %734 = vector.broadcast %cst_257 : f32 to vector<8x128xf32>
    %735 = arith.cmpf oge, %706, %734 : vector<8x128xf32>
    %cst_258 = arith.constant 0.000000e+00 : f32
    %736 = vector.broadcast %cst_258 : f32 to vector<8x128xf32>
    %737 = arith.subf %736, %733 : vector<8x128xf32>
    %738 = arith.select %735, %733, %737 : vector<8x128xi1>, vector<8x128xf32>
    %cst_259 = arith.constant 1.000000e+00 : f32
    %739 = vector.broadcast %cst_259 : f32 to vector<8x128xf32>
    %740 = arith.addf %739, %738 : vector<8x128xf32>
    %741 = arith.mulf %704, %740 : vector<8x128xf32>
    %c1_260 = arith.constant 1 : index
    %c1_261 = arith.constant 1 : index
    %c0_262 = arith.constant 0 : index
    %c0_263 = arith.constant 0 : index
    %742 = vector.load %arg7[%c1_260, %c1_261, %c0_262, %c0_263] : memref<2x2x128x32xbf16, #tpu.memory_space<vmem>>, vector<1x1x128x32xbf16>
    %743 = vector.shape_cast %742 : vector<1x1x128x32xbf16> to vector<128x32xbf16>
    %744 = arith.truncf %741 : vector<8x128xf32> to vector<8x128xbf16>
    %cst_264 = arith.constant dense<0.000000e+00> : vector<8x32xf32>
    %745 = tpu.matmul %744, %743, %cst_264 {dimension_numbers = #tpu.dot_dimension_numbers<[1], [0], [0], [1], [0, 0, 1, 1], [], []>} : vector<8x128xbf16>, vector<128x32xbf16>, vector<8x32xf32> -> vector<8x32xf32>
    %746 = vector.shape_cast %695 : vector<32xf32> to vector<1x32xf32>
    %747 = vector.broadcast %746 : vector<1x32xf32> to vector<8x32xf32>
    %748 = arith.addf %745, %747 : vector<8x32xf32>
    %749 = arith.addf %661, %748 : vector<8x32xf32>
    %c10 = arith.constant 10 : index
    %c0_265 = arith.constant 0 : index
    %750 = vector.load %arg3[%c10, %c0_265] : memref<22x32xf32, #tpu.memory_space<vmem>>, vector<1x32xf32>
    %751 = vector.shape_cast %750 : vector<1x32xf32> to vector<32xf32>
    %c21 = arith.constant 21 : index
    %c0_266 = arith.constant 0 : index
    %752 = vector.load %arg3[%c21, %c0_266] : memref<22x32xf32, #tpu.memory_space<vmem>>, vector<1x32xf32>
    %753 = vector.shape_cast %752 : vector<1x32xf32> to vector<32xf32>
    %cst_267 = arith.constant dense<0.000000e+00> : vector<8xf32>
    %754 = vector.multi_reduction <add>, %749, %cst_267 [1] : vector<8x32xf32> to vector<8xf32>
    %755 = vector.shape_cast %754 : vector<8xf32> to vector<8x1xf32>
    %cst_268 = arith.constant 3.200000e+01 : f32
    %756 = vector.broadcast %cst_268 : f32 to vector<8x1xf32>
    %757 = arith.divf %755, %756 : vector<8x1xf32>
    %758 = vector.broadcast %757 : vector<8x1xf32> to vector<8x32xf32>
    %759 = arith.subf %749, %758 : vector<8x32xf32>
    %760 = arith.mulf %759, %759 : vector<8x32xf32>
    %cst_269 = arith.constant dense<0.000000e+00> : vector<8xf32>
    %761 = vector.multi_reduction <add>, %760, %cst_269 [1] : vector<8x32xf32> to vector<8xf32>
    %762 = vector.shape_cast %761 : vector<8xf32> to vector<8x1xf32>
    %cst_270 = arith.constant 3.200000e+01 : f32
    %763 = vector.broadcast %cst_270 : f32 to vector<8x1xf32>
    %764 = arith.divf %762, %763 : vector<8x1xf32>
    %765 = vector.broadcast %757 : vector<8x1xf32> to vector<8x32xf32>
    %766 = arith.subf %749, %765 : vector<8x32xf32>
    %cst_271 = arith.constant 9.99999974E-6 : f32
    %767 = vector.broadcast %cst_271 : f32 to vector<8x1xf32>
    %768 = arith.addf %764, %767 : vector<8x1xf32>
    %769 = math.rsqrt %768 : vector<8x1xf32>
    %770 = vector.broadcast %769 : vector<8x1xf32> to vector<8x32xf32>
    %771 = arith.mulf %766, %770 : vector<8x32xf32>
    %772 = vector.shape_cast %751 : vector<32xf32> to vector<1x32xf32>
    %773 = vector.broadcast %772 : vector<1x32xf32> to vector<8x32xf32>
    %774 = arith.mulf %771, %773 : vector<8x32xf32>
    %775 = vector.shape_cast %753 : vector<32xf32> to vector<1x32xf32>
    %776 = vector.broadcast %775 : vector<1x32xf32> to vector<8x32xf32>
    %777 = arith.addf %774, %776 : vector<8x32xf32>
    %c0_272 = arith.constant 0 : index
    %c0_273 = arith.constant 0 : index
    %778 = vector.load %arg9[%c0_272, %c0_273] : memref<32x128xbf16, #tpu.memory_space<vmem>>, vector<32x128xbf16>
    %779 = arith.truncf %777 : vector<8x32xf32> to vector<8x32xbf16>
    %cst_274 = arith.constant dense<0.000000e+00> : vector<8x128xf32>
    %780 = tpu.matmul %779, %778, %cst_274 {dimension_numbers = #tpu.dot_dimension_numbers<[1], [0], [0], [1], [0, 0, 1, 1], [], []>} : vector<8x32xbf16>, vector<32x128xbf16>, vector<8x128xf32> -> vector<8x128xf32>
    %c0_275 = arith.constant 0 : index
    %c0_276 = arith.constant 0 : index
    %781 = vector.load %arg10[%c0_275, %c0_276] : memref<8x128xf32, #tpu.memory_space<vmem>>, vector<8x128xf32>
    tpu.vector_store %arg10[%c0_275, %c0_276], %780 {strides = array<i32>} : memref<8x128xf32, #tpu.memory_space<vmem>>, vector<8x128xf32>,
    return
  }
  func.func @transform_0(%arg0: i32) -> (i32, i32) {
    %c0_i32 = arith.constant 0 : i32
    %c0_i32_0 = arith.constant 0 : i32
    return %arg0, %c0_i32 : i32, i32
  }
  func.func @transform_1(%arg0: i32) -> (i32, i32) {
    %c0_i32 = arith.constant 0 : i32
    %c0_i32_0 = arith.constant 0 : i32
    return %arg0, %c0_i32 : i32, i32
  }
  func.func @transform_2(%arg0: i32) -> (i32, i32) {
    %c0_i32 = arith.constant 0 : i32
    %c0_i32_0 = arith.constant 0 : i32
    %c0_i32_1 = arith.constant 0 : i32
    return %c0_i32, %c0_i32_0 : i32, i32
  }
  func.func @transform_3(%arg0: i32) -> (i32, i32, i32, i32) {
    %c0_i32 = arith.constant 0 : i32
    %c0_i32_0 = arith.constant 0 : i32
    %c0_i32_1 = arith.constant 0 : i32
    %c0_i32_2 = arith.constant 0 : i32
    %c0_i32_3 = arith.constant 0 : i32
    return %c0_i32, %c0_i32_0, %c0_i32_1, %c0_i32_2 : i32, i32, i32, i32
  }
  func.func @transform_4(%arg0: i32) -> (i32, i32, i32, i32) {
    %c0_i32 = arith.constant 0 : i32
    %c0_i32_0 = arith.constant 0 : i32
    %c0_i32_1 = arith.constant 0 : i32
    %c0_i32_2 = arith.constant 0 : i32
    %c0_i32_3 = arith.constant 0 : i32
    return %c0_i32, %c0_i32_0, %c0_i32_1, %c0_i32_2 : i32, i32, i32, i32
  }
  func.func @transform_5(%arg0: i32) -> (i32, i32, i32, i32) {
    %c0_i32 = arith.constant 0 : i32
    %c0_i32_0 = arith.constant 0 : i32
    %c0_i32_1 = arith.constant 0 : i32
    %c0_i32_2 = arith.constant 0 : i32
    %c0_i32_3 = arith.constant 0 : i32
    return %c0_i32, %c0_i32_0, %c0_i32_1, %c0_i32_2 : i32, i32, i32, i32
  }
  func.func @transform_6(%arg0: i32) -> (i32, i32, i32, i32) {
    %c0_i32 = arith.constant 0 : i32
    %c0_i32_0 = arith.constant 0 : i32
    %c0_i32_1 = arith.constant 0 : i32
    %c0_i32_2 = arith.constant 0 : i32
    %c0_i32_3 = arith.constant 0 : i32
    return %c0_i32, %c0_i32_0, %c0_i32_1, %c0_i32_2 : i32, i32, i32, i32
  }
  func.func @transform_7(%arg0: i32) -> (i32, i32, i32, i32) {
    %c0_i32 = arith.constant 0 : i32
    %c0_i32_0 = arith.constant 0 : i32
    %c0_i32_1 = arith.constant 0 : i32
    %c0_i32_2 = arith.constant 0 : i32
    %c0_i32_3 = arith.constant 0 : i32
    return %c0_i32, %c0_i32_0, %c0_i32_1, %c0_i32_2 : i32, i32, i32, i32
  }
  func.func @transform_8(%arg0: i32) -> (i32, i32) {
    %c0_i32 = arith.constant 0 : i32
    %c0_i32_0 = arith.constant 0 : i32
    %c0_i32_1 = arith.constant 0 : i32
    return %c0_i32, %c0_i32_0 : i32, i32
  }
  func.func @transform_9(%arg0: i32) -> (i32, i32) {
    %c0_i32 = arith.constant 0 : i32
    %c0_i32_0 = arith.constant 0 : i32
    return %arg0, %c0_i32 : i32, i32
  }
}

</mosaic_0001>

<llo_original>
// kernel: tpu_custom_call.1
$region0: #{tpu_custom_call.1}
  #allocation0 [shape = 'u32[]', space=smem, size = 0x4, offset = 0x4, fixed_abs, tag = 'smem constant byte address 0x4 - core index']
  #allocation1 [shape = 'u32[72,128]{1,0:T(1,128)}', space=vmem, size = 0x9000, scoped, tag = 'internal scratch']
  %s0 = inlined_call_operand.vmem [shape: f32[16,32], index: 0, kind: input, shape index: {}]
  %s1 = inlined_call_operand.vmem [shape: f32[16,32], index: 1, kind: input, shape index: {}]
  %s2 = inlined_call_operand.vmem [shape: f32[22,32], index: 2, kind: input, shape index: {}]
  %s3 = inlined_call_operand.vmem [shape: bf16[2,2,32,96], index: 3, kind: input, shape index: {}]
  %s4 = inlined_call_operand.vmem [shape: bf16[2,2,32,32], index: 4, kind: input, shape index: {}]
  %s5 = inlined_call_operand.vmem [shape: bf16[2,2,32,128], index: 5, kind: input, shape index: {}]
  %s6 = inlined_call_operand.vmem [shape: bf16[2,2,128,32], index: 6, kind: input, shape index: {}]
  %s7 = inlined_call_operand.vmem [shape: f32[2,2,4,128], index: 7, kind: input, shape index: {}]
  %s8 = inlined_call_operand.vmem [shape: bf16[32,128], index: 8, kind: input, shape index: {}]
  %s9 = inlined_call_operand.hbm [shape: f32[16,128], index: 9, kind: output, shape index: {}]
  %s10 = sld [smem:[#allocation0]]
  $region69: #{tpu_custom_call.1} parent=0
    _
  %s12 = ssub.s32 1, %s10
  %s13 = scalar_select 0, %s12, %s10
  $region1: #{tpu_custom_call.1} parent=0
    #allocation2 [shape = 'u8[8192]{0}', space=vmem, size = 0x2000, scoped, tag = 'output window, operand 0']
    #allocation3 [shape = 's32[2]{0}', space=sflag, size = 0x8, scoped, tag = 'scoped memory for tpu_custom_call.1']
    %14 = vsyncpa [#allocation3], 0
    %s15 = scalar_lea.sflag [#allocation3], 1
    %16 = vsyncpa %s15, 0
    loop: start=0, step=1, limit=4
    $region2: #{tpu_custom_call.1} parent=1 // loop_pre_header
      _
    $region3: #{tpu_custom_call.1} parent=1 // loop_header
      %s18 = sphi 0, %s22
      %p19 = scmp.ge.s32.totalorder %s18, 4
      %s28 = sphi 0, %s30
      %s31 = sphi 0, %s28
      %s32 = sphi 0, %s31
      %s48 = sphi 0, %s32
      %s54 = sphi 0, %s56
      %s57 = sphi 0, %s54
      %s58 = sphi 0, %s57
      %s74 = sphi 0, %s58
      %s78 = sphi 0, %s78
      %s80 = sphi 0, %s78
      %s81 = sphi 0, %s80
      %s95 = sphi 0, %s81
      %s99 = sphi 0, %s99
      %s101 = sphi 0, %s99
      %s102 = sphi 0, %s101
      %s116 = sphi 0, %s102
      %s120 = sphi 0, %s120
      %s122 = sphi 0, %s120
      %s123 = sphi 0, %s122
      %s137 = sphi 0, %s123
      %s141 = sphi 0, %s141
      %s143 = sphi 0, %s141
      %s144 = sphi 0, %s143
      %s158 = sphi 0, %s144
      %s162 = sphi 0, %s162
      %s164 = sphi 0, %s162
      %s165 = sphi 0, %s164
      %s179 = sphi 0, %s165
      %s183 = sphi 0, %s183
      %s185 = sphi 0, %s183
      %s186 = sphi 0, %s185
      %s200 = sphi 0, %s186
      %s204 = sphi 0, %s204
      %s206 = sphi 0, %s204
      %s207 = sphi 0, %s206
      %s221 = sphi 0, %s207
      %s227 = sphi 0, %s229
      %s230 = sphi 0, %s227
      %s231 = sphi 0, %s230
      %s247 = sphi 0, %s231
    $region4: #{tpu_custom_call.1} parent=1 // loop_header_branch
      %21 = sbr.rel (%p19) target = $region8
    $region5: #{tpu_custom_call.1} parent=1 // loop_body
      %s23 = ssub.s32 %s18, 1
      %s24 = ssub.s32 %s18, 2
      %s25 = sadd.s32 %s18, 1
      %s26 = ssub.s32 %s18, %s25
      %p27 = scmp.eq.s32.totalorder %s26, 0
      %s29 = sadd.s32 %s28, 1
      %s30 = scalar_select %p27, %s28, %s29
      %p33 = pneg %p27
      %p34 = scmp.eq.s32.totalorder %s18, 1
      %p35 = por %p33, %p34
      %p36 = scmp.ne.s32.totalorder %s28, %s31
      %p37 = scmp.eq.s32.totalorder %s18, 0
      %p38 = por %p36, %p37
      %p39 = scmp.ne.s32.totalorder %s28, %s31
      %p40 = scmp.eq.s32.totalorder %s23, 1
      %p41 = por %p39, %p40
      %p42 = scmp.ne.s32.totalorder %s31, %s32
      %p43 = scmp.eq.s32.totalorder %s23, 0
      %p44 = por %p42, %p43
      %p45 = scmp.ne.s32.totalorder %s31, %s32
      %p46 = scmp.eq.s32.totalorder %s24, 1
      %p47 = por %p45, %p46
      %p49 = scmp.ne.s32.totalorder %s32, %s48
      %p50 = scmp.eq.s32.totalorder %s24, 0
      %p51 = por %p49, %p50
      %s52 = ssub.s32 %s18, %s25
      %p53 = scmp.eq.s32.totalorder %s52, 0
      %s55 = sadd.s32 %s54, 1
      %s56 = scalar_select %p53, %s54, %s55
      %p59 = pneg %p53
      %p60 = scmp.eq.s32.totalorder %s18, 1
      %p61 = por %p59, %p60
      %p62 = scmp.ne.s32.totalorder %s54, %s57
      %p63 = scmp.eq.s32.totalorder %s18, 0
      %p64 = por %p62, %p63
      %p65 = scmp.ne.s32.totalorder %s54, %s57
      %p66 = scmp.eq.s32.totalorder %s23, 1
      %p67 = por %p65, %p66
      %p68 = scmp.ne.s32.totalorder %s57, %s58
      %p69 = scmp.eq.s32.totalorder %s23, 0
      %p70 = por %p68, %p69
      %p71 = scmp.ne.s32.totalorder %s57, %s58
      %p72 = scmp.eq.s32.totalorder %s24, 1
      %p73 = por %p71, %p72
      %p75 = scmp.ne.s32.totalorder %s58, %s74
      %p76 = scmp.eq.s32.totalorder %s24, 0
      %p77 = por %p75, %p76
      %s79 = sadd.s32 %s78, 1
      %p82 = scmp.eq.s32.totalorder %s18, 1
      %p83 = scmp.ne.s32.totalorder %s78, %s80
      %p84 = scmp.eq.s32.totalorder %s18, 0
      %p85 = por %p83, %p84
      %p86 = scmp.ne.s32.totalorder %s78, %s80
      %p87 = scmp.eq.s32.totalorder %s23, 1
      %p88 = por %p86, %p87
      %p89 = scmp.ne.s32.totalorder %s80, %s81
      %p90 = scmp.eq.s32.totalorder %s23, 0
      %p91 = por %p89, %p90
      %p92 = scmp.ne.s32.totalorder %s80, %s81
      %p93 = scmp.eq.s32.totalorder %s24, 1
      %p94 = por %p92, %p93
      %p96 = scmp.ne.s32.totalorder %s81, %s95
      %p97 = scmp.eq.s32.totalorder %s24, 0
      %p98 = por %p96, %p97
      %s100 = sadd.s32 %s99, 1
      %p103 = scmp.eq.s32.totalorder %s18, 1
      %p104 = scmp.ne.s32.totalorder %s99, %s101
      %p105 = scmp.eq.s32.totalorder %s18, 0
      %p106 = por %p104, %p105
      %p107 = scmp.ne.s32.totalorder %s99, %s101
      %p108 = scmp.eq.s32.totalorder %s23, 1
      %p109 = por %p107, %p108
      %p110 = scmp.ne.s32.totalorder %s101, %s102
      %p111 = scmp.eq.s32.totalorder %s23, 0
      %p112 = por %p110, %p111
      %p113 = scmp.ne.s32.totalorder %s101, %s102
      %p114 = scmp.eq.s32.totalorder %s24, 1
      %p115 = por %p113, %p114
      %p117 = scmp.ne.s32.totalorder %s102, %s116
      %p118 = scmp.eq.s32.totalorder %s24, 0
      %p119 = por %p117, %p118
      %s121 = sadd.s32 %s120, 1
      %p124 = scmp.eq.s32.totalorder %s18, 1
      %p125 = scmp.ne.s32.totalorder %s120, %s122
      %p126 = scmp.eq.s32.totalorder %s18, 0
      %p127 = por %p125, %p126
      %p128 = scmp.ne.s32.totalorder %s120, %s122
      %p129 = scmp.eq.s32.totalorder %s23, 1
      %p130 = por %p128, %p129
      %p131 = scmp.ne.s32.totalorder %s122, %s123
      %p132 = scmp.eq.s32.totalorder %s23, 0
      %p133 = por %p131, %p132
      %p134 = scmp.ne.s32.totalorder %s122, %s123
      %p135 = scmp.eq.s32.totalorder %s24, 1
      %p136 = por %p134, %p135
      %p138 = scmp.ne.s32.totalorder %s123, %s137
      %p139 = scmp.eq.s32.totalorder %s24, 0
      %p140 = por %p138, %p139
      %s142 = sadd.s32 %s141, 1
      %p145 = scmp.eq.s32.totalorder %s18, 1
      %p146 = scmp.ne.s32.totalorder %s141, %s143
      %p147 = scmp.eq.s32.totalorder %s18, 0
      %p148 = por %p146, %p147
      %p149 = scmp.ne.s32.totalorder %s141, %s143
      %p150 = scmp.eq.s32.totalorder %s23, 1
      %p151 = por %p149, %p150
      %p152 = scmp.ne.s32.totalorder %s143, %s144
      %p153 = scmp.eq.s32.totalorder %s23, 0
      %p154 = por %p152, %p153
      %p155 = scmp.ne.s32.totalorder %s143, %s144
      %p156 = scmp.eq.s32.totalorder %s24, 1
      %p157 = por %p155, %p156
      %p159 = scmp.ne.s32.totalorder %s144, %s158
      %p160 = scmp.eq.s32.totalorder %s24, 0
      %p161 = por %p159, %p160
      %s163 = sadd.s32 %s162, 1
      %p166 = scmp.eq.s32.totalorder %s18, 1
      %p167 = scmp.ne.s32.totalorder %s162, %s164
      %p168 = scmp.eq.s32.totalorder %s18, 0
      %p169 = por %p167, %p168
      %p170 = scmp.ne.s32.totalorder %s162, %s164
      %p171 = scmp.eq.s32.totalorder %s23, 1
      %p172 = por %p170, %p171
      %p173 = scmp.ne.s32.totalorder %s164, %s165
      %p174 = scmp.eq.s32.totalorder %s23, 0
      %p175 = por %p173, %p174
      %p176 = scmp.ne.s32.totalorder %s164, %s165
      %p177 = scmp.eq.s32.totalorder %s24, 1
      %p178 = por %p176, %p177
      %p180 = scmp.ne.s32.totalorder %s165, %s179
      %p181 = scmp.eq.s32.totalorder %s24, 0
      %p182 = por %p180, %p181
      %s184 = sadd.s32 %s183, 1
      %p187 = scmp.eq.s32.totalorder %s18, 1
      %p188 = scmp.ne.s32.totalorder %s183, %s185
      %p189 = scmp.eq.s32.totalorder %s18, 0
      %p190 = por %p188, %p189
      %p191 = scmp.ne.s32.totalorder %s183, %s185
      %p192 = scmp.eq.s32.totalorder %s23, 1
      %p193 = por %p191, %p192
      %p194 = scmp.ne.s32.totalorder %s185, %s186
      %p195 = scmp.eq.s32.totalorder %s23, 0
      %p196 = por %p194, %p195
      %p197 = scmp.ne.s32.totalorder %s185, %s186
      %p198 = scmp.eq.s32.totalorder %s24, 1
      %p199 = por %p197, %p198
      %p201 = scmp.ne.s32.totalorder %s186, %s200
      %p202 = scmp.eq.s32.totalorder %s24, 0
      %p203 = por %p201, %p202
      %s205 = sadd.s32 %s204, 1
      %p208 = scmp.eq.s32.totalorder %s18, 1
      %p209 = scmp.ne.s32.totalorder %s204, %s206
      %p210 = scmp.eq.s32.totalorder %s18, 0
      %p211 = por %p209, %p210
      %p212 = scmp.ne.s32.totalorder %s204, %s206
      %p213 = scmp.eq.s32.totalorder %s23, 1
      %p214 = por %p212, %p213
      %p215 = scmp.ne.s32.totalorder %s206, %s207
      %p216 = scmp.eq.s32.totalorder %s23, 0
      %p217 = por %p215, %p216
      %p218 = scmp.ne.s32.totalorder %s206, %s207
      %p219 = scmp.eq.s32.totalorder %s24, 1
      %p220 = por %p218, %p219
      %p222 = scmp.ne.s32.totalorder %s207, %s221
      %p223 = scmp.eq.s32.totalorder %s24, 0
      %p224 = por %p222, %p223
      %s225 = ssub.s32 %s18, %s25
      %p226 = scmp.eq.s32.totalorder %s225, 0
      %s228 = sadd.s32 %s227, 1
      %s229 = scalar_select %p226, %s227, %s228
      %p232 = pneg %p226
      %p233 = scmp.eq.s32.totalorder %s18, 1
      %p234 = por %p232, %p233
      %p235 = scmp.ne.s32.totalorder %s227, %s230
      %p236 = scmp.eq.s32.totalorder %s18, 0
      %p237 = por %p235, %p236
      %p238 = scmp.ne.s32.totalorder %s227, %s230
      %p239 = scmp.eq.s32.totalorder %s23, 1
      %p240 = por %p238, %p239
      %p241 = scmp.ne.s32.totalorder %s230, %s231
      %p242 = scmp.eq.s32.totalorder %s23, 0
      %p243 = por %p241, %p242
      %p244 = scmp.ne.s32.totalorder %s230, %s231
      %p245 = scmp.eq.s32.totalorder %s24, 1
      %p246 = por %p244, %p245
      %p248 = scmp.ne.s32.totalorder %s231, %s247
      %p249 = scmp.eq.s32.totalorder %s24, 0
      %p250 = por %p248, %p249
      %p251 = scmp.le.s32.totalorder 1, %s18
      %p252 = scmp.lt.s32.totalorder %s18, 3
      %p253 = pnand %p251, %p252
      %p254 = pneg %p253
      // Predicated region
      $region9: #{tpu_custom_call.1} parent=5 // pred_check
        _
      $region10: #{tpu_custom_call.1} parent=5 // pred_check_branch
        %256 = sbr.rel (%p253) target = $region12
      $region11: #{tpu_custom_call.1} parent=5 // pred_region
        %s257 = ssub.s32 %s18, 1
        // Predicated region
        $region13: #{tpu_custom_call.1} parent=11 // pred_check
          %p258 = pneg %p91
        $region14: #{tpu_custom_call.1} parent=11 // pred_check_branch
          %260 = sbr.rel (%p258) target = $region16
        $region15: #{tpu_custom_call.1} parent=11 // pred_region
          _
        $region16: #{tpu_custom_call.1} parent=11 // pred_fallthru
          _
        // Predicated region
        $region17: #{tpu_custom_call.1} parent=11 // pred_check
          %p261 = pneg %p112
        $region18: #{tpu_custom_call.1} parent=11 // pred_check_branch
          %263 = sbr.rel (%p261) target = $region20
        $region19: #{tpu_custom_call.1} parent=11 // pred_region
          _
        $region20: #{tpu_custom_call.1} parent=11 // pred_fallthru
          _
        // Predicated region
        $region21: #{tpu_custom_call.1} parent=11 // pred_check
          %p264 = pneg %p133
        $region22: #{tpu_custom_call.1} parent=11 // pred_check_branch
          %266 = sbr.rel (%p264) target = $region24
        $region23: #{tpu_custom_call.1} parent=11 // pred_region
          _
        $region24: #{tpu_custom_call.1} parent=11 // pred_fallthru
          _
        // Predicated region
        $region25: #{tpu_custom_call.1} parent=11 // pred_check
          %p267 = pneg %p154
        $region26: #{tpu_custom_call.1} parent=11 // pred_check_branch
          %269 = sbr.rel (%p267) target = $region28
        $region27: #{tpu_custom_call.1} parent=11 // pred_region
          _
        $region28: #{tpu_custom_call.1} parent=11 // pred_fallthru
          _
        // Predicated region
        $region29: #{tpu_custom_call.1} parent=11 // pred_check
          %p270 = pneg %p175
        $region30: #{tpu_custom_call.1} parent=11 // pred_check_branch
          %272 = sbr.rel (%p270) target = $region32
        $region31: #{tpu_custom_call.1} parent=11 // pred_region
          _
        $region32: #{tpu_custom_call.1} parent=11 // pred_fallthru
          _
        // Predicated region
        $region33: #{tpu_custom_call.1} parent=11 // pred_check
          %p273 = pneg %p196
        $region34: #{tpu_custom_call.1} parent=11 // pred_check_branch
          %275 = sbr.rel (%p273) target = $region36
        $region35: #{tpu_custom_call.1} parent=11 // pred_region
          _
        $region36: #{tpu_custom_call.1} parent=11 // pred_fallthru
          _
        // Predicated region
        $region37: #{tpu_custom_call.1} parent=11 // pred_check
          %p276 = pneg %p217
        $region38: #{tpu_custom_call.1} parent=11 // pred_check_branch
          %278 = sbr.rel (%p276) target = $region40
        $region39: #{tpu_custom_call.1} parent=11 // pred_region
          _
        $region40: #{tpu_custom_call.1} parent=11 // pred_fallthru
          _
      $region12: #{tpu_custom_call.1} parent=5 // pred_fallthru
        _
      %p279 = scmp.lt.s32.totalorder %s18, 2
      // Predicated region
      $region41: #{tpu_custom_call.1} parent=5 // pred_check
        %p280 = pneg %p279
      $region42: #{tpu_custom_call.1} parent=5 // pred_check_branch
        %282 = sbr.rel (%p280) target = $region44
      $region43: #{tpu_custom_call.1} parent=5 // pred_region
        // Predicated region
        $region45: #{tpu_custom_call.1} parent=43 // pred_check
          %p283 = pneg %p38
        $region46: #{tpu_custom_call.1} parent=43 // pred_check_branch
          %285 = sbr.rel (%p283) target = $region48
        $region47: #{tpu_custom_call.1} parent=43 // pred_region
          %p286 = scmp.lt.s32.totalorder %s18, 1
          %s287 = scalar_select %p286, %s18, 1
          %s288 = smul.addr %s287, 8
          %s289 = scalar_lea.vmem %s0, %s288
        $region48: #{tpu_custom_call.1} parent=43 // pred_fallthru
          _
        // Predicated region
        $region49: #{tpu_custom_call.1} parent=43 // pred_check
          %p290 = pneg %p64
        $region50: #{tpu_custom_call.1} parent=43 // pred_check_branch
          %292 = sbr.rel (%p290) target = $region52
        $region51: #{tpu_custom_call.1} parent=43 // pred_region
          %p293 = scmp.lt.s32.totalorder %s18, 1
          %s294 = scalar_select %p293, %s18, 1
          %s295 = smul.addr %s294, 8
          %s296 = scalar_lea.vmem %s1, %s295
        $region52: #{tpu_custom_call.1} parent=43 // pred_fallthru
          _
      $region44: #{tpu_custom_call.1} parent=5 // pred_fallthru
        _
      %p297 = scmp.le.s32.totalorder 1, %s18
      %p298 = scmp.lt.s32.totalorder %s18, 3
      %p299 = pnand %p297, %p298
      %p300 = pneg %p299
      // Predicated region
      $region53: #{tpu_custom_call.1} parent=5 // pred_check
        _
      $region54: #{tpu_custom_call.1} parent=5 // pred_check_branch
        %302 = sbr.rel (%p299) target = $region56
      $region55: #{tpu_custom_call.1} parent=5 // pred_region
        %s303 = ssub.s32 %s18, 1
        %p304 = scmp.lt.s32.totalorder %s23, 1
        %s305 = scalar_select %p304, %s23, 1
        %s306 = smul.addr %s305, 8
        %s307 = scalar_lea.vmem %s0, %s306
        %p308 = pneg %p44
        %p309 = pneg %p41
        %p310 = scmp.lt.s32.totalorder %s23, 1
        %s311 = scalar_select %p310, %s23, 1
        %s312 = smul.addr %s311, 8
        %s313 = scalar_lea.vmem %s1, %s312
        %p314 = pneg %p70
        %p315 = pneg %p67
        %p316 = pneg %p91
        %p317 = pneg %p88
        %p318 = pneg %p112
        %p319 = pneg %p109
        %p320 = pneg %p133
        %p321 = pneg %p130
        %p322 = pneg %p154
        %p323 = pneg %p151
        %p324 = pneg %p175
        %p325 = pneg %p172
        %p326 = pneg %p196
        %p327 = pneg %p193
        %p328 = pneg %p217
        %p329 = pneg %p214
        %p330 = pneg %p243
        %p331 = pneg %p240
        %s332 = sand.u32 %s230, 1
        %s333 = scalar_lea.sflag [#allocation3], %s332
        %s334 = sand.u32 %s230, 1
        %s335 = smul.addr %s334, 8
        %s336 = scalar_lea.vmem [#allocation2], %s335
        %p337 = scmp.lt.s32.totalorder %s23, 1
        %s338 = scalar_select %p337, %s23, 1
        %s339 = smul.addr %s338, 8
        %s340 = scalar_lea.vmem %s0, %s339
        %p341 = scmp.lt.s32.totalorder %s23, 1
        %s342 = scalar_select %p341, %s23, 1
        %s343 = smul.addr %s342, 8
        %s344 = scalar_lea.vmem %s1, %s343
        %v346 = vlaneseq
        %v347 = vshrl.u32 %v346, 7
        %v348 = vlaneseq
        %v349 = vand.u32 %v348, 127
        %vm350 = vcmp.le.s32.totalorder %v349, %v347
        %v351 = vsel %vm350, 0.0, -1e+30
        %v352 = vld [vmem:[%s340] sm:$0xff]
        %v353 = vld [vmem:[%s344] sm:$0xff]
        %v354 = vld [vmem:[%s2] sm:$0x1]
        %v355 = vld [vmem:[%s2 + $0xb] sm:$0x1]
        %vm356 = vcmask 261120
        %v357 = vsel %vm356, %v353, 0.0
        %358 = vadd.xlane.f32.xlu0 %v357
        %v359 = vpop.xlane.xlu0 %358
        %v360 = vrcp.pop 32.0
        %v361 = vmul.f32 32.0, %v360
        %v362 = vsub.f32 1.0, %v361
        %v363 = vmul.f32 %v360, %v362
        %v364 = vadd.f32 %v360, %v363
        %vm365 = vweird.f32 %v360
        %v366 = vsel %vm365, %v360, %v364
        %v367 = vmul.f32 %v359, %v366
        %v368 = vsub.f32 %v353, %v367
        %v369 = vmul.f32 %v368, %v368
        %v370 = vsel %vm356, %v369, 0.0
        %371 = vadd.xlane.f32.xlu0 %v370
        %v372 = vpop.xlane.xlu0 %371
        %v373 = vmul.f32 %v372, %v366
        %v374 = vadd.f32 %v373, 1e-05
        %v375 = vrsqrt.pop %v374
        %v376 = vmul.f32 %v375, %v374
        %v377 = vmul.f32 %v376, %v375
        %v378 = vmul.f32 0.5, %v377
        %v379 = vsub.f32 1.5, %v378
        %v380 = vmul.f32 %v375, %v379
        %vm381 = vweird.f32 %v374
        %vm382 = vweird.f32 %v375
        %vm383 = vmor %vm381, %vm382
        %v384 = vsel %vm383, %v375, %v380
        %v385 = vmul.f32 %v368, %v384
        %v386 = vperm.slane %v354, 0
        %v387 = vmul.f32 %v385, %v386
        %v388 = vperm.slane %v355, 0
        %v389 = vadd.f32 %v387, %v388
        %v390 = vld [vmem:[%s3] sm:$0xf]
        %v391 = vld [vmem:[%s3 + $0x4] sm:$0xf]
        %v392 = vld [vmem:[%s3 + $0x8] sm:$0xf]
        %v393 = vld [vmem:[%s3 + $0xc] sm:$0xf]
        %v394 = vld [vmem:[%s7] sm:$0xf]
        %v395 = vpack.c.bf16 %v389, %v389
        %v396 = vperm.slane %v394, 0
        %v401 = vunpack.c.l.b16 %v390
        %v402 = vunpack.c.l.b16 %v391
        %v403 = vunpack.c.l.b16 %v392
        %v404 = vunpack.c.l.b16 %v393
        %v405 = vpack.c.b16 %v402, %v401
        %v406 = vpack.c.b16 %v404, %v403
        %v410 = vsel %vm356, %v395, 0
        %412 = vmatpush.bf16.msra.mxu0 0
        %413 = vmatpush.bf16.msra.mxu0 0
        %414 = vmatpush.bf16.msra.mxu0 0
        %415 = vmatpush.bf16.msra.mxu0 0
        %416 = vmatpush.bf16.msra.mxu0 0
        %417 = vmatpush.bf16.msra.mxu0 0
        %418 = vmatpush.bf16.msra.mxu0 %v406
        %419 = vmatpush.bf16.msra.mxu0 %v405
        %420 = vmatmul.bf16.gmra.mxu0 %v410
        %v421 = vpop.f32.mrf.mxu0
        %v422 = vadd.f32 %v396, %v421
        %v423 = vpop.f32.mrf.mxu0
        %424 = vdwg.mxu0
        %426 = vrot.lane.b32.xlu0 %v422, 120
        %v427 = vpop.permute.xlu0 %426
        %429 = vrot.lane.b32.xlu0 %v422, 112
        %v430 = vpop.permute.xlu0 %429
        %432 = vrot.lane.b32.xlu0 %v422, 104
        %v433 = vpop.permute.xlu0 %432
        %v435 = vrot.slane %v430, 4
        %vm436 = vcmask 1047556
        %v437 = vsel %vm436, %v435, %v422
        %v438 = vrot.slane %v422, 4
        %v439 = vsel %vm436, %v430, %v438
        %v441 = vunpack.c.l.s4 1983009808
        %v442 = vunpack.c.0.s8 %v441
        %v443 = vperm.slane %v437, %v442
        %v445 = vunpack.c.l.s4 1983009808
        %v446 = vunpack.c.0.s8 %v445
        %v447 = vperm.slane %v439, %v446
        %v448 = vrot.slane %v433, 4
        %v449 = vsel %vm436, %v448, %v427
        %v450 = vrot.slane %v427, 4
        %v451 = vsel %vm436, %v433, %v450
        %v453 = vunpack.c.l.s4 1983009808
        %v454 = vunpack.c.0.s8 %v453
        %v455 = vperm.slane %v449, %v454
        %v457 = vunpack.c.l.s4 1983009808
        %v458 = vunpack.c.0.s8 %v457
        %v459 = vperm.slane %v451, %v458
        %v460 = vrot.slane %v455, 4
        %v461 = vsel %vm436, %v460, %v443
        %v462 = vrot.slane %v443, 4
        %v463 = vsel %vm436, %v455, %v462
        %v465 = vunpack.c.l.s4 1934713408
        %v466 = vunpack.c.0.s8 %v465
        %v467 = vperm.slane %v461, %v466
        %v469 = vunpack.c.l.s4 1934713408
        %v470 = vunpack.c.0.s8 %v469
        %v471 = vperm.slane %v463, %v470
        %v472 = vrot.slane %v459, 4
        %v473 = vsel %vm436, %v472, %v447
        %v474 = vrot.slane %v447, 4
        %v475 = vsel %vm436, %v459, %v474
        %v477 = vunpack.c.l.s4 1934713408
        %v478 = vunpack.c.0.s8 %v477
        %v479 = vperm.slane %v473, %v478
        %v481 = vunpack.c.l.s4 1934713408
        %v482 = vunpack.c.0.s8 %v481
        %v483 = vperm.slane %v475, %v482
        %v484 = vrot.slane %v467, 4
        %v485 = vsel %vm436, 0.0, %v484
        %v486 = vrot.slane %v471, 4
        %v487 = vsel %vm436, 0.0, %v486
        %v488 = vrot.slane %v479, 4
        %v489 = vsel %vm436, 0.0, %v488
        %v490 = vrot.slane %v483, 4
        %v491 = vsel %vm436, 0.0, %v490
        %v492 = vsel %vm436, %v486, %v467
        %v494 = vunpack.c.l.s4 1983009808
        %v495 = vunpack.c.0.s8 %v494
        %v496 = vperm.slane %v492, %v495
        %v497 = vrot.slane %v487, 4
        %v498 = vsel %vm436, %v497, %v485
        %v500 = vunpack.c.l.s4 1983009808
        %v501 = vunpack.c.0.s8 %v500
        %v502 = vperm.slane %v498, %v501
        %v503 = vsel %vm436, %v490, %v479
        %v505 = vunpack.c.l.s4 1983009808
        %v506 = vunpack.c.0.s8 %v505
        %v507 = vperm.slane %v503, %v506
        %v508 = vrot.slane %v491, 4
        %v509 = vsel %vm436, %v508, %v489
        %v511 = vunpack.c.l.s4 1983009808
        %v512 = vunpack.c.0.s8 %v511
        %v513 = vperm.slane %v509, %v512
        %v514 = vrot.slane %v502, 4
        %v515 = vsel %vm436, %v514, %v496
        %v516 = vrot.slane %v496, 4
        %v517 = vsel %vm436, %v502, %v516
        %v519 = vunpack.c.l.s4 1934713408
        %v520 = vunpack.c.0.s8 %v519
        %v521 = vperm.slane %v515, %v520
        %v523 = vunpack.c.l.s4 1934713408
        %v524 = vunpack.c.0.s8 %v523
        %v525 = vperm.slane %v517, %v524
        %v526 = vrot.slane %v513, 4
        %v527 = vsel %vm436, %v526, %v507
        %v528 = vrot.slane %v507, 4
        %v529 = vsel %vm436, %v513, %v528
        %v531 = vunpack.c.l.s4 1934713408
        %v532 = vunpack.c.0.s8 %v531
        %v533 = vperm.slane %v527, %v532
        %v535 = vunpack.c.l.s4 1934713408
        %v536 = vunpack.c.0.s8 %v535
        %v537 = vperm.slane %v529, %v536
        %v538 = vrot.slane %v533, 4
        %v539 = vsel %vm436, %v538, %v521
        %v540 = vrot.slane %v521, 4
        %v541 = vsel %vm436, %v533, %v540
        %v542 = vrot.slane %v537, 4
        %v543 = vsel %vm436, %v542, %v525
        %v544 = vrot.slane %v525, 4
        %v545 = vsel %vm436, %v537, %v544
        %546 = vrot.lane.b32.xlu0 %v422, 96
        %v547 = vpop.permute.xlu0 %546
        %548 = vrot.lane.b32.xlu0 %v427, 96
        %v549 = vpop.permute.xlu0 %548
        %550 = vrot.lane.b32.xlu0 %v430, 96
        %v551 = vpop.permute.xlu0 %550
        %552 = vrot.lane.b32.xlu0 %v433, 96
        %v553 = vpop.permute.xlu0 %552
        %v558 = vrot.slane %v551, 4
        %v559 = vsel %vm436, %v558, %v547
        %v560 = vrot.slane %v547, 4
        %v561 = vsel %vm436, %v551, %v560
        %v563 = vunpack.c.l.s4 1983009808
        %v564 = vunpack.c.0.s8 %v563
        %v565 = vperm.slane %v559, %v564
        %v567 = vunpack.c.l.s4 1983009808
        %v568 = vunpack.c.0.s8 %v567
        %v569 = vperm.slane %v561, %v568
        %v570 = vrot.slane %v553, 4
        %v571 = vsel %vm436, %v570, %v549
        %v572 = vrot.slane %v549, 4
        %v573 = vsel %vm436, %v553, %v572
        %v575 = vunpack.c.l.s4 1983009808
        %v576 = vunpack.c.0.s8 %v575
        %v577 = vperm.slane %v571, %v576
        %v579 = vunpack.c.l.s4 1983009808
        %v580 = vunpack.c.0.s8 %v579
        %v581 = vperm.slane %v573, %v580
        %v582 = vrot.slane %v577, 4
        %v583 = vsel %vm436, %v582, %v565
        %v584 = vrot.slane %v565, 4
        %v585 = vsel %vm436, %v577, %v584
        %v587 = vunpack.c.l.s4 1934713408
        %v588 = vunpack.c.0.s8 %v587
        %v589 = vperm.slane %v583, %v588
        %v591 = vunpack.c.l.s4 1934713408
        %v592 = vunpack.c.0.s8 %v591
        %v593 = vperm.slane %v585, %v592
        %v594 = vrot.slane %v581, 4
        %v595 = vsel %vm436, %v594, %v569
        %v596 = vrot.slane %v569, 4
        %v597 = vsel %vm436, %v581, %v596
        %v599 = vunpack.c.l.s4 1934713408
        %v600 = vunpack.c.0.s8 %v599
        %v601 = vperm.slane %v595, %v600
        %v603 = vunpack.c.l.s4 1934713408
        %v604 = vunpack.c.0.s8 %v603
        %v605 = vperm.slane %v597, %v604
        %v606 = vrot.slane %v589, 4
        %v607 = vsel %vm436, 0.0, %v606
        %v608 = vrot.slane %v593, 4
        %v609 = vsel %vm436, 0.0, %v608
        %v610 = vrot.slane %v601, 4
        %v611 = vsel %vm436, 0.0, %v610
        %v612 = vrot.slane %v605, 4
        %v613 = vsel %vm436, 0.0, %v612
        %v614 = vsel %vm436, %v608, %v589
        %v616 = vunpack.c.l.s4 1983009808
        %v617 = vunpack.c.0.s8 %v616
        %v618 = vperm.slane %v614, %v617
        %v619 = vrot.slane %v609, 4
        %v620 = vsel %vm436, %v619, %v607
        %v622 = vunpack.c.l.s4 1983009808
        %v623 = vunpack.c.0.s8 %v622
        %v624 = vperm.slane %v620, %v623
        %v625 = vsel %vm436, %v612, %v601
        %v627 = vunpack.c.l.s4 1983009808
        %v628 = vunpack.c.0.s8 %v627
        %v629 = vperm.slane %v625, %v628
        %v630 = vrot.slane %v613, 4
        %v631 = vsel %vm436, %v630, %v611
        %v633 = vunpack.c.l.s4 1983009808
        %v634 = vunpack.c.0.s8 %v633
        %v635 = vperm.slane %v631, %v634
        %v636 = vrot.slane %v624, 4
        %v637 = vsel %vm436, %v636, %v618
        %v638 = vrot.slane %v618, 4
        %v639 = vsel %vm436, %v624, %v638
        %v641 = vunpack.c.l.s4 1934713408
        %v642 = vunpack.c.0.s8 %v641
        %v643 = vperm.slane %v637, %v642
        %v645 = vunpack.c.l.s4 1934713408
        %v646 = vunpack.c.0.s8 %v645
        %v647 = vperm.slane %v639, %v646
        %v648 = vrot.slane %v635, 4
        %v649 = vsel %vm436, %v648, %v629
        %v650 = vrot.slane %v629, 4
        %v651 = vsel %vm436, %v635, %v650
        %v653 = vunpack.c.l.s4 1934713408
        %v654 = vunpack.c.0.s8 %v653
        %v655 = vperm.slane %v649, %v654
        %v657 = vunpack.c.l.s4 1934713408
        %v658 = vunpack.c.0.s8 %v657
        %v659 = vperm.slane %v651, %v658
        %v660 = vrot.slane %v655, 4
        %v661 = vsel %vm436, %v660, %v643
        %v662 = vrot.slane %v643, 4
        %v663 = vsel %vm436, %v655, %v662
        %v664 = vrot.slane %v659, 4
        %v665 = vsel %vm436, %v664, %v647
        %v666 = vrot.slane %v647, 4
        %v667 = vsel %vm436, %v659, %v666
        %668 = vrot.lane.b32.xlu0 %v422, 64
        %v669 = vpop.permute.xlu0 %668
        %670 = vrot.lane.b32.xlu0 %v427, 64
        %v671 = vpop.permute.xlu0 %670
        %672 = vrot.lane.b32.xlu0 %v430, 64
        %v673 = vpop.permute.xlu0 %672
        %674 = vrot.lane.b32.xlu0 %v433, 64
        %v675 = vpop.permute.xlu0 %674
        %v680 = vrot.slane %v673, 4
        %v681 = vsel %vm436, %v680, %v669
        %v682 = vrot.slane %v669, 4
        %v683 = vsel %vm436, %v673, %v682
        %v685 = vunpack.c.l.s4 1983009808
        %v686 = vunpack.c.0.s8 %v685
        %v687 = vperm.slane %v681, %v686
        %v689 = vunpack.c.l.s4 1983009808
        %v690 = vunpack.c.0.s8 %v689
        %v691 = vperm.slane %v683, %v690
        %v692 = vrot.slane %v675, 4
        %v693 = vsel %vm436, %v692, %v671
        %v694 = vrot.slane %v671, 4
        %v695 = vsel %vm436, %v675, %v694
        %v697 = vunpack.c.l.s4 1983009808
        %v698 = vunpack.c.0.s8 %v697
        %v699 = vperm.slane %v693, %v698
        %v701 = vunpack.c.l.s4 1983009808
        %v702 = vunpack.c.0.s8 %v701
        %v703 = vperm.slane %v695, %v702
        %v704 = vrot.slane %v699, 4
        %v705 = vsel %vm436, %v704, %v687
        %v706 = vrot.slane %v687, 4
        %v707 = vsel %vm436, %v699, %v706
        %v709 = vunpack.c.l.s4 1934713408
        %v710 = vunpack.c.0.s8 %v709
        %v711 = vperm.slane %v705, %v710
        %v713 = vunpack.c.l.s4 1934713408
        %v714 = vunpack.c.0.s8 %v713
        %v715 = vperm.slane %v707, %v714
        %v716 = vrot.slane %v703, 4
        %v717 = vsel %vm436, %v716, %v691
        %v718 = vrot.slane %v691, 4
        %v719 = vsel %vm436, %v703, %v718
        %v721 = vunpack.c.l.s4 1934713408
        %v722 = vunpack.c.0.s8 %v721
        %v723 = vperm.slane %v717, %v722
        %v725 = vunpack.c.l.s4 1934713408
        %v726 = vunpack.c.0.s8 %v725
        %v727 = vperm.slane %v719, %v726
        %v728 = vrot.slane %v711, 4
        %v729 = vsel %vm436, 0.0, %v728
        %v730 = vrot.slane %v715, 4
        %v731 = vsel %vm436, 0.0, %v730
        %v732 = vrot.slane %v723, 4
        %v733 = vsel %vm436, 0.0, %v732
        %v734 = vrot.slane %v727, 4
        %v735 = vsel %vm436, 0.0, %v734
        %v736 = vsel %vm436, %v730, %v711
        %v738 = vunpack.c.l.s4 1983009808
        %v739 = vunpack.c.0.s8 %v738
        %v740 = vperm.slane %v736, %v739
        %v741 = vrot.slane %v731, 4
        %v742 = vsel %vm436, %v741, %v729
        %v744 = vunpack.c.l.s4 1983009808
        %v745 = vunpack.c.0.s8 %v744
        %v746 = vperm.slane %v742, %v745
        %v747 = vsel %vm436, %v734, %v723
        %v749 = vunpack.c.l.s4 1983009808
        %v750 = vunpack.c.0.s8 %v749
        %v751 = vperm.slane %v747, %v750
        %v752 = vrot.slane %v735, 4
        %v753 = vsel %vm436, %v752, %v733
        %v755 = vunpack.c.l.s4 1983009808
        %v756 = vunpack.c.0.s8 %v755
        %v757 = vperm.slane %v753, %v756
        %v758 = vrot.slane %v746, 4
        %v759 = vsel %vm436, %v758, %v740
        %v760 = vrot.slane %v740, 4
        %v761 = vsel %vm436, %v746, %v760
        %v763 = vunpack.c.l.s4 1934713408
        %v764 = vunpack.c.0.s8 %v763
        %v765 = vperm.slane %v759, %v764
        %v767 = vunpack.c.l.s4 1934713408
        %v768 = vunpack.c.0.s8 %v767
        %v769 = vperm.slane %v761, %v768
        %v770 = vrot.slane %v757, 4
        %v771 = vsel %vm436, %v770, %v751
        %v772 = vrot.slane %v751, 4
        %v773 = vsel %vm436, %v757, %v772
        %v775 = vunpack.c.l.s4 1934713408
        %v776 = vunpack.c.0.s8 %v775
        %v777 = vperm.slane %v771, %v776
        %v779 = vunpack.c.l.s4 1934713408
        %v780 = vunpack.c.0.s8 %v779
        %v781 = vperm.slane %v773, %v780
        %v782 = vrot.slane %v777, 4
        %v783 = vsel %vm436, %v782, %v765
        %v784 = vrot.slane %v765, 4
        %v785 = vsel %vm436, %v777, %v784
        %v786 = vrot.slane %v781, 4
        %v787 = vsel %vm436, %v786, %v769
        %v788 = vrot.slane %v769, 4
        %v789 = vsel %vm436, %v781, %v788
        %v790 = vmul.f32 %v539, 0.35355338
        %v791 = vmul.f32 %v541, 0.35355338
        %v792 = vmul.f32 %v543, 0.35355338
        %v793 = vmul.f32 %v545, 0.35355338
        %v794 = vpack.c.bf16 %v790, %v790
        %v795 = vpack.c.bf16 %v791, %v791
        %v796 = vpack.c.bf16 %v792, %v792
        %v797 = vpack.c.bf16 %v793, %v793
        %v798 = vpack.c.bf16 %v661, %v661
        %v799 = vpack.c.bf16 %v663, %v663
        %v800 = vpack.c.bf16 %v665, %v665
        %v801 = vpack.c.bf16 %v667, %v667
        %vm802 = vcmask 64512
        %v804 = vsel %vm802, %v794, 0
        %v807 = vsel %vm802, %v798, 0
        %809 = vmatpush.bf16.xpose.msra.mxu0 0
        %810 = vmatpush.bf16.xpose.msra.mxu0 0
        %811 = vmatpush.bf16.xpose.msra.mxu0 0
        %812 = vmatpush.bf16.xpose.msra.mxu0 0
        %813 = vmatpush.bf16.xpose.msra.mxu0 0
        %814 = vmatpush.bf16.xpose.msra.mxu0 0
        %815 = vmatpush.bf16.xpose.msra.mxu0 0
        %816 = vmatpush.bf16.xpose.msra.mxu0 %v807
        %817 = vmatmul.bf16.gmra.mxu0 %v804
        %v818 = vpop.f32.mrf.mxu0
        %v819 = vadd.f32 %v351, %v818
        %v820 = vpop.f32.mrf.mxu0
        %821 = vdwg.mxu0
        %v823 = vsel %vm802, %v795, 0
        %v826 = vsel %vm802, %v799, 0
        %828 = vmatpush.bf16.xpose.msra.mxu0 0
        %829 = vmatpush.bf16.xpose.msra.mxu0 0
        %830 = vmatpush.bf16.xpose.msra.mxu0 0
        %831 = vmatpush.bf16.xpose.msra.mxu0 0
        %832 = vmatpush.bf16.xpose.msra.mxu0 0
        %833 = vmatpush.bf16.xpose.msra.mxu0 0
        %834 = vmatpush.bf16.xpose.msra.mxu0 0
        %835 = vmatpush.bf16.xpose.msra.mxu0 %v826
        %836 = vmatmul.bf16.gmra.mxu0 %v823
        %v837 = vpop.f32.mrf.mxu0
        %v838 = vadd.f32 %v351, %v837
        %v839 = vpop.f32.mrf.mxu0
        %840 = vdwg.mxu0
        %v842 = vsel %vm802, %v796, 0
        %v845 = vsel %vm802, %v800, 0
        %847 = vmatpush.bf16.xpose.msra.mxu0 0
        %848 = vmatpush.bf16.xpose.msra.mxu0 0
        %849 = vmatpush.bf16.xpose.msra.mxu0 0
        %850 = vmatpush.bf16.xpose.msra.mxu0 0
        %851 = vmatpush.bf16.xpose.msra.mxu0 0
        %852 = vmatpush.bf16.xpose.msra.mxu0 0
        %853 = vmatpush.bf16.xpose.msra.mxu0 0
        %854 = vmatpush.bf16.xpose.msra.mxu0 %v845
        %855 = vmatmul.bf16.gmra.mxu0 %v842
        %v856 = vpop.f32.mrf.mxu0
        %v857 = vadd.f32 %v351, %v856
        %v858 = vpop.f32.mrf.mxu0
        %859 = vdwg.mxu0
        %v861 = vsel %vm802, %v797, 0
        %v864 = vsel %vm802, %v801, 0
        %866 = vmatpush.bf16.xpose.msra.mxu0 0
        %867 = vmatpush.bf16.xpose.msra.mxu0 0
        %868 = vmatpush.bf16.xpose.msra.mxu0 0
        %869 = vmatpush.bf16.xpose.msra.mxu0 0
        %870 = vmatpush.bf16.xpose.msra.mxu0 0
        %871 = vmatpush.bf16.xpose.msra.mxu0 0
        %872 = vmatpush.bf16.xpose.msra.mxu0 0
        %873 = vmatpush.bf16.xpose.msra.mxu0 %v864
        %874 = vmatmul.bf16.gmra.mxu0 %v861
        %v875 = vpop.f32.mrf.mxu0
        %v876 = vadd.f32 %v351, %v875
        %v877 = vpop.f32.mrf.mxu0
        %878 = vdwg.mxu0
        %v879 = vsel %vm802, %v819, -inf
        %880 = vmax.xlane.f32.xlu0 %v879
        %v881 = vpop.xlane.xlu0 %880
        %v882 = vsel %vm802, %v838, -inf
        %883 = vmax.xlane.f32.xlu0 %v882
        %v884 = vpop.xlane.xlu0 %883
        %v885 = vsel %vm802, %v857, -inf
        %886 = vmax.xlane.f32.xlu0 %v885
        %v887 = vpop.xlane.xlu0 %886
        %v888 = vsel %vm802, %v876, -inf
        %889 = vmax.xlane.f32.xlu0 %v888
        %v890 = vpop.xlane.xlu0 %889
        %v891 = vsub.f32 %v819, %v881
        %v892 = vsub.f32 %v838, %v884
        %v893 = vsub.f32 %v857, %v887
        %v894 = vsub.f32 %v876, %v890
        %v895 = vmul.f32 %v891, 1.442695
        %v896 = vpow.pop %v895
        %v897 = vmul.f32 %v892, 1.442695
        %v898 = vpow.pop %v897
        %v899 = vmul.f32 %v893, 1.442695
        %v900 = vpow.pop %v899
        %v901 = vmul.f32 %v894, 1.442695
        %v902 = vpow.pop %v901
        %v903 = vsel %vm802, %v896, 0.0
        %904 = vadd.xlane.f32.xlu0 %v903
        %v905 = vpop.xlane.xlu0 %904
        %v906 = vsel %vm802, %v898, 0.0
        %907 = vadd.xlane.f32.xlu0 %v906
        %v908 = vpop.xlane.xlu0 %907
        %v909 = vsel %vm802, %v900, 0.0
        %910 = vadd.xlane.f32.xlu0 %v909
        %v911 = vpop.xlane.xlu0 %910
        %v912 = vsel %vm802, %v902, 0.0
        %913 = vadd.xlane.f32.xlu0 %v912
        %v914 = vpop.xlane.xlu0 %913
        %v915 = vrcp.pop %v905
        %v916 = vrcp.pop %v908
        %v917 = vrcp.pop %v911
        %v918 = vrcp.pop %v914
        %v919 = vmul.f32 %v896, %v915
        %v920 = vmul.f32 %v898, %v916
        %v921 = vmul.f32 %v900, %v917
        %v922 = vmul.f32 %v902, %v918
        %v923 = vpack.c.bf16 %v919, %v919
        %v924 = vpack.c.bf16 %v920, %v920
        %v925 = vpack.c.bf16 %v921, %v921
        %v926 = vpack.c.bf16 %v922, %v922
        %v927 = vpack.c.bf16 %v783, %v783
        %v928 = vpack.c.bf16 %v785, %v785
        %v929 = vpack.c.bf16 %v787, %v787
        %v930 = vpack.c.bf16 %v789, %v789
        %v932 = vsel %vm802, %v923, 0
        %vm934 = vcmask 1043456
        %v936 = vsel %vm934, %v927, 0
        %938 = vmatpush.bf16.msra.mxu0 0
        %939 = vmatpush.bf16.msra.mxu0 0
        %940 = vmatpush.bf16.msra.mxu0 0
        %941 = vmatpush.bf16.msra.mxu0 0
        %942 = vmatpush.bf16.msra.mxu0 0
        %943 = vmatpush.bf16.msra.mxu0 0
        %944 = vmatpush.bf16.msra.mxu0 0
        %945 = vmatpush.bf16.msra.mxu0 %v936
        %946 = vmatmul.bf16.gmra.mxu0 %v932
        %v947 = vpop.f32.mrf.mxu0
        %v948 = vadd.f32 0.0, %v947
        %v949 = vpop.f32.mrf.mxu0
        %950 = vdwg.mxu0
        %v952 = vsel %vm802, %v924, 0
        %v955 = vsel %vm934, %v928, 0
        %957 = vmatpush.bf16.msra.mxu0 0
        %958 = vmatpush.bf16.msra.mxu0 0
        %959 = vmatpush.bf16.msra.mxu0 0
        %960 = vmatpush.bf16.msra.mxu0 0
        %961 = vmatpush.bf16.msra.mxu0 0
        %962 = vmatpush.bf16.msra.mxu0 0
        %963 = vmatpush.bf16.msra.mxu0 0
        %964 = vmatpush.bf16.msra.mxu0 %v955
        %965 = vmatmul.bf16.gmra.mxu0 %v952
        %v966 = vpop.f32.mrf.mxu0
        %v967 = vadd.f32 0.0, %v966
        %v968 = vpop.f32.mrf.mxu0
        %969 = vdwg.mxu0
        %v971 = vsel %vm802, %v925, 0
        %v974 = vsel %vm934, %v929, 0
        %976 = vmatpush.bf16.msra.mxu0 0
        %977 = vmatpush.bf16.msra.mxu0 0
        %978 = vmatpush.bf16.msra.mxu0 0
        %979 = vmatpush.bf16.msra.mxu0 0
        %980 = vmatpush.bf16.msra.mxu0 0
        %981 = vmatpush.bf16.msra.mxu0 0
        %982 = vmatpush.bf16.msra.mxu0 0
        %983 = vmatpush.bf16.msra.mxu0 %v974
        %984 = vmatmul.bf16.gmra.mxu0 %v971
        %v985 = vpop.f32.mrf.mxu0
        %v986 = vadd.f32 0.0, %v985
        %v987 = vpop.f32.mrf.mxu0
        %988 = vdwg.mxu0
        %v990 = vsel %vm802, %v926, 0
        %v993 = vsel %vm934, %v930, 0
        %995 = vmatpush.bf16.msra.mxu0 0
        %996 = vmatpush.bf16.msra.mxu0 0
        %997 = vmatpush.bf16.msra.mxu0 0
        %998 = vmatpush.bf16.msra.mxu0 0
        %999 = vmatpush.bf16.msra.mxu0 0
        %1000 = vmatpush.bf16.msra.mxu0 0
        %1001 = vmatpush.bf16.msra.mxu0 0
        %1002 = vmatpush.bf16.msra.mxu0 %v993
        %1003 = vmatmul.bf16.gmra.mxu0 %v990
        %v1004 = vpop.f32.mrf.mxu0
        %v1005 = vadd.f32 0.0, %v1004
        %v1006 = vpop.f32.mrf.mxu0
        %1007 = vdwg.mxu0
        %v1008 = vrot.slane %v986, 4
        %v1009 = vsel %vm436, %v1008, %v948
        %v1010 = vrot.slane %v948, 4
        %v1011 = vsel %vm436, %v986, %v1010
        %v1013 = vunpack.c.l.s4 1983009808
        %v1014 = vunpack.c.0.s8 %v1013
        %v1015 = vperm.slane %v1009, %v1014
        %v1017 = vunpack.c.l.s4 1983009808
        %v1018 = vunpack.c.0.s8 %v1017
        %v1019 = vperm.slane %v1011, %v1018
        %v1020 = vrot.slane %v1005, 4
        %v1021 = vsel %vm436, %v1020, %v967
        %v1022 = vrot.slane %v967, 4
        %v1023 = vsel %vm436, %v1005, %v1022
        %v1025 = vunpack.c.l.s4 1983009808
        %v1026 = vunpack.c.0.s8 %v1025
        %v1027 = vperm.slane %v1021, %v1026
        %v1029 = vunpack.c.l.s4 1983009808
        %v1030 = vunpack.c.0.s8 %v1029
        %v1031 = vperm.slane %v1023, %v1030
        %v1032 = vrot.slane %v1027, 4
        %v1033 = vsel %vm436, %v1032, %v1015
        %v1034 = vrot.slane %v1015, 4
        %v1035 = vsel %vm436, %v1027, %v1034
        %v1037 = vunpack.c.l.s4 1934713408
        %v1038 = vunpack.c.0.s8 %v1037
        %v1039 = vperm.slane %v1033, %v1038
        %v1041 = vunpack.c.l.s4 1934713408
        %v1042 = vunpack.c.0.s8 %v1041
        %v1043 = vperm.slane %v1035, %v1042
        %v1044 = vrot.slane %v1031, 4
        %v1045 = vsel %vm436, %v1044, %v1019
        %v1046 = vrot.slane %v1019, 4
        %v1047 = vsel %vm436, %v1031, %v1046
        %v1049 = vunpack.c.l.s4 1934713408
        %v1050 = vunpack.c.0.s8 %v1049
        %v1051 = vperm.slane %v1045, %v1050
        %v1053 = vunpack.c.l.s4 1934713408
        %v1054 = vunpack.c.0.s8 %v1053
        %v1055 = vperm.slane %v1047, %v1054
        %v1056 = vrot.slane %v1039, 4
        %v1057 = vsel %vm436, 0.0, %v1056
        %v1058 = vrot.slane %v1043, 4
        %v1059 = vsel %vm436, 0.0, %v1058
        %v1060 = vrot.slane %v1051, 4
        %v1061 = vsel %vm436, 0.0, %v1060
        %v1062 = vrot.slane %v1055, 4
        %v1063 = vsel %vm436, 0.0, %v1062
        %v1064 = vsel %vm436, %v1058, %v1039
        %v1066 = vunpack.c.l.s4 1983009808
        %v1067 = vunpack.c.0.s8 %v1066
        %v1068 = vperm.slane %v1064, %v1067
        %v1069 = vrot.slane %v1059, 4
        %v1070 = vsel %vm436, %v1069, %v1057
        %v1072 = vunpack.c.l.s4 1983009808
        %v1073 = vunpack.c.0.s8 %v1072
        %v1074 = vperm.slane %v1070, %v1073
        %v1075 = vsel %vm436, %v1062, %v1051
        %v1077 = vunpack.c.l.s4 1983009808
        %v1078 = vunpack.c.0.s8 %v1077
        %v1079 = vperm.slane %v1075, %v1078
        %v1080 = vrot.slane %v1063, 4
        %v1081 = vsel %vm436, %v1080, %v1061
        %v1083 = vunpack.c.l.s4 1983009808
        %v1084 = vunpack.c.0.s8 %v1083
        %v1085 = vperm.slane %v1081, %v1084
        %v1086 = vrot.slane %v1074, 4
        %v1087 = vsel %vm436, %v1086, %v1068
        %v1088 = vrot.slane %v1068, 4
        %v1089 = vsel %vm436, %v1074, %v1088
        %v1091 = vunpack.c.l.s4 1934713408
        %v1092 = vunpack.c.0.s8 %v1091
        %v1093 = vperm.slane %v1087, %v1092
        %v1095 = vunpack.c.l.s4 1934713408
        %v1096 = vunpack.c.0.s8 %v1095
        %v1097 = vperm.slane %v1089, %v1096
        %v1098 = vrot.slane %v1085, 4
        %v1099 = vsel %vm436, %v1098, %v1079
        %v1100 = vrot.slane %v1079, 4
        %v1101 = vsel %vm436, %v1085, %v1100
        %v1103 = vunpack.c.l.s4 1934713408
        %v1104 = vunpack.c.0.s8 %v1103
        %v1105 = vperm.slane %v1099, %v1104
        %v1107 = vunpack.c.l.s4 1934713408
        %v1108 = vunpack.c.0.s8 %v1107
        %v1109 = vperm.slane %v1101, %v1108
        %v1110 = vrot.slane %v1105, 4
        %v1111 = vsel %vm436, %v1110, %v1093
        %v1112 = vrot.slane %v1093, 4
        %v1113 = vsel %vm436, %v1105, %v1112
        %v1114 = vrot.slane %v1109, 4
        %v1115 = vsel %vm436, %v1114, %v1097
        %v1116 = vrot.slane %v1097, 4
        %v1117 = vsel %vm436, %v1109, %v1116
        %1119 = vrot.lane.b32.xlu0 %v1113, 8
        %v1120 = vpop.permute.xlu0 %1119
        %1123 = vrot.lane.b32.xlu0 %v1115, 16
        %v1124 = vpop.permute.xlu0 %1123
        %1127 = vrot.lane.b32.xlu0 %v1117, 24
        %v1128 = vpop.permute.xlu0 %1127
        %v1130 = vsel %vm802, %v1111, %v1120
        %vm1131 = vcmask 130048
        %v1132 = vsel %vm1131, %v1130, %v1124
        %vm1133 = vcmask 195584
        %v1134 = vsel %vm1133, %v1132, %v1128
        %v1135 = vld [vmem:[%s4] sm:$0xf]
        %v1136 = vld [vmem:[%s4 + $0x4] sm:$0xf]
        %v1137 = vld [vmem:[%s4 + $0x8] sm:$0xf]
        %v1138 = vld [vmem:[%s4 + $0xc] sm:$0xf]
        %v1139 = vpack.c.bf16 %v1134, %v1134
        %v1140 = vperm.slane %v394, 2
        %v1145 = vunpack.c.l.b16 %v1135
        %v1146 = vunpack.c.l.b16 %v1136
        %v1147 = vunpack.c.l.b16 %v1137
        %v1148 = vunpack.c.l.b16 %v1138
        %v1149 = vpack.c.b16 %v1146, %v1145
        %v1150 = vpack.c.b16 %v1148, %v1147
        %v1154 = vsel %vm356, %v1139, 0
        %1156 = vmatpush.bf16.msra.mxu0 0
        %1157 = vmatpush.bf16.msra.mxu0 0
        %1158 = vmatpush.bf16.msra.mxu0 0
        %1159 = vmatpush.bf16.msra.mxu0 0
        %1160 = vmatpush.bf16.msra.mxu0 0
        %1161 = vmatpush.bf16.msra.mxu0 0
        %1162 = vmatpush.bf16.msra.mxu0 %v1150
        %1163 = vmatpush.bf16.msra.mxu0 %v1149
        %1164 = vmatmul.bf16.gmra.mxu0 %v1154
        %v1165 = vpop.f32.mrf.mxu0
        %v1166 = vadd.f32 %v1140, %v1165
        %v1167 = vpop.f32.mrf.mxu0
        %1168 = vdwg.mxu0
        %v1169 = vadd.f32 %v353, %v1166
        %v1170 = vld [vmem:[%s2 + $0x1] sm:$0x1]
        %v1171 = vld [vmem:[%s2 + $0xc] sm:$0x1]
        %v1172 = vsel %vm356, %v1169, 0.0
        %1173 = vadd.xlane.f32.xlu0 %v1172
        %v1174 = vpop.xlane.xlu0 %1173
        %v1175 = vmul.f32 %v1174, %v366
        %v1176 = vsub.f32 %v1169, %v1175
        %v1177 = vmul.f32 %v1176, %v1176
        %v1178 = vsel %vm356, %v1177, 0.0
        %1179 = vadd.xlane.f32.xlu0 %v1178
        %v1180 = vpop.xlane.xlu0 %1179
        %v1181 = vmul.f32 %v1180, %v366
        %v1182 = vadd.f32 %v1181, 1e-05
        %v1183 = vrsqrt.pop %v1182
        %v1184 = vmul.f32 %v1183, %v1182
        %v1185 = vmul.f32 %v1184, %v1183
        %v1186 = vmul.f32 0.5, %v1185
        %v1187 = vsub.f32 1.5, %v1186
        %v1188 = vmul.f32 %v1183, %v1187
        %vm1189 = vweird.f32 %v1182
        %vm1190 = vweird.f32 %v1183
        %vm1191 = vmor %vm1189, %vm1190
        %v1192 = vsel %vm1191, %v1183, %v1188
        %v1193 = vmul.f32 %v1176, %v1192
        %v1194 = vperm.slane %v1170, 0
        %v1195 = vmul.f32 %v1193, %v1194
        %v1196 = vperm.slane %v1171, 0
        %v1197 = vadd.f32 %v1195, %v1196
        %v1198 = vld [vmem:[%s7] sm:$0xf]
        %v1199 = vld [vmem:[%s5] sm:$0xf]
        %v1200 = vld [vmem:[%s5 + $0x4] sm:$0xf]
        %v1201 = vld [vmem:[%s5 + $0x8] sm:$0xf]
        %v1202 = vld [vmem:[%s5 + $0xc] sm:$0xf]
        %v1203 = vpack.c.bf16 %v1197, %v1197
        %v1204 = vperm.slane %v1198, 1
        %v1209 = vunpack.c.l.b16 %v1199
        %v1210 = vunpack.c.l.b16 %v1200
        %v1211 = vunpack.c.l.b16 %v1201
        %v1212 = vunpack.c.l.b16 %v1202
        %v1213 = vpack.c.b16 %v1210, %v1209
        %v1214 = vpack.c.b16 %v1212, %v1211
        %v1218 = vsel %vm356, %v1203, 0
        %1220 = vmatpush.bf16.msra.mxu0 0
        %1221 = vmatpush.bf16.msra.mxu0 0
        %1222 = vmatpush.bf16.msra.mxu0 0
        %1223 = vmatpush.bf16.msra.mxu0 0
        %1224 = vmatpush.bf16.msra.mxu0 0
        %1225 = vmatpush.bf16.msra.mxu0 0
        %1226 = vmatpush.bf16.msra.mxu0 %v1214
        %1227 = vmatpush.bf16.msra.mxu0 %v1213
        %1228 = vmatmul.bf16.gmra.mxu0 %v1218
        %v1229 = vpop.f32.mrf.mxu0
        %v1230 = vadd.f32 %v1204, %v1229
        %v1231 = vpop.f32.mrf.mxu0
        %1232 = vdwg.mxu0
        %v1233 = vmul.f32 %v1230, 0.5
        %v1234 = vmul.f32 %v1230, 0.70710677
        %v1235 = vand.u32 2147483647, %v1234
        %v1236 = vmul.f32 %v1235, 0.3275911
        %v1237 = vadd.f32 %v1236, 1.0
        %v1238 = vrcp.pop %v1237
        %v1239 = vmul.f32 %v1238, 1.0614054
        %v1240 = vadd.f32 %v1239, -1.4531521
        %v1241 = vmul.f32 %v1240, %v1238
        %v1242 = vadd.f32 %v1241, 1.4214138
        %v1243 = vmul.f32 %v1242, %v1238
        %v1244 = vadd.f32 %v1243, -0.28449672
        %v1245 = vmul.f32 %v1244, %v1238
        %v1246 = vadd.f32 %v1245, 0.2548296
        %v1247 = vmul.f32 %v1246, %v1238
        %v1248 = vsub.f32 0.0, %v1235
        %v1249 = vmul.f32 %v1248, %v1235
        %v1250 = vmul.f32 %v1249, 1.442695
        %v1251 = vpow.pop %v1250
        %v1252 = vmul.f32 %v1247, %v1251
        %v1253 = vsub.f32 1.0, %v1252
        %vm1254 = vcmp.ge.f32.partialorder %v1234, 0.0
        %v1255 = vsub.f32 0.0, %v1253
        %v1256 = vsel %vm1254, %v1253, %v1255
        %v1257 = vadd.f32 %v1256, 1.0
        %v1258 = vmul.f32 %v1233, %v1257
        %v1259 = vld [vmem:[%s6] sm:$0xf]
        %v1260 = vld [vmem:[%s6 + $0x4] sm:$0xf]
        %v1261 = vld [vmem:[%s6 + $0x8] sm:$0xf]
        %v1262 = vld [vmem:[%s6 + $0xc] sm:$0xf]
        %v1263 = vld [vmem:[%s6 + $0x10] sm:$0xf]
        %v1264 = vld [vmem:[%s6 + $0x14] sm:$0xf]
        %v1265 = vld [vmem:[%s6 + $0x18] sm:$0xf]
        %v1266 = vld [vmem:[%s6 + $0x1c] sm:$0xf]
        %v1267 = vld [vmem:[%s6 + $0x20] sm:$0xf]
        %v1268 = vld [vmem:[%s6 + $0x24] sm:$0xf]
        %v1269 = vld [vmem:[%s6 + $0x28] sm:$0xf]
        %v1270 = vld [vmem:[%s6 + $0x2c] sm:$0xf]
        %v1271 = vld [vmem:[%s6 + $0x30] sm:$0xf]
        %v1272 = vld [vmem:[%s6 + $0x34] sm:$0xf]
        %v1273 = vld [vmem:[%s6 + $0x38] sm:$0xf]
        %v1274 = vld [vmem:[%s6 + $0x3c] sm:$0xf]
        %v1275 = vpack.c.bf16 %v1258, %v1258
        %v1276 = vperm.slane %v1198, 3
        %v1293 = vunpack.c.l.b16 %v1259
        %v1294 = vunpack.c.l.b16 %v1260
        %v1295 = vunpack.c.l.b16 %v1261
        %v1296 = vunpack.c.l.b16 %v1262
        %v1297 = vunpack.c.l.b16 %v1263
        %v1298 = vunpack.c.l.b16 %v1264
        %v1299 = vunpack.c.l.b16 %v1265
        %v1300 = vunpack.c.l.b16 %v1266
        %v1301 = vunpack.c.l.b16 %v1267
        %v1302 = vunpack.c.l.b16 %v1268
        %v1303 = vunpack.c.l.b16 %v1269
        %v1304 = vunpack.c.l.b16 %v1270
        %v1305 = vunpack.c.l.b16 %v1271
        %v1306 = vunpack.c.l.b16 %v1272
        %v1307 = vunpack.c.l.b16 %v1273
        %v1308 = vunpack.c.l.b16 %v1274
        %v1309 = vpack.c.b16 %v1294, %v1293
        %v1310 = vpack.c.b16 %v1296, %v1295
        %v1311 = vpack.c.b16 %v1298, %v1297
        %v1312 = vpack.c.b16 %v1300, %v1299
        %v1313 = vpack.c.b16 %v1302, %v1301
        %v1314 = vpack.c.b16 %v1304, %v1303
        %v1315 = vpack.c.b16 %v1306, %v1305
        %v1316 = vpack.c.b16 %v1308, %v1307
        %1325 = vmatpush.bf16.msra.mxu0 %v1316
        %1326 = vmatpush.bf16.msra.mxu0 %v1315
        %1327 = vmatpush.bf16.msra.mxu0 %v1314
        %1328 = vmatpush.bf16.msra.mxu0 %v1313
        %1329 = vmatpush.bf16.msra.mxu0 %v1312
        %1330 = vmatpush.bf16.msra.mxu0 %v1311
        %1331 = vmatpush.bf16.msra.mxu0 %v1310
        %1332 = vmatpush.bf16.msra.mxu0 %v1309
        %1333 = vmatmul.bf16.gmra.mxu0 %v1275
        %v1334 = vpop.f32.mrf.mxu0
        %v1335 = vadd.f32 %v1276, %v1334
        %v1336 = vpop.f32.mrf.mxu0
        %1337 = vdwg.mxu0
        %v1338 = vadd.f32 %v1169, %v1335
        %v1339 = vld [vmem:[%s2 + $0x2] sm:$0x1]
        %v1340 = vld [vmem:[%s2 + $0xd] sm:$0x1]
        %v1341 = vsel %vm356, %v1338, 0.0
        %1342 = vadd.xlane.f32.xlu0 %v1341
        %v1343 = vpop.xlane.xlu0 %1342
        %v1344 = vmul.f32 %v1343, %v366
        %v1345 = vsub.f32 %v1338, %v1344
        %v1346 = vmul.f32 %v1345, %v1345
        %v1347 = vsel %vm356, %v1346, 0.0
        %1348 = vadd.xlane.f32.xlu0 %v1347
        %v1349 = vpop.xlane.xlu0 %1348
        %v1350 = vmul.f32 %v1349, %v366
        %v1351 = vadd.f32 %v1350, 1e-05
        %v1352 = vrsqrt.pop %v1351
        %v1353 = vmul.f32 %v1352, %v1351
        %v1354 = vmul.f32 %v1353, %v1352
        %v1355 = vmul.f32 0.5, %v1354
        %v1356 = vsub.f32 1.5, %v1355
        %v1357 = vmul.f32 %v1352, %v1356
        %vm1358 = vweird.f32 %v1351
        %vm1359 = vweird.f32 %v1352
        %vm1360 = vmor %vm1358, %vm1359
        %v1361 = vsel %vm1360, %v1352, %v1357
        %v1362 = vmul.f32 %v1345, %v1361
        %v1363 = vperm.slane %v1339, 0
        %v1364 = vmul.f32 %v1362, %v1363
        %v1365 = vperm.slane %v1340, 0
        %v1366 = vadd.f32 %v1364, %v1365
        %v1367 = vld [vmem:[%s2 + $0x3] sm:$0x1]
        %v1368 = vld [vmem:[%s2 + $0xe] sm:$0x1]
        %v1369 = vsel %vm356, %v352, 0.0
        %1370 = vadd.xlane.f32.xlu0 %v1369
        %v1371 = vpop.xlane.xlu0 %1370
        %v1372 = vmul.f32 %v1371, %v366
        %v1373 = vsub.f32 %v352, %v1372
        %v1374 = vmul.f32 %v1373, %v1373
        %v1375 = vsel %vm356, %v1374, 0.0
        %1376 = vadd.xlane.f32.xlu0 %v1375
        %v1377 = vpop.xlane.xlu0 %1376
        %v1378 = vmul.f32 %v1377, %v366
        %v1379 = vadd.f32 %v1378, 1e-05
        %v1380 = vrsqrt.pop %v1379
        %v1381 = vmul.f32 %v1380, %v1379
        %v1382 = vmul.f32 %v1381, %v1380
        %v1383 = vmul.f32 0.5, %v1382
        %v1384 = vsub.f32 1.5, %v1383
        %v1385 = vmul.f32 %v1380, %v1384
        %vm1386 = vweird.f32 %v1379
        %vm1387 = vweird.f32 %v1380
        %vm1388 = vmor %vm1386, %vm1387
        %v1389 = vsel %vm1388, %v1380, %v1385
        %v1390 = vmul.f32 %v1373, %v1389
        %v1391 = vperm.slane %v1367, 0
        %v1392 = vmul.f32 %v1390, %v1391
        %v1393 = vperm.slane %v1368, 0
        %v1394 = vadd.f32 %v1392, %v1393
        %s1395 = scalar_lea.vmem %s3, 16
        %v1396 = vld [vmem:[%s1395] sm:$0xf]
        %v1397 = vld [vmem:[%s1395 + $0x4] sm:$0xf]
        %v1398 = vld [vmem:[%s1395 + $0x8] sm:$0xf]
        %v1399 = vld [vmem:[%s1395 + $0xc] sm:$0xf]
        %s1400 = scalar_lea.vmem %s7, 4
        %v1401 = vld [vmem:[%s1400] sm:$0xf]
        %v1402 = vpack.c.bf16 %v1366, %v1366
        %v1403 = vperm.slane %v1401, 0
        %v1408 = vunpack.c.l.b16 %v1396
        %v1409 = vunpack.c.l.b16 %v1397
        %v1410 = vunpack.c.l.b16 %v1398
        %v1411 = vunpack.c.l.b16 %v1399
        %v1412 = vpack.c.b16 %v1409, %v1408
        %v1413 = vpack.c.b16 %v1411, %v1410
        %v1417 = vsel %vm356, %v1402, 0
        %1419 = vmatpush.bf16.msra.mxu0 0
        %1420 = vmatpush.bf16.msra.mxu0 0
        %1421 = vmatpush.bf16.msra.mxu0 0
        %1422 = vmatpush.bf16.msra.mxu0 0
        %1423 = vmatpush.bf16.msra.mxu0 0
        %1424 = vmatpush.bf16.msra.mxu0 0
        %1425 = vmatpush.bf16.msra.mxu0 %v1413
        %1426 = vmatpush.bf16.msra.mxu0 %v1412
        %1427 = vmatmul.bf16.gmra.mxu0 %v1417
        %v1428 = vpop.f32.mrf.mxu0
        %v1429 = vadd.f32 %v1403, %v1428
        %v1430 = vpop.f32.mrf.mxu0
        %1431 = vdwg.mxu0
        %1433 = vrot.lane.b32.xlu0 %v1429, 120
        %v1434 = vpop.permute.xlu0 %1433
        %1436 = vrot.lane.b32.xlu0 %v1429, 112
        %v1437 = vpop.permute.xlu0 %1436
        %1439 = vrot.lane.b32.xlu0 %v1429, 104
        %v1440 = vpop.permute.xlu0 %1439
        %v1442 = vrot.slane %v1437, 4
        %v1443 = vsel %vm436, %v1442, %v1429
        %v1444 = vrot.slane %v1429, 4
        %v1445 = vsel %vm436, %v1437, %v1444
        %v1447 = vunpack.c.l.s4 1983009808
        %v1448 = vunpack.c.0.s8 %v1447
        %v1449 = vperm.slane %v1443, %v1448
        %v1451 = vunpack.c.l.s4 1983009808
        %v1452 = vunpack.c.0.s8 %v1451
        %v1453 = vperm.slane %v1445, %v1452
        %v1454 = vrot.slane %v1440, 4
        %v1455 = vsel %vm436, %v1454, %v1434
        %v1456 = vrot.slane %v1434, 4
        %v1457 = vsel %vm436, %v1440, %v1456
        %v1459 = vunpack.c.l.s4 1983009808
        %v1460 = vunpack.c.0.s8 %v1459
        %v1461 = vperm.slane %v1455, %v1460
        %v1463 = vunpack.c.l.s4 1983009808
        %v1464 = vunpack.c.0.s8 %v1463
        %v1465 = vperm.slane %v1457, %v1464
        %v1466 = vrot.slane %v1461, 4
        %v1467 = vsel %vm436, %v1466, %v1449
        %v1468 = vrot.slane %v1449, 4
        %v1469 = vsel %vm436, %v1461, %v1468
        %v1471 = vunpack.c.l.s4 1934713408
        %v1472 = vunpack.c.0.s8 %v1471
        %v1473 = vperm.slane %v1467, %v1472
        %v1475 = vunpack.c.l.s4 1934713408
        %v1476 = vunpack.c.0.s8 %v1475
        %v1477 = vperm.slane %v1469, %v1476
        %v1478 = vrot.slane %v1465, 4
        %v1479 = vsel %vm436, %v1478, %v1453
        %v1480 = vrot.slane %v1453, 4
        %v1481 = vsel %vm436, %v1465, %v1480
        %v1483 = vunpack.c.l.s4 1934713408
        %v1484 = vunpack.c.0.s8 %v1483
        %v1485 = vperm.slane %v1479, %v1484
        %v1487 = vunpack.c.l.s4 1934713408
        %v1488 = vunpack.c.0.s8 %v1487
        %v1489 = vperm.slane %v1481, %v1488
        %v1490 = vrot.slane %v1473, 4
        %v1491 = vsel %vm436, 0.0, %v1490
        %v1492 = vrot.slane %v1477, 4
        %v1493 = vsel %vm436, 0.0, %v1492
        %v1494 = vrot.slane %v1485, 4
        %v1495 = vsel %vm436, 0.0, %v1494
        %v1496 = vrot.slane %v1489, 4
        %v1497 = vsel %vm436, 0.0, %v1496
        %v1498 = vsel %vm436, %v1492, %v1473
        %v1500 = vunpack.c.l.s4 1983009808
        %v1501 = vunpack.c.0.s8 %v1500
        %v1502 = vperm.slane %v1498, %v1501
        %v1503 = vrot.slane %v1493, 4
        %v1504 = vsel %vm436, %v1503, %v1491
        %v1506 = vunpack.c.l.s4 1983009808
        %v1507 = vunpack.c.0.s8 %v1506
        %v1508 = vperm.slane %v1504, %v1507
        %v1509 = vsel %vm436, %v1496, %v1485
        %v1511 = vunpack.c.l.s4 1983009808
        %v1512 = vunpack.c.0.s8 %v1511
        %v1513 = vperm.slane %v1509, %v1512
        %v1514 = vrot.slane %v1497, 4
        %v1515 = vsel %vm436, %v1514, %v1495
        %v1517 = vunpack.c.l.s4 1983009808
        %v1518 = vunpack.c.0.s8 %v1517
        %v1519 = vperm.slane %v1515, %v1518
        %v1520 = vrot.slane %v1508, 4
        %v1521 = vsel %vm436, %v1520, %v1502
        %v1522 = vrot.slane %v1502, 4
        %v1523 = vsel %vm436, %v1508, %v1522
        %v1525 = vunpack.c.l.s4 1934713408
        %v1526 = vunpack.c.0.s8 %v1525
        %v1527 = vperm.slane %v1521, %v1526
        %v1529 = vunpack.c.l.s4 1934713408
        %v1530 = vunpack.c.0.s8 %v1529
        %v1531 = vperm.slane %v1523, %v1530
        %v1532 = vrot.slane %v1519, 4
        %v1533 = vsel %vm436, %v1532, %v1513
        %v1534 = vrot.slane %v1513, 4
        %v1535 = vsel %vm436, %v1519, %v1534
        %v1537 = vunpack.c.l.s4 1934713408
        %v1538 = vunpack.c.0.s8 %v1537
        %v1539 = vperm.slane %v1533, %v1538
        %v1541 = vunpack.c.l.s4 1934713408
        %v1542 = vunpack.c.0.s8 %v1541
        %v1543 = vperm.slane %v1535, %v1542
        %v1544 = vrot.slane %v1539, 4
        %v1545 = vsel %vm436, %v1544, %v1527
        %v1546 = vrot.slane %v1527, 4
        %v1547 = vsel %vm436, %v1539, %v1546
        %v1548 = vrot.slane %v1543, 4
        %v1549 = vsel %vm436, %v1548, %v1531
        %v1550 = vrot.slane %v1531, 4
        %v1551 = vsel %vm436, %v1543, %v1550
        %v1552 = vpack.c.bf16 %v1394, %v1394
        %1553 = vrot.lane.b32.xlu0 %v1412, 96
        %v1554 = vpop.permute.xlu0 %1553
        %1555 = vrot.lane.b32.xlu0 %v1413, 96
        %v1556 = vpop.permute.xlu0 %1555
        %1560 = vrot.lane.b32.xlu0 %v1403, 96
        %v1561 = vpop.permute.xlu0 %1560
        %v1564 = vsel %vm356, %v1552, 0
        %1566 = vmatpush.bf16.msra.mxu0 0
        %1567 = vmatpush.bf16.msra.mxu0 0
        %1568 = vmatpush.bf16.msra.mxu0 0
        %1569 = vmatpush.bf16.msra.mxu0 0
        %1570 = vmatpush.bf16.msra.mxu0 0
        %1571 = vmatpush.bf16.msra.mxu0 0
        %1572 = vmatpush.bf16.msra.mxu0 %v1556
        %1573 = vmatpush.bf16.msra.mxu0 %v1554
        %1574 = vmatmul.bf16.gmra.mxu0 %v1564
        %v1575 = vpop.f32.mrf.mxu0
        %v1576 = vadd.f32 %v1561, %v1575
        %v1577 = vpop.f32.mrf.mxu0
        %1578 = vdwg.mxu0
        %1580 = vrot.lane.b32.xlu0 %v1576, 120
        %v1581 = vpop.permute.xlu0 %1580
        %1583 = vrot.lane.b32.xlu0 %v1576, 112
        %v1584 = vpop.permute.xlu0 %1583
        %1586 = vrot.lane.b32.xlu0 %v1576, 104
        %v1587 = vpop.permute.xlu0 %1586
        %v1589 = vrot.slane %v1584, 4
        %v1590 = vsel %vm436, %v1589, %v1576
        %v1591 = vrot.slane %v1576, 4
        %v1592 = vsel %vm436, %v1584, %v1591
        %v1594 = vunpack.c.l.s4 1983009808
        %v1595 = vunpack.c.0.s8 %v1594
        %v1596 = vperm.slane %v1590, %v1595
        %v1598 = vunpack.c.l.s4 1983009808
        %v1599 = vunpack.c.0.s8 %v1598
        %v1600 = vperm.slane %v1592, %v1599
        %v1601 = vrot.slane %v1587, 4
        %v1602 = vsel %vm436, %v1601, %v1581
        %v1603 = vrot.slane %v1581, 4
        %v1604 = vsel %vm436, %v1587, %v1603
        %v1606 = vunpack.c.l.s4 1983009808
        %v1607 = vunpack.c.0.s8 %v1606
        %v1608 = vperm.slane %v1602, %v1607
        %v1610 = vunpack.c.l.s4 1983009808
        %v1611 = vunpack.c.0.s8 %v1610
        %v1612 = vperm.slane %v1604, %v1611
        %v1613 = vrot.slane %v1608, 4
        %v1614 = vsel %vm436, %v1613, %v1596
        %v1615 = vrot.slane %v1596, 4
        %v1616 = vsel %vm436, %v1608, %v1615
        %v1618 = vunpack.c.l.s4 1934713408
        %v1619 = vunpack.c.0.s8 %v1618
        %v1620 = vperm.slane %v1614, %v1619
        %v1622 = vunpack.c.l.s4 1934713408
        %v1623 = vunpack.c.0.s8 %v1622
        %v1624 = vperm.slane %v1616, %v1623
        %v1625 = vrot.slane %v1612, 4
        %v1626 = vsel %vm436, %v1625, %v1600
        %v1627 = vrot.slane %v1600, 4
        %v1628 = vsel %vm436, %v1612, %v1627
        %v1630 = vunpack.c.l.s4 1934713408
        %v1631 = vunpack.c.0.s8 %v1630
        %v1632 = vperm.slane %v1626, %v1631
        %v1634 = vunpack.c.l.s4 1934713408
        %v1635 = vunpack.c.0.s8 %v1634
        %v1636 = vperm.slane %v1628, %v1635
        %v1637 = vrot.slane %v1620, 4
        %v1638 = vsel %vm436, 0.0, %v1637
        %v1639 = vrot.slane %v1624, 4
        %v1640 = vsel %vm436, 0.0, %v1639
        %v1641 = vrot.slane %v1632, 4
        %v1642 = vsel %vm436, 0.0, %v1641
        %v1643 = vrot.slane %v1636, 4
        %v1644 = vsel %vm436, 0.0, %v1643
        %v1645 = vsel %vm436, %v1639, %v1620
        %v1647 = vunpack.c.l.s4 1983009808
        %v1648 = vunpack.c.0.s8 %v1647
        %v1649 = vperm.slane %v1645, %v1648
        %v1650 = vrot.slane %v1640, 4
        %v1651 = vsel %vm436, %v1650, %v1638
        %v1653 = vunpack.c.l.s4 1983009808
        %v1654 = vunpack.c.0.s8 %v1653
        %v1655 = vperm.slane %v1651, %v1654
        %v1656 = vsel %vm436, %v1643, %v1632
        %v1658 = vunpack.c.l.s4 1983009808
        %v1659 = vunpack.c.0.s8 %v1658
        %v1660 = vperm.slane %v1656, %v1659
        %v1661 = vrot.slane %v1644, 4
        %v1662 = vsel %vm436, %v1661, %v1642
        %v1664 = vunpack.c.l.s4 1983009808
        %v1665 = vunpack.c.0.s8 %v1664
        %v1666 = vperm.slane %v1662, %v1665
        %v1667 = vrot.slane %v1655, 4
        %v1668 = vsel %vm436, %v1667, %v1649
        %v1669 = vrot.slane %v1649, 4
        %v1670 = vsel %vm436, %v1655, %v1669
        %v1672 = vunpack.c.l.s4 1934713408
        %v1673 = vunpack.c.0.s8 %v1672
        %v1674 = vperm.slane %v1668, %v1673
        %v1676 = vunpack.c.l.s4 1934713408
        %v1677 = vunpack.c.0.s8 %v1676
        %v1678 = vperm.slane %v1670, %v1677
        %v1679 = vrot.slane %v1666, 4
        %v1680 = vsel %vm436, %v1679, %v1660
        %v1681 = vrot.slane %v1660, 4
        %v1682 = vsel %vm436, %v1666, %v1681
        %v1684 = vunpack.c.l.s4 1934713408
        %v1685 = vunpack.c.0.s8 %v1684
        %v1686 = vperm.slane %v1680, %v1685
        %v1688 = vunpack.c.l.s4 1934713408
        %v1689 = vunpack.c.0.s8 %v1688
        %v1690 = vperm.slane %v1682, %v1689
        %v1691 = vrot.slane %v1686, 4
        %v1692 = vsel %vm436, %v1691, %v1674
        %v1693 = vrot.slane %v1674, 4
        %v1694 = vsel %vm436, %v1686, %v1693
        %v1695 = vrot.slane %v1690, 4
        %v1696 = vsel %vm436, %v1695, %v1678
        %v1697 = vrot.slane %v1678, 4
        %v1698 = vsel %vm436, %v1690, %v1697
        %1699 = vrot.lane.b32.xlu0 %v1576, 96
        %v1700 = vpop.permute.xlu0 %1699
        %1701 = vrot.lane.b32.xlu0 %v1581, 96
        %v1702 = vpop.permute.xlu0 %1701
        %1703 = vrot.lane.b32.xlu0 %v1584, 96
        %v1704 = vpop.permute.xlu0 %1703
        %1705 = vrot.lane.b32.xlu0 %v1587, 96
        %v1706 = vpop.permute.xlu0 %1705
        %v1711 = vrot.slane %v1704, 4
        %v1712 = vsel %vm436, %v1711, %v1700
        %v1713 = vrot.slane %v1700, 4
        %v1714 = vsel %vm436, %v1704, %v1713
        %v1716 = vunpack.c.l.s4 1983009808
        %v1717 = vunpack.c.0.s8 %v1716
        %v1718 = vperm.slane %v1712, %v1717
        %v1720 = vunpack.c.l.s4 1983009808
        %v1721 = vunpack.c.0.s8 %v1720
        %v1722 = vperm.slane %v1714, %v1721
        %v1723 = vrot.slane %v1706, 4
        %v1724 = vsel %vm436, %v1723, %v1702
        %v1725 = vrot.slane %v1702, 4
        %v1726 = vsel %vm436, %v1706, %v1725
        %v1728 = vunpack.c.l.s4 1983009808
        %v1729 = vunpack.c.0.s8 %v1728
        %v1730 = vperm.slane %v1724, %v1729
        %v1732 = vunpack.c.l.s4 1983009808
        %v1733 = vunpack.c.0.s8 %v1732
        %v1734 = vperm.slane %v1726, %v1733
        %v1735 = vrot.slane %v1730, 4
        %v1736 = vsel %vm436, %v1735, %v1718
        %v1737 = vrot.slane %v1718, 4
        %v1738 = vsel %vm436, %v1730, %v1737
        %v1740 = vunpack.c.l.s4 1934713408
        %v1741 = vunpack.c.0.s8 %v1740
        %v1742 = vperm.slane %v1736, %v1741
        %v1744 = vunpack.c.l.s4 1934713408
        %v1745 = vunpack.c.0.s8 %v1744
        %v1746 = vperm.slane %v1738, %v1745
        %v1747 = vrot.slane %v1734, 4
        %v1748 = vsel %vm436, %v1747, %v1722
        %v1749 = vrot.slane %v1722, 4
        %v1750 = vsel %vm436, %v1734, %v1749
        %v1752 = vunpack.c.l.s4 1934713408
        %v1753 = vunpack.c.0.s8 %v1752
        %v1754 = vperm.slane %v1748, %v1753
        %v1756 = vunpack.c.l.s4 1934713408
        %v1757 = vunpack.c.0.s8 %v1756
        %v1758 = vperm.slane %v1750, %v1757
        %v1759 = vrot.slane %v1742, 4
        %v1760 = vsel %vm436, 0.0, %v1759
        %v1761 = vrot.slane %v1746, 4
        %v1762 = vsel %vm436, 0.0, %v1761
        %v1763 = vrot.slane %v1754, 4
        %v1764 = vsel %vm436, 0.0, %v1763
        %v1765 = vrot.slane %v1758, 4
        %v1766 = vsel %vm436, 0.0, %v1765
        %v1767 = vsel %vm436, %v1761, %v1742
        %v1769 = vunpack.c.l.s4 1983009808
        %v1770 = vunpack.c.0.s8 %v1769
        %v1771 = vperm.slane %v1767, %v1770
        %v1772 = vrot.slane %v1762, 4
        %v1773 = vsel %vm436, %v1772, %v1760
        %v1775 = vunpack.c.l.s4 1983009808
        %v1776 = vunpack.c.0.s8 %v1775
        %v1777 = vperm.slane %v1773, %v1776
        %v1778 = vsel %vm436, %v1765, %v1754
        %v1780 = vunpack.c.l.s4 1983009808
        %v1781 = vunpack.c.0.s8 %v1780
        %v1782 = vperm.slane %v1778, %v1781
        %v1783 = vrot.slane %v1766, 4
        %v1784 = vsel %vm436, %v1783, %v1764
        %v1786 = vunpack.c.l.s4 1983009808
        %v1787 = vunpack.c.0.s8 %v1786
        %v1788 = vperm.slane %v1784, %v1787
        %v1789 = vrot.slane %v1777, 4
        %v1790 = vsel %vm436, %v1789, %v1771
        %v1791 = vrot.slane %v1771, 4
        %v1792 = vsel %vm436, %v1777, %v1791
        %v1794 = vunpack.c.l.s4 1934713408
        %v1795 = vunpack.c.0.s8 %v1794
        %v1796 = vperm.slane %v1790, %v1795
        %v1798 = vunpack.c.l.s4 1934713408
        %v1799 = vunpack.c.0.s8 %v1798
        %v1800 = vperm.slane %v1792, %v1799
        %v1801 = vrot.slane %v1788, 4
        %v1802 = vsel %vm436, %v1801, %v1782
        %v1803 = vrot.slane %v1782, 4
        %v1804 = vsel %vm436, %v1788, %v1803
        %v1806 = vunpack.c.l.s4 1934713408
        %v1807 = vunpack.c.0.s8 %v1806
        %v1808 = vperm.slane %v1802, %v1807
        %v1810 = vunpack.c.l.s4 1934713408
        %v1811 = vunpack.c.0.s8 %v1810
        %v1812 = vperm.slane %v1804, %v1811
        %v1813 = vrot.slane %v1808, 4
        %v1814 = vsel %vm436, %v1813, %v1796
        %v1815 = vrot.slane %v1796, 4
        %v1816 = vsel %vm436, %v1808, %v1815
        %v1817 = vrot.slane %v1812, 4
        %v1818 = vsel %vm436, %v1817, %v1800
        %v1819 = vrot.slane %v1800, 4
        %v1820 = vsel %vm436, %v1812, %v1819
        %v1821 = vmul.f32 %v1545, 0.35355338
        %v1822 = vmul.f32 %v1547, 0.35355338
        %v1823 = vmul.f32 %v1549, 0.35355338
        %v1824 = vmul.f32 %v1551, 0.35355338
        %v1825 = vpack.c.bf16 %v1821, %v1821
        %v1826 = vpack.c.bf16 %v1822, %v1822
        %v1827 = vpack.c.bf16 %v1823, %v1823
        %v1828 = vpack.c.bf16 %v1824, %v1824
        %v1829 = vpack.c.bf16 %v1692, %v1692
        %v1830 = vpack.c.bf16 %v1694, %v1694
        %v1831 = vpack.c.bf16 %v1696, %v1696
        %v1832 = vpack.c.bf16 %v1698, %v1698
        %v1834 = vsel %vm802, %v1825, 0
        %v1837 = vsel %vm802, %v1829, 0
        %1839 = vmatpush.bf16.xpose.msra.mxu0 0
        %1840 = vmatpush.bf16.xpose.msra.mxu0 0
        %1841 = vmatpush.bf16.xpose.msra.mxu0 0
        %1842 = vmatpush.bf16.xpose.msra.mxu0 0
        %1843 = vmatpush.bf16.xpose.msra.mxu0 0
        %1844 = vmatpush.bf16.xpose.msra.mxu0 0
        %1845 = vmatpush.bf16.xpose.msra.mxu0 0
        %1846 = vmatpush.bf16.xpose.msra.mxu0 %v1837
        %1847 = vmatmul.bf16.gmra.mxu0 %v1834
        %v1848 = vpop.f32.mrf.mxu0
        %v1849 = vadd.f32 0.0, %v1848
        %v1850 = vpop.f32.mrf.mxu0
        %1851 = vdwg.mxu0
        %v1853 = vsel %vm802, %v1826, 0
        %v1856 = vsel %vm802, %v1830, 0
        %1858 = vmatpush.bf16.xpose.msra.mxu0 0
        %1859 = vmatpush.bf16.xpose.msra.mxu0 0
        %1860 = vmatpush.bf16.xpose.msra.mxu0 0
        %1861 = vmatpush.bf16.xpose.msra.mxu0 0
        %1862 = vmatpush.bf16.xpose.msra.mxu0 0
        %1863 = vmatpush.bf16.xpose.msra.mxu0 0
        %1864 = vmatpush.bf16.xpose.msra.mxu0 0
        %1865 = vmatpush.bf16.xpose.msra.mxu0 %v1856
        %1866 = vmatmul.bf16.gmra.mxu0 %v1853
        %v1867 = vpop.f32.mrf.mxu0
        %v1868 = vadd.f32 0.0, %v1867
        %v1869 = vpop.f32.mrf.mxu0
        %1870 = vdwg.mxu0
        %v1872 = vsel %vm802, %v1827, 0
        %v1875 = vsel %vm802, %v1831, 0
        %1877 = vmatpush.bf16.xpose.msra.mxu0 0
        %1878 = vmatpush.bf16.xpose.msra.mxu0 0
        %1879 = vmatpush.bf16.xpose.msra.mxu0 0
        %1880 = vmatpush.bf16.xpose.msra.mxu0 0
        %1881 = vmatpush.bf16.xpose.msra.mxu0 0
        %1882 = vmatpush.bf16.xpose.msra.mxu0 0
        %1883 = vmatpush.bf16.xpose.msra.mxu0 0
        %1884 = vmatpush.bf16.xpose.msra.mxu0 %v1875
        %1885 = vmatmul.bf16.gmra.mxu0 %v1872
        %v1886 = vpop.f32.mrf.mxu0
        %v1887 = vadd.f32 0.0, %v1886
        %v1888 = vpop.f32.mrf.mxu0
        %1889 = vdwg.mxu0
        %v1891 = vsel %vm802, %v1828, 0
        %v1894 = vsel %vm802, %v1832, 0
        %1896 = vmatpush.bf16.xpose.msra.mxu0 0
        %1897 = vmatpush.bf16.xpose.msra.mxu0 0
        %1898 = vmatpush.bf16.xpose.msra.mxu0 0
        %1899 = vmatpush.bf16.xpose.msra.mxu0 0
        %1900 = vmatpush.bf16.xpose.msra.mxu0 0
        %1901 = vmatpush.bf16.xpose.msra.mxu0 0
        %1902 = vmatpush.bf16.xpose.msra.mxu0 0
        %1903 = vmatpush.bf16.xpose.msra.mxu0 %v1894
        %1904 = vmatmul.bf16.gmra.mxu0 %v1891
        %v1905 = vpop.f32.mrf.mxu0
        %v1906 = vadd.f32 0.0, %v1905
        %v1907 = vpop.f32.mrf.mxu0
        %1908 = vdwg.mxu0
        %v1909 = vsel %vm802, %v1849, -inf
        %1910 = vmax.xlane.f32.xlu0 %v1909
        %v1911 = vpop.xlane.xlu0 %1910
        %v1912 = vsel %vm802, %v1868, -inf
        %1913 = vmax.xlane.f32.xlu0 %v1912
        %v1914 = vpop.xlane.xlu0 %1913
        %v1915 = vsel %vm802, %v1887, -inf
        %1916 = vmax.xlane.f32.xlu0 %v1915
        %v1917 = vpop.xlane.xlu0 %1916
        %v1918 = vsel %vm802, %v1906, -inf
        %1919 = vmax.xlane.f32.xlu0 %v1918
        %v1920 = vpop.xlane.xlu0 %1919
        %v1921 = vsub.f32 %v1849, %v1911
        %v1922 = vsub.f32 %v1868, %v1914
        %v1923 = vsub.f32 %v1887, %v1917
        %v1924 = vsub.f32 %v1906, %v1920
        %v1925 = vmul.f32 %v1921, 1.442695
        %v1926 = vpow.pop %v1925
        %v1927 = vmul.f32 %v1922, 1.442695
        %v1928 = vpow.pop %v1927
        %v1929 = vmul.f32 %v1923, 1.442695
        %v1930 = vpow.pop %v1929
        %v1931 = vmul.f32 %v1924, 1.442695
        %v1932 = vpow.pop %v1931
        %v1933 = vsel %vm802, %v1926, 0.0
        %1934 = vadd.xlane.f32.xlu0 %v1933
        %v1935 = vpop.xlane.xlu0 %1934
        %v1936 = vsel %vm802, %v1928, 0.0
        %1937 = vadd.xlane.f32.xlu0 %v1936
        %v1938 = vpop.xlane.xlu0 %1937
        %v1939 = vsel %vm802, %v1930, 0.0
        %1940 = vadd.xlane.f32.xlu0 %v1939
        %v1941 = vpop.xlane.xlu0 %1940
        %v1942 = vsel %vm802, %v1932, 0.0
        %1943 = vadd.xlane.f32.xlu0 %v1942
        %v1944 = vpop.xlane.xlu0 %1943
        %v1945 = vrcp.pop %v1935
        %v1946 = vrcp.pop %v1938
        %v1947 = vrcp.pop %v1941
        %v1948 = vrcp.pop %v1944
        %v1949 = vmul.f32 %v1926, %v1945
        %v1950 = vmul.f32 %v1928, %v1946
        %v1951 = vmul.f32 %v1930, %v1947
        %v1952 = vmul.f32 %v1932, %v1948
        %v1953 = vpack.c.bf16 %v1949, %v1949
        %v1954 = vpack.c.bf16 %v1950, %v1950
        %v1955 = vpack.c.bf16 %v1951, %v1951
        %v1956 = vpack.c.bf16 %v1952, %v1952
        %v1957 = vpack.c.bf16 %v1814, %v1814
        %v1958 = vpack.c.bf16 %v1816, %v1816
        %v1959 = vpack.c.bf16 %v1818, %v1818
        %v1960 = vpack.c.bf16 %v1820, %v1820
        %v1962 = vsel %vm802, %v1953, 0
        %v1965 = vsel %vm934, %v1957, 0
        %1967 = vmatpush.bf16.msra.mxu0 0
        %1968 = vmatpush.bf16.msra.mxu0 0
        %1969 = vmatpush.bf16.msra.mxu0 0
        %1970 = vmatpush.bf16.msra.mxu0 0
        %1971 = vmatpush.bf16.msra.mxu0 0
        %1972 = vmatpush.bf16.msra.mxu0 0
        %1973 = vmatpush.bf16.msra.mxu0 0
        %1974 = vmatpush.bf16.msra.mxu0 %v1965
        %1975 = vmatmul.bf16.gmra.mxu0 %v1962
        %v1976 = vpop.f32.mrf.mxu0
        %v1977 = vadd.f32 0.0, %v1976
        %v1978 = vpop.f32.mrf.mxu0
        %1979 = vdwg.mxu0
        %v1981 = vsel %vm802, %v1954, 0
        %v1984 = vsel %vm934, %v1958, 0
        %1986 = vmatpush.bf16.msra.mxu0 0
        %1987 = vmatpush.bf16.msra.mxu0 0
        %1988 = vmatpush.bf16.msra.mxu0 0
        %1989 = vmatpush.bf16.msra.mxu0 0
        %1990 = vmatpush.bf16.msra.mxu0 0
        %1991 = vmatpush.bf16.msra.mxu0 0
        %1992 = vmatpush.bf16.msra.mxu0 0
        %1993 = vmatpush.bf16.msra.mxu0 %v1984
        %1994 = vmatmul.bf16.gmra.mxu0 %v1981
        %v1995 = vpop.f32.mrf.mxu0
        %v1996 = vadd.f32 0.0, %v1995
        %v1997 = vpop.f32.mrf.mxu0
        %1998 = vdwg.mxu0
        %v2000 = vsel %vm802, %v1955, 0
        %v2003 = vsel %vm934, %v1959, 0
        %2005 = vmatpush.bf16.msra.mxu0 0
        %2006 = vmatpush.bf16.msra.mxu0 0
        %2007 = vmatpush.bf16.msra.mxu0 0
        %2008 = vmatpush.bf16.msra.mxu0 0
        %2009 = vmatpush.bf16.msra.mxu0 0
        %2010 = vmatpush.bf16.msra.mxu0 0
        %2011 = vmatpush.bf16.msra.mxu0 0
        %2012 = vmatpush.bf16.msra.mxu0 %v2003
        %2013 = vmatmul.bf16.gmra.mxu0 %v2000
        %v2014 = vpop.f32.mrf.mxu0
        %v2015 = vadd.f32 0.0, %v2014
        %v2016 = vpop.f32.mrf.mxu0
        %2017 = vdwg.mxu0
        %v2019 = vsel %vm802, %v1956, 0
        %v2022 = vsel %vm934, %v1960, 0
        %2024 = vmatpush.bf16.msra.mxu0 0
        %2025 = vmatpush.bf16.msra.mxu0 0
        %2026 = vmatpush.bf16.msra.mxu0 0
        %2027 = vmatpush.bf16.msra.mxu0 0
        %2028 = vmatpush.bf16.msra.mxu0 0
        %2029 = vmatpush.bf16.msra.mxu0 0
        %2030 = vmatpush.bf16.msra.mxu0 0
        %2031 = vmatpush.bf16.msra.mxu0 %v2022
        %2032 = vmatmul.bf16.gmra.mxu0 %v2019
        %v2033 = vpop.f32.mrf.mxu0
        %v2034 = vadd.f32 0.0, %v2033
        %v2035 = vpop.f32.mrf.mxu0
        %2036 = vdwg.mxu0
        %v2037 = vrot.slane %v2015, 4
        %v2038 = vsel %vm436, %v2037, %v1977
        %v2039 = vrot.slane %v1977, 4
        %v2040 = vsel %vm436, %v2015, %v2039
        %v2042 = vunpack.c.l.s4 1983009808
        %v2043 = vunpack.c.0.s8 %v2042
        %v2044 = vperm.slane %v2038, %v2043
        %v2046 = vunpack.c.l.s4 1983009808
        %v2047 = vunpack.c.0.s8 %v2046
        %v2048 = vperm.slane %v2040, %v2047
        %v2049 = vrot.slane %v2034, 4
        %v2050 = vsel %vm436, %v2049, %v1996
        %v2051 = vrot.slane %v1996, 4
        %v2052 = vsel %vm436, %v2034, %v2051
        %v2054 = vunpack.c.l.s4 1983009808
        %v2055 = vunpack.c.0.s8 %v2054
        %v2056 = vperm.slane %v2050, %v2055
        %v2058 = vunpack.c.l.s4 1983009808
        %v2059 = vunpack.c.0.s8 %v2058
        %v2060 = vperm.slane %v2052, %v2059
        %v2061 = vrot.slane %v2056, 4
        %v2062 = vsel %vm436, %v2061, %v2044
        %v2063 = vrot.slane %v2044, 4
        %v2064 = vsel %vm436, %v2056, %v2063
        %v2066 = vunpack.c.l.s4 1934713408
        %v2067 = vunpack.c.0.s8 %v2066
        %v2068 = vperm.slane %v2062, %v2067
        %v2070 = vunpack.c.l.s4 1934713408
        %v2071 = vunpack.c.0.s8 %v2070
        %v2072 = vperm.slane %v2064, %v2071
        %v2073 = vrot.slane %v2060, 4
        %v2074 = vsel %vm436, %v2073, %v2048
        %v2075 = vrot.slane %v2048, 4
        %v2076 = vsel %vm436, %v2060, %v2075
        %v2078 = vunpack.c.l.s4 1934713408
        %v2079 = vunpack.c.0.s8 %v2078
        %v2080 = vperm.slane %v2074, %v2079
        %v2082 = vunpack.c.l.s4 1934713408
        %v2083 = vunpack.c.0.s8 %v2082
        %v2084 = vperm.slane %v2076, %v2083
        %v2085 = vrot.slane %v2068, 4
        %v2086 = vsel %vm436, 0.0, %v2085
        %v2087 = vrot.slane %v2072, 4
        %v2088 = vsel %vm436, 0.0, %v2087
        %v2089 = vrot.slane %v2080, 4
        %v2090 = vsel %vm436, 0.0, %v2089
        %v2091 = vrot.slane %v2084, 4
        %v2092 = vsel %vm436, 0.0, %v2091
        %v2093 = vsel %vm436, %v2087, %v2068
        %v2095 = vunpack.c.l.s4 1983009808
        %v2096 = vunpack.c.0.s8 %v2095
        %v2097 = vperm.slane %v2093, %v2096
        %v2098 = vrot.slane %v2088, 4
        %v2099 = vsel %vm436, %v2098, %v2086
        %v2101 = vunpack.c.l.s4 1983009808
        %v2102 = vunpack.c.0.s8 %v2101
        %v2103 = vperm.slane %v2099, %v2102
        %v2104 = vsel %vm436, %v2091, %v2080
        %v2106 = vunpack.c.l.s4 1983009808
        %v2107 = vunpack.c.0.s8 %v2106
        %v2108 = vperm.slane %v2104, %v2107
        %v2109 = vrot.slane %v2092, 4
        %v2110 = vsel %vm436, %v2109, %v2090
        %v2112 = vunpack.c.l.s4 1983009808
        %v2113 = vunpack.c.0.s8 %v2112
        %v2114 = vperm.slane %v2110, %v2113
        %v2115 = vrot.slane %v2103, 4
        %v2116 = vsel %vm436, %v2115, %v2097
        %v2117 = vrot.slane %v2097, 4
        %v2118 = vsel %vm436, %v2103, %v2117
        %v2120 = vunpack.c.l.s4 1934713408
        %v2121 = vunpack.c.0.s8 %v2120
        %v2122 = vperm.slane %v2116, %v2121
        %v2124 = vunpack.c.l.s4 1934713408
        %v2125 = vunpack.c.0.s8 %v2124
        %v2126 = vperm.slane %v2118, %v2125
        %v2127 = vrot.slane %v2114, 4
        %v2128 = vsel %vm436, %v2127, %v2108
        %v2129 = vrot.slane %v2108, 4
        %v2130 = vsel %vm436, %v2114, %v2129
        %v2132 = vunpack.c.l.s4 1934713408
        %v2133 = vunpack.c.0.s8 %v2132
        %v2134 = vperm.slane %v2128, %v2133
        %v2136 = vunpack.c.l.s4 1934713408
        %v2137 = vunpack.c.0.s8 %v2136
        %v2138 = vperm.slane %v2130, %v2137
        %v2139 = vrot.slane %v2134, 4
        %v2140 = vsel %vm436, %v2139, %v2122
        %v2141 = vrot.slane %v2122, 4
        %v2142 = vsel %vm436, %v2134, %v2141
        %v2143 = vrot.slane %v2138, 4
        %v2144 = vsel %vm436, %v2143, %v2126
        %v2145 = vrot.slane %v2126, 4
        %v2146 = vsel %vm436, %v2138, %v2145
        %2148 = vrot.lane.b32.xlu0 %v2142, 8
        %v2149 = vpop.permute.xlu0 %2148
        %2152 = vrot.lane.b32.xlu0 %v2144, 16
        %v2153 = vpop.permute.xlu0 %2152
        %2156 = vrot.lane.b32.xlu0 %v2146, 24
        %v2157 = vpop.permute.xlu0 %2156
        %v2159 = vsel %vm802, %v2140, %v2149
        %v2160 = vsel %vm1131, %v2159, %v2153
        %v2161 = vsel %vm1133, %v2160, %v2157
        %s2162 = scalar_lea.vmem %s4, 16
        %v2163 = vld [vmem:[%s2162] sm:$0xf]
        %v2164 = vld [vmem:[%s2162 + $0x4] sm:$0xf]
        %v2165 = vld [vmem:[%s2162 + $0x8] sm:$0xf]
        %v2166 = vld [vmem:[%s2162 + $0xc] sm:$0xf]
        %v2167 = vpack.c.bf16 %v2161, %v2161
        %v2168 = vperm.slane %v1401, 2
        %v2173 = vunpack.c.l.b16 %v2163
        %v2174 = vunpack.c.l.b16 %v2164
        %v2175 = vunpack.c.l.b16 %v2165
        %v2176 = vunpack.c.l.b16 %v2166
        %v2177 = vpack.c.b16 %v2174, %v2173
        %v2178 = vpack.c.b16 %v2176, %v2175
        %v2182 = vsel %vm356, %v2167, 0
        %2184 = vmatpush.bf16.msra.mxu0 0
        %2185 = vmatpush.bf16.msra.mxu0 0
        %2186 = vmatpush.bf16.msra.mxu0 0
        %2187 = vmatpush.bf16.msra.mxu0 0
        %2188 = vmatpush.bf16.msra.mxu0 0
        %2189 = vmatpush.bf16.msra.mxu0 0
        %2190 = vmatpush.bf16.msra.mxu0 %v2178
        %2191 = vmatpush.bf16.msra.mxu0 %v2177
        %2192 = vmatmul.bf16.gmra.mxu0 %v2182
        %v2193 = vpop.f32.mrf.mxu0
        %v2194 = vadd.f32 %v2168, %v2193
        %v2195 = vpop.f32.mrf.mxu0
        %2196 = vdwg.mxu0
        %v2197 = vadd.f32 %v1338, %v2194
        %v2198 = vld [vmem:[%s2 + $0x4] sm:$0x1]
        %v2199 = vld [vmem:[%s2 + $0xf] sm:$0x1]
        %v2200 = vsel %vm356, %v2197, 0.0
        %2201 = vadd.xlane.f32.xlu0 %v2200
        %v2202 = vpop.xlane.xlu0 %2201
        %v2203 = vmul.f32 %v2202, %v366
        %v2204 = vsub.f32 %v2197, %v2203
        %v2205 = vmul.f32 %v2204, %v2204
        %v2206 = vsel %vm356, %v2205, 0.0
        %2207 = vadd.xlane.f32.xlu0 %v2206
        %v2208 = vpop.xlane.xlu0 %2207
        %v2209 = vmul.f32 %v2208, %v366
        %v2210 = vadd.f32 %v2209, 1e-05
        %v2211 = vrsqrt.pop %v2210
        %v2212 = vmul.f32 %v2211, %v2210
        %v2213 = vmul.f32 %v2212, %v2211
        %v2214 = vmul.f32 0.5, %v2213
        %v2215 = vsub.f32 1.5, %v2214
        %v2216 = vmul.f32 %v2211, %v2215
        %vm2217 = vweird.f32 %v2210
        %vm2218 = vweird.f32 %v2211
        %vm2219 = vmor %vm2217, %vm2218
        %v2220 = vsel %vm2219, %v2211, %v2216
        %v2221 = vmul.f32 %v2204, %v2220
        %v2222 = vperm.slane %v2198, 0
        %v2223 = vmul.f32 %v2221, %v2222
        %v2224 = vperm.slane %v2199, 0
        %v2225 = vadd.f32 %v2223, %v2224
        %v2226 = vld [vmem:[%s1400] sm:$0xf]
        %s2227 = scalar_lea.vmem %s5, 16
        %v2228 = vld [vmem:[%s2227] sm:$0xf]
        %v2229 = vld [vmem:[%s2227 + $0x4] sm:$0xf]
        %v2230 = vld [vmem:[%s2227 + $0x8] sm:$0xf]
        %v2231 = vld [vmem:[%s2227 + $0xc] sm:$0xf]
        %v2232 = vpack.c.bf16 %v2225, %v2225
        %v2233 = vperm.slane %v2226, 1
        %v2238 = vunpack.c.l.b16 %v2228
        %v2239 = vunpack.c.l.b16 %v2229
        %v2240 = vunpack.c.l.b16 %v2230
        %v2241 = vunpack.c.l.b16 %v2231
        %v2242 = vpack.c.b16 %v2239, %v2238
        %v2243 = vpack.c.b16 %v2241, %v2240
        %v2247 = vsel %vm356, %v2232, 0
        %2249 = vmatpush.bf16.msra.mxu0 0
        %2250 = vmatpush.bf16.msra.mxu0 0
        %2251 = vmatpush.bf16.msra.mxu0 0
        %2252 = vmatpush.bf16.msra.mxu0 0
        %2253 = vmatpush.bf16.msra.mxu0 0
        %2254 = vmatpush.bf16.msra.mxu0 0
        %2255 = vmatpush.bf16.msra.mxu0 %v2243
        %2256 = vmatpush.bf16.msra.mxu0 %v2242
        %2257 = vmatmul.bf16.gmra.mxu0 %v2247
        %v2258 = vpop.f32.mrf.mxu0
        %v2259 = vadd.f32 %v2233, %v2258
        %v2260 = vpop.f32.mrf.mxu0
        %2261 = vdwg.mxu0
        %v2262 = vmul.f32 %v2259, 0.5
        %v2263 = vmul.f32 %v2259, 0.70710677
        %v2264 = vand.u32 2147483647, %v2263
        %v2265 = vmul.f32 %v2264, 0.3275911
        %v2266 = vadd.f32 %v2265, 1.0
        %v2267 = vrcp.pop %v2266
        %v2268 = vmul.f32 %v2267, 1.0614054
        %v2269 = vadd.f32 %v2268, -1.4531521
        %v2270 = vmul.f32 %v2269, %v2267
        %v2271 = vadd.f32 %v2270, 1.4214138
        %v2272 = vmul.f32 %v2271, %v2267
        %v2273 = vadd.f32 %v2272, -0.28449672
        %v2274 = vmul.f32 %v2273, %v2267
        %v2275 = vadd.f32 %v2274, 0.2548296
        %v2276 = vmul.f32 %v2275, %v2267
        %v2277 = vsub.f32 0.0, %v2264
        %v2278 = vmul.f32 %v2277, %v2264
        %v2279 = vmul.f32 %v2278, 1.442695
        %v2280 = vpow.pop %v2279
        %v2281 = vmul.f32 %v2276, %v2280
        %v2282 = vsub.f32 1.0, %v2281
        %vm2283 = vcmp.ge.f32.partialorder %v2263, 0.0
        %v2284 = vsub.f32 0.0, %v2282
        %v2285 = vsel %vm2283, %v2282, %v2284
        %v2286 = vadd.f32 %v2285, 1.0
        %v2287 = vmul.f32 %v2262, %v2286
        %s2288 = scalar_lea.vmem %s6, 64
        %v2289 = vld [vmem:[%s2288] sm:$0xf]
        %v2290 = vld [vmem:[%s2288 + $0x4] sm:$0xf]
        %v2291 = vld [vmem:[%s2288 + $0x8] sm:$0xf]
        %v2292 = vld [vmem:[%s2288 + $0xc] sm:$0xf]
        %v2293 = vld [vmem:[%s2288 + $0x10] sm:$0xf]
        %v2294 = vld [vmem:[%s2288 + $0x14] sm:$0xf]
        %v2295 = vld [vmem:[%s2288 + $0x18] sm:$0xf]
        %v2296 = vld [vmem:[%s2288 + $0x1c] sm:$0xf]
        %v2297 = vld [vmem:[%s2288 + $0x20] sm:$0xf]
        %v2298 = vld [vmem:[%s2288 + $0x24] sm:$0xf]
        %v2299 = vld [vmem:[%s2288 + $0x28] sm:$0xf]
        %v2300 = vld [vmem:[%s2288 + $0x2c] sm:$0xf]
        %v2301 = vld [vmem:[%s2288 + $0x30] sm:$0xf]
        %v2302 = vld [vmem:[%s2288 + $0x34] sm:$0xf]
        %v2303 = vld [vmem:[%s2288 + $0x38] sm:$0xf]
        %v2304 = vld [vmem:[%s2288 + $0x3c] sm:$0xf]
        %v2305 = vpack.c.bf16 %v2287, %v2287
        %v2306 = vperm.slane %v2226, 3
        %v2323 = vunpack.c.l.b16 %v2289
        %v2324 = vunpack.c.l.b16 %v2290
        %v2325 = vunpack.c.l.b16 %v2291
        %v2326 = vunpack.c.l.b16 %v2292
        %v2327 = vunpack.c.l.b16 %v2293
        %v2328 = vunpack.c.l.b16 %v2294
        %v2329 = vunpack.c.l.b16 %v2295
        %v2330 = vunpack.c.l.b16 %v2296
        %v2331 = vunpack.c.l.b16 %v2297
        %v2332 = vunpack.c.l.b16 %v2298
        %v2333 = vunpack.c.l.b16 %v2299
        %v2334 = vunpack.c.l.b16 %v2300
        %v2335 = vunpack.c.l.b16 %v2301
        %v2336 = vunpack.c.l.b16 %v2302
        %v2337 = vunpack.c.l.b16 %v2303
        %v2338 = vunpack.c.l.b16 %v2304
        %v2339 = vpack.c.b16 %v2324, %v2323
        %v2340 = vpack.c.b16 %v2326, %v2325
        %v2341 = vpack.c.b16 %v2328, %v2327
        %v2342 = vpack.c.b16 %v2330, %v2329
        %v2343 = vpack.c.b16 %v2332, %v2331
        %v2344 = vpack.c.b16 %v2334, %v2333
        %v2345 = vpack.c.b16 %v2336, %v2335
        %v2346 = vpack.c.b16 %v2338, %v2337
        %2355 = vmatpush.bf16.msra.mxu0 %v2346
        %2356 = vmatpush.bf16.msra.mxu0 %v2345
        %2357 = vmatpush.bf16.msra.mxu0 %v2344
        %2358 = vmatpush.bf16.msra.mxu0 %v2343
        %2359 = vmatpush.bf16.msra.mxu0 %v2342
        %2360 = vmatpush.bf16.msra.mxu0 %v2341
        %2361 = vmatpush.bf16.msra.mxu0 %v2340
        %2362 = vmatpush.bf16.msra.mxu0 %v2339
        %2363 = vmatmul.bf16.gmra.mxu0 %v2305
        %v2364 = vpop.f32.mrf.mxu0
        %v2365 = vadd.f32 %v2306, %v2364
        %v2366 = vpop.f32.mrf.mxu0
        %2367 = vdwg.mxu0
        %v2368 = vadd.f32 %v2197, %v2365
        %v2369 = vld [vmem:[%s2 + $0x5] sm:$0x1]
        %v2370 = vld [vmem:[%s2 + $0x10] sm:$0x1]
        %v2371 = vsel %vm356, %v2368, 0.0
        %2372 = vadd.xlane.f32.xlu0 %v2371
        %v2373 = vpop.xlane.xlu0 %2372
        %v2374 = vmul.f32 %v2373, %v366
        %v2375 = vsub.f32 %v2368, %v2374
        %v2376 = vmul.f32 %v2375, %v2375
        %v2377 = vsel %vm356, %v2376, 0.0
        %2378 = vadd.xlane.f32.xlu0 %v2377
        %v2379 = vpop.xlane.xlu0 %2378
        %v2380 = vmul.f32 %v2379, %v366
        %v2381 = vadd.f32 %v2380, 1e-05
        %v2382 = vrsqrt.pop %v2381
        %v2383 = vmul.f32 %v2382, %v2381
        %v2384 = vmul.f32 %v2383, %v2382
        %v2385 = vmul.f32 0.5, %v2384
        %v2386 = vsub.f32 1.5, %v2385
        %v2387 = vmul.f32 %v2382, %v2386
        %vm2388 = vweird.f32 %v2381
        %vm2389 = vweird.f32 %v2382
        %vm2390 = vmor %vm2388, %vm2389
        %v2391 = vsel %vm2390, %v2382, %v2387
        %v2392 = vmul.f32 %v2375, %v2391
        %v2393 = vperm.slane %v2369, 0
        %v2394 = vmul.f32 %v2392, %v2393
        %v2395 = vperm.slane %v2370, 0
        %v2396 = vadd.f32 %v2394, %v2395
        %s2397 = scalar_lea.vmem %s3, 32
        %v2398 = vld [vmem:[%s2397] sm:$0xf]
        %v2399 = vld [vmem:[%s2397 + $0x4] sm:$0xf]
        %v2400 = vld [vmem:[%s2397 + $0x8] sm:$0xf]
        %v2401 = vld [vmem:[%s2397 + $0xc] sm:$0xf]
        %s2402 = scalar_lea.vmem %s7, 8
        %v2403 = vld [vmem:[%s2402] sm:$0xf]
        %v2404 = vpack.c.bf16 %v2396, %v2396
        %v2405 = vperm.slane %v2403, 0
        %v2410 = vunpack.c.l.b16 %v2398
        %v2411 = vunpack.c.l.b16 %v2399
        %v2412 = vunpack.c.l.b16 %v2400
        %v2413 = vunpack.c.l.b16 %v2401
        %v2414 = vpack.c.b16 %v2411, %v2410
        %v2415 = vpack.c.b16 %v2413, %v2412
        %v2419 = vsel %vm356, %v2404, 0
        %2421 = vmatpush.bf16.msra.mxu0 0
        %2422 = vmatpush.bf16.msra.mxu0 0
        %2423 = vmatpush.bf16.msra.mxu0 0
        %2424 = vmatpush.bf16.msra.mxu0 0
        %2425 = vmatpush.bf16.msra.mxu0 0
        %2426 = vmatpush.bf16.msra.mxu0 0
        %2427 = vmatpush.bf16.msra.mxu0 %v2415
        %2428 = vmatpush.bf16.msra.mxu0 %v2414
        %2429 = vmatmul.bf16.gmra.mxu0 %v2419
        %v2430 = vpop.f32.mrf.mxu0
        %v2431 = vadd.f32 %v2405, %v2430
        %v2432 = vpop.f32.mrf.mxu0
        %2433 = vdwg.mxu0
        %2435 = vrot.lane.b32.xlu0 %v2431, 120
        %v2436 = vpop.permute.xlu0 %2435
        %2438 = vrot.lane.b32.xlu0 %v2431, 112
        %v2439 = vpop.permute.xlu0 %2438
        %2441 = vrot.lane.b32.xlu0 %v2431, 104
        %v2442 = vpop.permute.xlu0 %2441
        %v2444 = vrot.slane %v2439, 4
        %v2445 = vsel %vm436, %v2444, %v2431
        %v2446 = vrot.slane %v2431, 4
        %v2447 = vsel %vm436, %v2439, %v2446
        %v2449 = vunpack.c.l.s4 1983009808
        %v2450 = vunpack.c.0.s8 %v2449
        %v2451 = vperm.slane %v2445, %v2450
        %v2453 = vunpack.c.l.s4 1983009808
        %v2454 = vunpack.c.0.s8 %v2453
        %v2455 = vperm.slane %v2447, %v2454
        %v2456 = vrot.slane %v2442, 4
        %v2457 = vsel %vm436, %v2456, %v2436
        %v2458 = vrot.slane %v2436, 4
        %v2459 = vsel %vm436, %v2442, %v2458
        %v2461 = vunpack.c.l.s4 1983009808
        %v2462 = vunpack.c.0.s8 %v2461
        %v2463 = vperm.slane %v2457, %v2462
        %v2465 = vunpack.c.l.s4 1983009808
        %v2466 = vunpack.c.0.s8 %v2465
        %v2467 = vperm.slane %v2459, %v2466
        %v2468 = vrot.slane %v2463, 4
        %v2469 = vsel %vm436, %v2468, %v2451
        %v2470 = vrot.slane %v2451, 4
        %v2471 = vsel %vm436, %v2463, %v2470
        %v2473 = vunpack.c.l.s4 1934713408
        %v2474 = vunpack.c.0.s8 %v2473
        %v2475 = vperm.slane %v2469, %v2474
        %v2477 = vunpack.c.l.s4 1934713408
        %v2478 = vunpack.c.0.s8 %v2477
        %v2479 = vperm.slane %v2471, %v2478
        %v2480 = vrot.slane %v2467, 4
        %v2481 = vsel %vm436, %v2480, %v2455
        %v2482 = vrot.slane %v2455, 4
        %v2483 = vsel %vm436, %v2467, %v2482
        %v2485 = vunpack.c.l.s4 1934713408
        %v2486 = vunpack.c.0.s8 %v2485
        %v2487 = vperm.slane %v2481, %v2486
        %v2489 = vunpack.c.l.s4 1934713408
        %v2490 = vunpack.c.0.s8 %v2489
        %v2491 = vperm.slane %v2483, %v2490
        %v2492 = vrot.slane %v2475, 4
        %v2493 = vsel %vm436, 0.0, %v2492
        %v2494 = vrot.slane %v2479, 4
        %v2495 = vsel %vm436, 0.0, %v2494
        %v2496 = vrot.slane %v2487, 4
        %v2497 = vsel %vm436, 0.0, %v2496
        %v2498 = vrot.slane %v2491, 4
        %v2499 = vsel %vm436, 0.0, %v2498
        %v2500 = vsel %vm436, %v2494, %v2475
        %v2502 = vunpack.c.l.s4 1983009808
        %v2503 = vunpack.c.0.s8 %v2502
        %v2504 = vperm.slane %v2500, %v2503
        %v2505 = vrot.slane %v2495, 4
        %v2506 = vsel %vm436, %v2505, %v2493
        %v2508 = vunpack.c.l.s4 1983009808
        %v2509 = vunpack.c.0.s8 %v2508
        %v2510 = vperm.slane %v2506, %v2509
        %v2511 = vsel %vm436, %v2498, %v2487
        %v2513 = vunpack.c.l.s4 1983009808
        %v2514 = vunpack.c.0.s8 %v2513
        %v2515 = vperm.slane %v2511, %v2514
        %v2516 = vrot.slane %v2499, 4
        %v2517 = vsel %vm436, %v2516, %v2497
        %v2519 = vunpack.c.l.s4 1983009808
        %v2520 = vunpack.c.0.s8 %v2519
        %v2521 = vperm.slane %v2517, %v2520
        %v2522 = vrot.slane %v2510, 4
        %v2523 = vsel %vm436, %v2522, %v2504
        %v2524 = vrot.slane %v2504, 4
        %v2525 = vsel %vm436, %v2510, %v2524
        %v2527 = vunpack.c.l.s4 1934713408
        %v2528 = vunpack.c.0.s8 %v2527
        %v2529 = vperm.slane %v2523, %v2528
        %v2531 = vunpack.c.l.s4 1934713408
        %v2532 = vunpack.c.0.s8 %v2531
        %v2533 = vperm.slane %v2525, %v2532
        %v2534 = vrot.slane %v2521, 4
        %v2535 = vsel %vm436, %v2534, %v2515
        %v2536 = vrot.slane %v2515, 4
        %v2537 = vsel %vm436, %v2521, %v2536
        %v2539 = vunpack.c.l.s4 1934713408
        %v2540 = vunpack.c.0.s8 %v2539
        %v2541 = vperm.slane %v2535, %v2540
        %v2543 = vunpack.c.l.s4 1934713408
        %v2544 = vunpack.c.0.s8 %v2543
        %v2545 = vperm.slane %v2537, %v2544
        %v2546 = vrot.slane %v2541, 4
        %v2547 = vsel %vm436, %v2546, %v2529
        %v2548 = vrot.slane %v2529, 4
        %v2549 = vsel %vm436, %v2541, %v2548
        %v2550 = vrot.slane %v2545, 4
        %v2551 = vsel %vm436, %v2550, %v2533
        %v2552 = vrot.slane %v2533, 4
        %v2553 = vsel %vm436, %v2545, %v2552
        %2554 = vrot.lane.b32.xlu0 %v2431, 96
        %v2555 = vpop.permute.xlu0 %2554
        %2556 = vrot.lane.b32.xlu0 %v2436, 96
        %v2557 = vpop.permute.xlu0 %2556
        %2558 = vrot.lane.b32.xlu0 %v2439, 96
        %v2559 = vpop.permute.xlu0 %2558
        %2560 = vrot.lane.b32.xlu0 %v2442, 96
        %v2561 = vpop.permute.xlu0 %2560
        %v2566 = vrot.slane %v2559, 4
        %v2567 = vsel %vm436, %v2566, %v2555
        %v2568 = vrot.slane %v2555, 4
        %v2569 = vsel %vm436, %v2559, %v2568
        %v2571 = vunpack.c.l.s4 1983009808
        %v2572 = vunpack.c.0.s8 %v2571
        %v2573 = vperm.slane %v2567, %v2572
        %v2575 = vunpack.c.l.s4 1983009808
        %v2576 = vunpack.c.0.s8 %v2575
        %v2577 = vperm.slane %v2569, %v2576
        %v2578 = vrot.slane %v2561, 4
        %v2579 = vsel %vm436, %v2578, %v2557
        %v2580 = vrot.slane %v2557, 4
        %v2581 = vsel %vm436, %v2561, %v2580
        %v2583 = vunpack.c.l.s4 1983009808
        %v2584 = vunpack.c.0.s8 %v2583
        %v2585 = vperm.slane %v2579, %v2584
        %v2587 = vunpack.c.l.s4 1983009808
        %v2588 = vunpack.c.0.s8 %v2587
        %v2589 = vperm.slane %v2581, %v2588
        %v2590 = vrot.slane %v2585, 4
        %v2591 = vsel %vm436, %v2590, %v2573
        %v2592 = vrot.slane %v2573, 4
        %v2593 = vsel %vm436, %v2585, %v2592
        %v2595 = vunpack.c.l.s4 1934713408
        %v2596 = vunpack.c.0.s8 %v2595
        %v2597 = vperm.slane %v2591, %v2596
        %v2599 = vunpack.c.l.s4 1934713408
        %v2600 = vunpack.c.0.s8 %v2599
        %v2601 = vperm.slane %v2593, %v2600
        %v2602 = vrot.slane %v2589, 4
        %v2603 = vsel %vm436, %v2602, %v2577
        %v2604 = vrot.slane %v2577, 4
        %v2605 = vsel %vm436, %v2589, %v2604
        %v2607 = vunpack.c.l.s4 1934713408
        %v2608 = vunpack.c.0.s8 %v2607
        %v2609 = vperm.slane %v2603, %v2608
        %v2611 = vunpack.c.l.s4 1934713408
        %v2612 = vunpack.c.0.s8 %v2611
        %v2613 = vperm.slane %v2605, %v2612
        %v2614 = vrot.slane %v2597, 4
        %v2615 = vsel %vm436, 0.0, %v2614
        %v2616 = vrot.slane %v2601, 4
        %v2617 = vsel %vm436, 0.0, %v2616
        %v2618 = vrot.slane %v2609, 4
        %v2619 = vsel %vm436, 0.0, %v2618
        %v2620 = vrot.slane %v2613, 4
        %v2621 = vsel %vm436, 0.0, %v2620
        %v2622 = vsel %vm436, %v2616, %v2597
        %v2624 = vunpack.c.l.s4 1983009808
        %v2625 = vunpack.c.0.s8 %v2624
        %v2626 = vperm.slane %v2622, %v2625
        %v2627 = vrot.slane %v2617, 4
        %v2628 = vsel %vm436, %v2627, %v2615
        %v2630 = vunpack.c.l.s4 1983009808
        %v2631 = vunpack.c.0.s8 %v2630
        %v2632 = vperm.slane %v2628, %v2631
        %v2633 = vsel %vm436, %v2620, %v2609
        %v2635 = vunpack.c.l.s4 1983009808
        %v2636 = vunpack.c.0.s8 %v2635
        %v2637 = vperm.slane %v2633, %v2636
        %v2638 = vrot.slane %v2621, 4
        %v2639 = vsel %vm436, %v2638, %v2619
        %v2641 = vunpack.c.l.s4 1983009808
        %v2642 = vunpack.c.0.s8 %v2641
        %v2643 = vperm.slane %v2639, %v2642
        %v2644 = vrot.slane %v2632, 4
        %v2645 = vsel %vm436, %v2644, %v2626
        %v2646 = vrot.slane %v2626, 4
        %v2647 = vsel %vm436, %v2632, %v2646
        %v2649 = vunpack.c.l.s4 1934713408
        %v2650 = vunpack.c.0.s8 %v2649
        %v2651 = vperm.slane %v2645, %v2650
        %v2653 = vunpack.c.l.s4 1934713408
        %v2654 = vunpack.c.0.s8 %v2653
        %v2655 = vperm.slane %v2647, %v2654
        %v2656 = vrot.slane %v2643, 4
        %v2657 = vsel %vm436, %v2656, %v2637
        %v2658 = vrot.slane %v2637, 4
        %v2659 = vsel %vm436, %v2643, %v2658
        %v2661 = vunpack.c.l.s4 1934713408
        %v2662 = vunpack.c.0.s8 %v2661
        %v2663 = vperm.slane %v2657, %v2662
        %v2665 = vunpack.c.l.s4 1934713408
        %v2666 = vunpack.c.0.s8 %v2665
        %v2667 = vperm.slane %v2659, %v2666
        %v2668 = vrot.slane %v2663, 4
        %v2669 = vsel %vm436, %v2668, %v2651
        %v2670 = vrot.slane %v2651, 4
        %v2671 = vsel %vm436, %v2663, %v2670
        %v2672 = vrot.slane %v2667, 4
        %v2673 = vsel %vm436, %v2672, %v2655
        %v2674 = vrot.slane %v2655, 4
        %v2675 = vsel %vm436, %v2667, %v2674
        %2676 = vrot.lane.b32.xlu0 %v2431, 64
        %v2677 = vpop.permute.xlu0 %2676
        %2678 = vrot.lane.b32.xlu0 %v2436, 64
        %v2679 = vpop.permute.xlu0 %2678
        %2680 = vrot.lane.b32.xlu0 %v2439, 64
        %v2681 = vpop.permute.xlu0 %2680
        %2682 = vrot.lane.b32.xlu0 %v2442, 64
        %v2683 = vpop.permute.xlu0 %2682
        %v2688 = vrot.slane %v2681, 4
        %v2689 = vsel %vm436, %v2688, %v2677
        %v2690 = vrot.slane %v2677, 4
        %v2691 = vsel %vm436, %v2681, %v2690
        %v2693 = vunpack.c.l.s4 1983009808
        %v2694 = vunpack.c.0.s8 %v2693
        %v2695 = vperm.slane %v2689, %v2694
        %v2697 = vunpack.c.l.s4 1983009808
        %v2698 = vunpack.c.0.s8 %v2697
        %v2699 = vperm.slane %v2691, %v2698
        %v2700 = vrot.slane %v2683, 4
        %v2701 = vsel %vm436, %v2700, %v2679
        %v2702 = vrot.slane %v2679, 4
        %v2703 = vsel %vm436, %v2683, %v2702
        %v2705 = vunpack.c.l.s4 1983009808
        %v2706 = vunpack.c.0.s8 %v2705
        %v2707 = vperm.slane %v2701, %v2706
        %v2709 = vunpack.c.l.s4 1983009808
        %v2710 = vunpack.c.0.s8 %v2709
        %v2711 = vperm.slane %v2703, %v2710
        %v2712 = vrot.slane %v2707, 4
        %v2713 = vsel %vm436, %v2712, %v2695
        %v2714 = vrot.slane %v2695, 4
        %v2715 = vsel %vm436, %v2707, %v2714
        %v2717 = vunpack.c.l.s4 1934713408
        %v2718 = vunpack.c.0.s8 %v2717
        %v2719 = vperm.slane %v2713, %v2718
        %v2721 = vunpack.c.l.s4 1934713408
        %v2722 = vunpack.c.0.s8 %v2721
        %v2723 = vperm.slane %v2715, %v2722
        %v2724 = vrot.slane %v2711, 4
        %v2725 = vsel %vm436, %v2724, %v2699
        %v2726 = vrot.slane %v2699, 4
        %v2727 = vsel %vm436, %v2711, %v2726
        %v2729 = vunpack.c.l.s4 1934713408
        %v2730 = vunpack.c.0.s8 %v2729
        %v2731 = vperm.slane %v2725, %v2730
        %v2733 = vunpack.c.l.s4 1934713408
        %v2734 = vunpack.c.0.s8 %v2733
        %v2735 = vperm.slane %v2727, %v2734
        %v2736 = vrot.slane %v2719, 4
        %v2737 = vsel %vm436, 0.0, %v2736
        %v2738 = vrot.slane %v2723, 4
        %v2739 = vsel %vm436, 0.0, %v2738
        %v2740 = vrot.slane %v2731, 4
        %v2741 = vsel %vm436, 0.0, %v2740
        %v2742 = vrot.slane %v2735, 4
        %v2743 = vsel %vm436, 0.0, %v2742
        %v2744 = vsel %vm436, %v2738, %v2719
        %v2746 = vunpack.c.l.s4 1983009808
        %v2747 = vunpack.c.0.s8 %v2746
        %v2748 = vperm.slane %v2744, %v2747
        %v2749 = vrot.slane %v2739, 4
        %v2750 = vsel %vm436, %v2749, %v2737
        %v2752 = vunpack.c.l.s4 1983009808
        %v2753 = vunpack.c.0.s8 %v2752
        %v2754 = vperm.slane %v2750, %v2753
        %v2755 = vsel %vm436, %v2742, %v2731
        %v2757 = vunpack.c.l.s4 1983009808
        %v2758 = vunpack.c.0.s8 %v2757
        %v2759 = vperm.slane %v2755, %v2758
        %v2760 = vrot.slane %v2743, 4
        %v2761 = vsel %vm436, %v2760, %v2741
        %v2763 = vunpack.c.l.s4 1983009808
        %v2764 = vunpack.c.0.s8 %v2763
        %v2765 = vperm.slane %v2761, %v2764
        %v2766 = vrot.slane %v2754, 4
        %v2767 = vsel %vm436, %v2766, %v2748
        %v2768 = vrot.slane %v2748, 4
        %v2769 = vsel %vm436, %v2754, %v2768
        %v2771 = vunpack.c.l.s4 1934713408
        %v2772 = vunpack.c.0.s8 %v2771
        %v2773 = vperm.slane %v2767, %v2772
        %v2775 = vunpack.c.l.s4 1934713408
        %v2776 = vunpack.c.0.s8 %v2775
        %v2777 = vperm.slane %v2769, %v2776
        %v2778 = vrot.slane %v2765, 4
        %v2779 = vsel %vm436, %v2778, %v2759
        %v2780 = vrot.slane %v2759, 4
        %v2781 = vsel %vm436, %v2765, %v2780
        %v2783 = vunpack.c.l.s4 1934713408
        %v2784 = vunpack.c.0.s8 %v2783
        %v2785 = vperm.slane %v2779, %v2784
        %v2787 = vunpack.c.l.s4 1934713408
        %v2788 = vunpack.c.0.s8 %v2787
        %v2789 = vperm.slane %v2781, %v2788
        %v2790 = vrot.slane %v2785, 4
        %v2791 = vsel %vm436, %v2790, %v2773
        %v2792 = vrot.slane %v2773, 4
        %v2793 = vsel %vm436, %v2785, %v2792
        %v2794 = vrot.slane %v2789, 4
        %v2795 = vsel %vm436, %v2794, %v2777
        %v2796 = vrot.slane %v2777, 4
        %v2797 = vsel %vm436, %v2789, %v2796
        %v2798 = vmul.f32 %v2547, 0.35355338
        %v2799 = vmul.f32 %v2549, 0.35355338
        %v2800 = vmul.f32 %v2551, 0.35355338
        %v2801 = vmul.f32 %v2553, 0.35355338
        %v2802 = vpack.c.bf16 %v2798, %v2798
        %v2803 = vpack.c.bf16 %v2799, %v2799
        %v2804 = vpack.c.bf16 %v2800, %v2800
        %v2805 = vpack.c.bf16 %v2801, %v2801
        %v2806 = vpack.c.bf16 %v2669, %v2669
        %v2807 = vpack.c.bf16 %v2671, %v2671
        %v2808 = vpack.c.bf16 %v2673, %v2673
        %v2809 = vpack.c.bf16 %v2675, %v2675
        %v2811 = vsel %vm802, %v2802, 0
        %v2814 = vsel %vm802, %v2806, 0
        %2816 = vmatpush.bf16.xpose.msra.mxu0 0
        %2817 = vmatpush.bf16.xpose.msra.mxu0 0
        %2818 = vmatpush.bf16.xpose.msra.mxu0 0
        %2819 = vmatpush.bf16.xpose.msra.mxu0 0
        %2820 = vmatpush.bf16.xpose.msra.mxu0 0
        %2821 = vmatpush.bf16.xpose.msra.mxu0 0
        %2822 = vmatpush.bf16.xpose.msra.mxu0 0
        %2823 = vmatpush.bf16.xpose.msra.mxu0 %v2814
        %2824 = vmatmul.bf16.gmra.mxu0 %v2811
        %v2825 = vpop.f32.mrf.mxu0
        %v2826 = vadd.f32 %v351, %v2825
        %v2827 = vpop.f32.mrf.mxu0
        %2828 = vdwg.mxu0
        %v2830 = vsel %vm802, %v2803, 0
        %v2833 = vsel %vm802, %v2807, 0
        %2835 = vmatpush.bf16.xpose.msra.mxu0 0
        %2836 = vmatpush.bf16.xpose.msra.mxu0 0
        %2837 = vmatpush.bf16.xpose.msra.mxu0 0
        %2838 = vmatpush.bf16.xpose.msra.mxu0 0
        %2839 = vmatpush.bf16.xpose.msra.mxu0 0
        %2840 = vmatpush.bf16.xpose.msra.mxu0 0
        %2841 = vmatpush.bf16.xpose.msra.mxu0 0
        %2842 = vmatpush.bf16.xpose.msra.mxu0 %v2833
        %2843 = vmatmul.bf16.gmra.mxu0 %v2830
        %v2844 = vpop.f32.mrf.mxu0
        %v2845 = vadd.f32 %v351, %v2844
        %v2846 = vpop.f32.mrf.mxu0
        %2847 = vdwg.mxu0
        %v2849 = vsel %vm802, %v2804, 0
        %v2852 = vsel %vm802, %v2808, 0
        %2854 = vmatpush.bf16.xpose.msra.mxu0 0
        %2855 = vmatpush.bf16.xpose.msra.mxu0 0
        %2856 = vmatpush.bf16.xpose.msra.mxu0 0
        %2857 = vmatpush.bf16.xpose.msra.mxu0 0
        %2858 = vmatpush.bf16.xpose.msra.mxu0 0
        %2859 = vmatpush.bf16.xpose.msra.mxu0 0
        %2860 = vmatpush.bf16.xpose.msra.mxu0 0
        %2861 = vmatpush.bf16.xpose.msra.mxu0 %v2852
        %2862 = vmatmul.bf16.gmra.mxu0 %v2849
        %v2863 = vpop.f32.mrf.mxu0
        %v2864 = vadd.f32 %v351, %v2863
        %v2865 = vpop.f32.mrf.mxu0
        %2866 = vdwg.mxu0
        %v2868 = vsel %vm802, %v2805, 0
        %v2871 = vsel %vm802, %v2809, 0
        %2873 = vmatpush.bf16.xpose.msra.mxu0 0
        %2874 = vmatpush.bf16.xpose.msra.mxu0 0
        %2875 = vmatpush.bf16.xpose.msra.mxu0 0
        %2876 = vmatpush.bf16.xpose.msra.mxu0 0
        %2877 = vmatpush.bf16.xpose.msra.mxu0 0
        %2878 = vmatpush.bf16.xpose.msra.mxu0 0
        %2879 = vmatpush.bf16.xpose.msra.mxu0 0
        %2880 = vmatpush.bf16.xpose.msra.mxu0 %v2871
        %2881 = vmatmul.bf16.gmra.mxu0 %v2868
        %v2882 = vpop.f32.mrf.mxu0
        %v2883 = vadd.f32 %v351, %v2882
        %v2884 = vpop.f32.mrf.mxu0
        %2885 = vdwg.mxu0
        %v2886 = vsel %vm802, %v2826, -inf
        %2887 = vmax.xlane.f32.xlu0 %v2886
        %v2888 = vpop.xlane.xlu0 %2887
        %v2889 = vsel %vm802, %v2845, -inf
        %2890 = vmax.xlane.f32.xlu0 %v2889
        %v2891 = vpop.xlane.xlu0 %2890
        %v2892 = vsel %vm802, %v2864, -inf
        %2893 = vmax.xlane.f32.xlu0 %v2892
        %v2894 = vpop.xlane.xlu0 %2893
        %v2895 = vsel %vm802, %v2883, -inf
        %2896 = vmax.xlane.f32.xlu0 %v2895
        %v2897 = vpop.xlane.xlu0 %2896
        %v2898 = vsub.f32 %v2826, %v2888
        %v2899 = vsub.f32 %v2845, %v2891
        %v2900 = vsub.f32 %v2864, %v2894
        %v2901 = vsub.f32 %v2883, %v2897
        %v2902 = vmul.f32 %v2898, 1.442695
        %v2903 = vpow.pop %v2902
        %v2904 = vmul.f32 %v2899, 1.442695
        %v2905 = vpow.pop %v2904
        %v2906 = vmul.f32 %v2900, 1.442695
        %v2907 = vpow.pop %v2906
        %v2908 = vmul.f32 %v2901, 1.442695
        %v2909 = vpow.pop %v2908
        %v2910 = vsel %vm802, %v2903, 0.0
        %2911 = vadd.xlane.f32.xlu0 %v2910
        %v2912 = vpop.xlane.xlu0 %2911
        %v2913 = vsel %vm802, %v2905, 0.0
        %2914 = vadd.xlane.f32.xlu0 %v2913
        %v2915 = vpop.xlane.xlu0 %2914
        %v2916 = vsel %vm802, %v2907, 0.0
        %2917 = vadd.xlane.f32.xlu0 %v2916
        %v2918 = vpop.xlane.xlu0 %2917
        %v2919 = vsel %vm802, %v2909, 0.0
        %2920 = vadd.xlane.f32.xlu0 %v2919
        %v2921 = vpop.xlane.xlu0 %2920
        %v2922 = vrcp.pop %v2912
        %v2923 = vrcp.pop %v2915
        %v2924 = vrcp.pop %v2918
        %v2925 = vrcp.pop %v2921
        %v2926 = vmul.f32 %v2903, %v2922
        %v2927 = vmul.f32 %v2905, %v2923
        %v2928 = vmul.f32 %v2907, %v2924
        %v2929 = vmul.f32 %v2909, %v2925
        %v2930 = vpack.c.bf16 %v2926, %v2926
        %v2931 = vpack.c.bf16 %v2927, %v2927
        %v2932 = vpack.c.bf16 %v2928, %v2928
        %v2933 = vpack.c.bf16 %v2929, %v2929
        %v2934 = vpack.c.bf16 %v2791, %v2791
        %v2935 = vpack.c.bf16 %v2793, %v2793
        %v2936 = vpack.c.bf16 %v2795, %v2795
        %v2937 = vpack.c.bf16 %v2797, %v2797
        %v2939 = vsel %vm802, %v2930, 0
        %v2942 = vsel %vm934, %v2934, 0
        %2944 = vmatpush.bf16.msra.mxu0 0
        %2945 = vmatpush.bf16.msra.mxu0 0
        %2946 = vmatpush.bf16.msra.mxu0 0
        %2947 = vmatpush.bf16.msra.mxu0 0
        %2948 = vmatpush.bf16.msra.mxu0 0
        %2949 = vmatpush.bf16.msra.mxu0 0
        %2950 = vmatpush.bf16.msra.mxu0 0
        %2951 = vmatpush.bf16.msra.mxu0 %v2942
        %2952 = vmatmul.bf16.gmra.mxu0 %v2939
        %v2953 = vpop.f32.mrf.mxu0
        %v2954 = vadd.f32 0.0, %v2953
        %v2955 = vpop.f32.mrf.mxu0
        %2956 = vdwg.mxu0
        %v2958 = vsel %vm802, %v2931, 0
        %v2961 = vsel %vm934, %v2935, 0
        %2963 = vmatpush.bf16.msra.mxu0 0
        %2964 = vmatpush.bf16.msra.mxu0 0
        %2965 = vmatpush.bf16.msra.mxu0 0
        %2966 = vmatpush.bf16.msra.mxu0 0
        %2967 = vmatpush.bf16.msra.mxu0 0
        %2968 = vmatpush.bf16.msra.mxu0 0
        %2969 = vmatpush.bf16.msra.mxu0 0
        %2970 = vmatpush.bf16.msra.mxu0 %v2961
        %2971 = vmatmul.bf16.gmra.mxu0 %v2958
        %v2972 = vpop.f32.mrf.mxu0
        %v2973 = vadd.f32 0.0, %v2972
        %v2974 = vpop.f32.mrf.mxu0
        %2975 = vdwg.mxu0
        %v2977 = vsel %vm802, %v2932, 0
        %v2980 = vsel %vm934, %v2936, 0
        %2982 = vmatpush.bf16.msra.mxu0 0
        %2983 = vmatpush.bf16.msra.mxu0 0
        %2984 = vmatpush.bf16.msra.mxu0 0
        %2985 = vmatpush.bf16.msra.mxu0 0
        %2986 = vmatpush.bf16.msra.mxu0 0
        %2987 = vmatpush.bf16.msra.mxu0 0
        %2988 = vmatpush.bf16.msra.mxu0 0
        %2989 = vmatpush.bf16.msra.mxu0 %v2980
        %2990 = vmatmul.bf16.gmra.mxu0 %v2977
        %v2991 = vpop.f32.mrf.mxu0
        %v2992 = vadd.f32 0.0, %v2991
        %v2993 = vpop.f32.mrf.mxu0
        %2994 = vdwg.mxu0
        %v2996 = vsel %vm802, %v2933, 0
        %v2999 = vsel %vm934, %v2937, 0
        %3001 = vmatpush.bf16.msra.mxu0 0
        %3002 = vmatpush.bf16.msra.mxu0 0
        %3003 = vmatpush.bf16.msra.mxu0 0
        %3004 = vmatpush.bf16.msra.mxu0 0
        %3005 = vmatpush.bf16.msra.mxu0 0
        %3006 = vmatpush.bf16.msra.mxu0 0
        %3007 = vmatpush.bf16.msra.mxu0 0
        %3008 = vmatpush.bf16.msra.mxu0 %v2999
        %3009 = vmatmul.bf16.gmra.mxu0 %v2996
        %v3010 = vpop.f32.mrf.mxu0
        %v3011 = vadd.f32 0.0, %v3010
        %v3012 = vpop.f32.mrf.mxu0
        %3013 = vdwg.mxu0
        %v3014 = vrot.slane %v2992, 4
        %v3015 = vsel %vm436, %v3014, %v2954
        %v3016 = vrot.slane %v2954, 4
        %v3017 = vsel %vm436, %v2992, %v3016
        %v3019 = vunpack.c.l.s4 1983009808
        %v3020 = vunpack.c.0.s8 %v3019
        %v3021 = vperm.slane %v3015, %v3020
        %v3023 = vunpack.c.l.s4 1983009808
        %v3024 = vunpack.c.0.s8 %v3023
        %v3025 = vperm.slane %v3017, %v3024
        %v3026 = vrot.slane %v3011, 4
        %v3027 = vsel %vm436, %v3026, %v2973
        %v3028 = vrot.slane %v2973, 4
        %v3029 = vsel %vm436, %v3011, %v3028
        %v3031 = vunpack.c.l.s4 1983009808
        %v3032 = vunpack.c.0.s8 %v3031
        %v3033 = vperm.slane %v3027, %v3032
        %v3035 = vunpack.c.l.s4 1983009808
        %v3036 = vunpack.c.0.s8 %v3035
        %v3037 = vperm.slane %v3029, %v3036
        %v3038 = vrot.slane %v3033, 4
        %v3039 = vsel %vm436, %v3038, %v3021
        %v3040 = vrot.slane %v3021, 4
        %v3041 = vsel %vm436, %v3033, %v3040
        %v3043 = vunpack.c.l.s4 1934713408
        %v3044 = vunpack.c.0.s8 %v3043
        %v3045 = vperm.slane %v3039, %v3044
        %v3047 = vunpack.c.l.s4 1934713408
        %v3048 = vunpack.c.0.s8 %v3047
        %v3049 = vperm.slane %v3041, %v3048
        %v3050 = vrot.slane %v3037, 4
        %v3051 = vsel %vm436, %v3050, %v3025
        %v3052 = vrot.slane %v3025, 4
        %v3053 = vsel %vm436, %v3037, %v3052
        %v3055 = vunpack.c.l.s4 1934713408
        %v3056 = vunpack.c.0.s8 %v3055
        %v3057 = vperm.slane %v3051, %v3056
        %v3059 = vunpack.c.l.s4 1934713408
        %v3060 = vunpack.c.0.s8 %v3059
        %v3061 = vperm.slane %v3053, %v3060
        %v3062 = vrot.slane %v3045, 4
        %v3063 = vsel %vm436, 0.0, %v3062
        %v3064 = vrot.slane %v3049, 4
        %v3065 = vsel %vm436, 0.0, %v3064
        %v3066 = vrot.slane %v3057, 4
        %v3067 = vsel %vm436, 0.0, %v3066
        %v3068 = vrot.slane %v3061, 4
        %v3069 = vsel %vm436, 0.0, %v3068
        %v3070 = vsel %vm436, %v3064, %v3045
        %v3072 = vunpack.c.l.s4 1983009808
        %v3073 = vunpack.c.0.s8 %v3072
        %v3074 = vperm.slane %v3070, %v3073
        %v3075 = vrot.slane %v3065, 4
        %v3076 = vsel %vm436, %v3075, %v3063
        %v3078 = vunpack.c.l.s4 1983009808
        %v3079 = vunpack.c.0.s8 %v3078
        %v3080 = vperm.slane %v3076, %v3079
        %v3081 = vsel %vm436, %v3068, %v3057
        %v3083 = vunpack.c.l.s4 1983009808
        %v3084 = vunpack.c.0.s8 %v3083
        %v3085 = vperm.slane %v3081, %v3084
        %v3086 = vrot.slane %v3069, 4
        %v3087 = vsel %vm436, %v3086, %v3067
        %v3089 = vunpack.c.l.s4 1983009808
        %v3090 = vunpack.c.0.s8 %v3089
        %v3091 = vperm.slane %v3087, %v3090
        %v3092 = vrot.slane %v3080, 4
        %v3093 = vsel %vm436, %v3092, %v3074
        %v3094 = vrot.slane %v3074, 4
        %v3095 = vsel %vm436, %v3080, %v3094
        %v3097 = vunpack.c.l.s4 1934713408
        %v3098 = vunpack.c.0.s8 %v3097
        %v3099 = vperm.slane %v3093, %v3098
        %v3101 = vunpack.c.l.s4 1934713408
        %v3102 = vunpack.c.0.s8 %v3101
        %v3103 = vperm.slane %v3095, %v3102
        %v3104 = vrot.slane %v3091, 4
        %v3105 = vsel %vm436, %v3104, %v3085
        %v3106 = vrot.slane %v3085, 4
        %v3107 = vsel %vm436, %v3091, %v3106
        %v3109 = vunpack.c.l.s4 1934713408
        %v3110 = vunpack.c.0.s8 %v3109
        %v3111 = vperm.slane %v3105, %v3110
        %v3113 = vunpack.c.l.s4 1934713408
        %v3114 = vunpack.c.0.s8 %v3113
        %v3115 = vperm.slane %v3107, %v3114
        %v3116 = vrot.slane %v3111, 4
        %v3117 = vsel %vm436, %v3116, %v3099
        %v3118 = vrot.slane %v3099, 4
        %v3119 = vsel %vm436, %v3111, %v3118
        %v3120 = vrot.slane %v3115, 4
        %v3121 = vsel %vm436, %v3120, %v3103
        %v3122 = vrot.slane %v3103, 4
        %v3123 = vsel %vm436, %v3115, %v3122
        %3125 = vrot.lane.b32.xlu0 %v3119, 8
        %v3126 = vpop.permute.xlu0 %3125
        %3129 = vrot.lane.b32.xlu0 %v3121, 16
        %v3130 = vpop.permute.xlu0 %3129
        %3133 = vrot.lane.b32.xlu0 %v3123, 24
        %v3134 = vpop.permute.xlu0 %3133
        %v3136 = vsel %vm802, %v3117, %v3126
        %v3137 = vsel %vm1131, %v3136, %v3130
        %v3138 = vsel %vm1133, %v3137, %v3134
        %s3139 = scalar_lea.vmem %s4, 32
        %v3140 = vld [vmem:[%s3139] sm:$0xf]
        %v3141 = vld [vmem:[%s3139 + $0x4] sm:$0xf]
        %v3142 = vld [vmem:[%s3139 + $0x8] sm:$0xf]
        %v3143 = vld [vmem:[%s3139 + $0xc] sm:$0xf]
        %v3144 = vpack.c.bf16 %v3138, %v3138
        %v3145 = vperm.slane %v2403, 2
        %v3150 = vunpack.c.l.b16 %v3140
        %v3151 = vunpack.c.l.b16 %v3141
        %v3152 = vunpack.c.l.b16 %v3142
        %v3153 = vunpack.c.l.b16 %v3143
        %v3154 = vpack.c.b16 %v3151, %v3150
        %v3155 = vpack.c.b16 %v3153, %v3152
        %v3159 = vsel %vm356, %v3144, 0
        %3161 = vmatpush.bf16.msra.mxu0 0
        %3162 = vmatpush.bf16.msra.mxu0 0
        %3163 = vmatpush.bf16.msra.mxu0 0
        %3164 = vmatpush.bf16.msra.mxu0 0
        %3165 = vmatpush.bf16.msra.mxu0 0
        %3166 = vmatpush.bf16.msra.mxu0 0
        %3167 = vmatpush.bf16.msra.mxu0 %v3155
        %3168 = vmatpush.bf16.msra.mxu0 %v3154
        %3169 = vmatmul.bf16.gmra.mxu0 %v3159
        %v3170 = vpop.f32.mrf.mxu0
        %v3171 = vadd.f32 %v3145, %v3170
        %v3172 = vpop.f32.mrf.mxu0
        %3173 = vdwg.mxu0
        %v3174 = vadd.f32 %v2368, %v3171
        %v3175 = vld [vmem:[%s2 + $0x6] sm:$0x1]
        %v3176 = vld [vmem:[%s2 + $0x11] sm:$0x1]
        %v3177 = vsel %vm356, %v3174, 0.0
        %3178 = vadd.xlane.f32.xlu0 %v3177
        %v3179 = vpop.xlane.xlu0 %3178
        %v3180 = vmul.f32 %v3179, %v366
        %v3181 = vsub.f32 %v3174, %v3180
        %v3182 = vmul.f32 %v3181, %v3181
        %v3183 = vsel %vm356, %v3182, 0.0
        %3184 = vadd.xlane.f32.xlu0 %v3183
        %v3185 = vpop.xlane.xlu0 %3184
        %v3186 = vmul.f32 %v3185, %v366
        %v3187 = vadd.f32 %v3186, 1e-05
        %v3188 = vrsqrt.pop %v3187
        %v3189 = vmul.f32 %v3188, %v3187
        %v3190 = vmul.f32 %v3189, %v3188
        %v3191 = vmul.f32 0.5, %v3190
        %v3192 = vsub.f32 1.5, %v3191
        %v3193 = vmul.f32 %v3188, %v3192
        %vm3194 = vweird.f32 %v3187
        %vm3195 = vweird.f32 %v3188
        %vm3196 = vmor %vm3194, %vm3195
        %v3197 = vsel %vm3196, %v3188, %v3193
        %v3198 = vmul.f32 %v3181, %v3197
        %v3199 = vperm.slane %v3175, 0
        %v3200 = vmul.f32 %v3198, %v3199
        %v3201 = vperm.slane %v3176, 0
        %v3202 = vadd.f32 %v3200, %v3201
        %v3203 = vld [vmem:[%s2402] sm:$0xf]
        %s3204 = scalar_lea.vmem %s5, 32
        %v3205 = vld [vmem:[%s3204] sm:$0xf]
        %v3206 = vld [vmem:[%s3204 + $0x4] sm:$0xf]
        %v3207 = vld [vmem:[%s3204 + $0x8] sm:$0xf]
        %v3208 = vld [vmem:[%s3204 + $0xc] sm:$0xf]
        %v3209 = vpack.c.bf16 %v3202, %v3202
        %v3210 = vperm.slane %v3203, 1
        %v3215 = vunpack.c.l.b16 %v3205
        %v3216 = vunpack.c.l.b16 %v3206
        %v3217 = vunpack.c.l.b16 %v3207
        %v3218 = vunpack.c.l.b16 %v3208
        %v3219 = vpack.c.b16 %v3216, %v3215
        %v3220 = vpack.c.b16 %v3218, %v3217
        %v3224 = vsel %vm356, %v3209, 0
        %3226 = vmatpush.bf16.msra.mxu0 0
        %3227 = vmatpush.bf16.msra.mxu0 0
        %3228 = vmatpush.bf16.msra.mxu0 0
        %3229 = vmatpush.bf16.msra.mxu0 0
        %3230 = vmatpush.bf16.msra.mxu0 0
        %3231 = vmatpush.bf16.msra.mxu0 0
        %3232 = vmatpush.bf16.msra.mxu0 %v3220
        %3233 = vmatpush.bf16.msra.mxu0 %v3219
        %3234 = vmatmul.bf16.gmra.mxu0 %v3224
        %v3235 = vpop.f32.mrf.mxu0
        %v3236 = vadd.f32 %v3210, %v3235
        %v3237 = vpop.f32.mrf.mxu0
        %3238 = vdwg.mxu0
        %v3239 = vmul.f32 %v3236, 0.5
        %v3240 = vmul.f32 %v3236, 0.70710677
        %v3241 = vand.u32 2147483647, %v3240
        %v3242 = vmul.f32 %v3241, 0.3275911
        %v3243 = vadd.f32 %v3242, 1.0
        %v3244 = vrcp.pop %v3243
        %v3245 = vmul.f32 %v3244, 1.0614054
        %v3246 = vadd.f32 %v3245, -1.4531521
        %v3247 = vmul.f32 %v3246, %v3244
        %v3248 = vadd.f32 %v3247, 1.4214138
        %v3249 = vmul.f32 %v3248, %v3244
        %v3250 = vadd.f32 %v3249, -0.28449672
        %v3251 = vmul.f32 %v3250, %v3244
        %v3252 = vadd.f32 %v3251, 0.2548296
        %v3253 = vmul.f32 %v3252, %v3244
        %v3254 = vsub.f32 0.0, %v3241
        %v3255 = vmul.f32 %v3254, %v3241
        %v3256 = vmul.f32 %v3255, 1.442695
        %v3257 = vpow.pop %v3256
        %v3258 = vmul.f32 %v3253, %v3257
        %v3259 = vsub.f32 1.0, %v3258
        %vm3260 = vcmp.ge.f32.partialorder %v3240, 0.0
        %v3261 = vsub.f32 0.0, %v3259
        %v3262 = vsel %vm3260, %v3259, %v3261
        %v3263 = vadd.f32 %v3262, 1.0
        %v3264 = vmul.f32 %v3239, %v3263
        %s3265 = scalar_lea.vmem %s6, 128
        %v3266 = vld [vmem:[%s3265] sm:$0xf]
        %v3267 = vld [vmem:[%s3265 + $0x4] sm:$0xf]
        %v3268 = vld [vmem:[%s3265 + $0x8] sm:$0xf]
        %v3269 = vld [vmem:[%s3265 + $0xc] sm:$0xf]
        %v3270 = vld [vmem:[%s3265 + $0x10] sm:$0xf]
        %v3271 = vld [vmem:[%s3265 + $0x14] sm:$0xf]
        %v3272 = vld [vmem:[%s3265 + $0x18] sm:$0xf]
        %v3273 = vld [vmem:[%s3265 + $0x1c] sm:$0xf]
        %v3274 = vld [vmem:[%s3265 + $0x20] sm:$0xf]
        %v3275 = vld [vmem:[%s3265 + $0x24] sm:$0xf]
        %v3276 = vld [vmem:[%s3265 + $0x28] sm:$0xf]
        %v3277 = vld [vmem:[%s3265 + $0x2c] sm:$0xf]
        %v3278 = vld [vmem:[%s3265 + $0x30] sm:$0xf]
        %v3279 = vld [vmem:[%s3265 + $0x34] sm:$0xf]
        %v3280 = vld [vmem:[%s3265 + $0x38] sm:$0xf]
        %v3281 = vld [vmem:[%s3265 + $0x3c] sm:$0xf]
        %v3282 = vpack.c.bf16 %v3264, %v3264
        %v3283 = vperm.slane %v3203, 3
        %v3300 = vunpack.c.l.b16 %v3266
        %v3301 = vunpack.c.l.b16 %v3267
        %v3302 = vunpack.c.l.b16 %v3268
        %v3303 = vunpack.c.l.b16 %v3269
        %v3304 = vunpack.c.l.b16 %v3270
        %v3305 = vunpack.c.l.b16 %v3271
        %v3306 = vunpack.c.l.b16 %v3272
        %v3307 = vunpack.c.l.b16 %v3273
        %v3308 = vunpack.c.l.b16 %v3274
        %v3309 = vunpack.c.l.b16 %v3275
        %v3310 = vunpack.c.l.b16 %v3276
        %v3311 = vunpack.c.l.b16 %v3277
        %v3312 = vunpack.c.l.b16 %v3278
        %v3313 = vunpack.c.l.b16 %v3279
        %v3314 = vunpack.c.l.b16 %v3280
        %v3315 = vunpack.c.l.b16 %v3281
        %v3316 = vpack.c.b16 %v3301, %v3300
        %v3317 = vpack.c.b16 %v3303, %v3302
        %v3318 = vpack.c.b16 %v3305, %v3304
        %v3319 = vpack.c.b16 %v3307, %v3306
        %v3320 = vpack.c.b16 %v3309, %v3308
        %v3321 = vpack.c.b16 %v3311, %v3310
        %v3322 = vpack.c.b16 %v3313, %v3312
        %v3323 = vpack.c.b16 %v3315, %v3314
        %3332 = vmatpush.bf16.msra.mxu0 %v3323
        %3333 = vmatpush.bf16.msra.mxu0 %v3322
        %3334 = vmatpush.bf16.msra.mxu0 %v3321
        %3335 = vmatpush.bf16.msra.mxu0 %v3320
        %3336 = vmatpush.bf16.msra.mxu0 %v3319
        %3337 = vmatpush.bf16.msra.mxu0 %v3318
        %3338 = vmatpush.bf16.msra.mxu0 %v3317
        %3339 = vmatpush.bf16.msra.mxu0 %v3316
        %3340 = vmatmul.bf16.gmra.mxu0 %v3282
        %v3341 = vpop.f32.mrf.mxu0
        %v3342 = vadd.f32 %v3283, %v3341
        %v3343 = vpop.f32.mrf.mxu0
        %3344 = vdwg.mxu0
        %v3345 = vadd.f32 %v3174, %v3342
        %v3346 = vld [vmem:[%s2 + $0x7] sm:$0x1]
        %v3347 = vld [vmem:[%s2 + $0x12] sm:$0x1]
        %v3348 = vsel %vm356, %v3345, 0.0
        %3349 = vadd.xlane.f32.xlu0 %v3348
        %v3350 = vpop.xlane.xlu0 %3349
        %v3351 = vmul.f32 %v3350, %v366
        %v3352 = vsub.f32 %v3345, %v3351
        %v3353 = vmul.f32 %v3352, %v3352
        %v3354 = vsel %vm356, %v3353, 0.0
        %3355 = vadd.xlane.f32.xlu0 %v3354
        %v3356 = vpop.xlane.xlu0 %3355
        %v3357 = vmul.f32 %v3356, %v366
        %v3358 = vadd.f32 %v3357, 1e-05
        %v3359 = vrsqrt.pop %v3358
        %v3360 = vmul.f32 %v3359, %v3358
        %v3361 = vmul.f32 %v3360, %v3359
        %v3362 = vmul.f32 0.5, %v3361
        %v3363 = vsub.f32 1.5, %v3362
        %v3364 = vmul.f32 %v3359, %v3363
        %vm3365 = vweird.f32 %v3358
        %vm3366 = vweird.f32 %v3359
        %vm3367 = vmor %vm3365, %vm3366
        %v3368 = vsel %vm3367, %v3359, %v3364
        %v3369 = vmul.f32 %v3352, %v3368
        %v3370 = vperm.slane %v3346, 0
        %v3371 = vmul.f32 %v3369, %v3370
        %v3372 = vperm.slane %v3347, 0
        %v3373 = vadd.f32 %v3371, %v3372
        %v3374 = vld [vmem:[%s2 + $0x8] sm:$0x1]
        %v3375 = vld [vmem:[%s2 + $0x13] sm:$0x1]
        %v3376 = vperm.slane %v3374, 0
        %v3377 = vmul.f32 %v1390, %v3376
        %v3378 = vperm.slane %v3375, 0
        %v3379 = vadd.f32 %v3377, %v3378
        %s3380 = scalar_lea.vmem %s3, 48
        %v3381 = vld [vmem:[%s3380] sm:$0xf]
        %v3382 = vld [vmem:[%s3380 + $0x4] sm:$0xf]
        %v3383 = vld [vmem:[%s3380 + $0x8] sm:$0xf]
        %v3384 = vld [vmem:[%s3380 + $0xc] sm:$0xf]
        %s3385 = scalar_lea.vmem %s7, 12
        %v3386 = vld [vmem:[%s3385] sm:$0xf]
        %v3387 = vpack.c.bf16 %v3373, %v3373
        %v3388 = vperm.slane %v3386, 0
        %v3393 = vunpack.c.l.b16 %v3381
        %v3394 = vunpack.c.l.b16 %v3382
        %v3395 = vunpack.c.l.b16 %v3383
        %v3396 = vunpack.c.l.b16 %v3384
        %v3397 = vpack.c.b16 %v3394, %v3393
        %v3398 = vpack.c.b16 %v3396, %v3395
        %v3402 = vsel %vm356, %v3387, 0
        %3404 = vmatpush.bf16.msra.mxu0 0
        %3405 = vmatpush.bf16.msra.mxu0 0
        %3406 = vmatpush.bf16.msra.mxu0 0
        %3407 = vmatpush.bf16.msra.mxu0 0
        %3408 = vmatpush.bf16.msra.mxu0 0
        %3409 = vmatpush.bf16.msra.mxu0 0
        %3410 = vmatpush.bf16.msra.mxu0 %v3398
        %3411 = vmatpush.bf16.msra.mxu0 %v3397
        %3412 = vmatmul.bf16.gmra.mxu0 %v3402
        %v3413 = vpop.f32.mrf.mxu0
        %v3414 = vadd.f32 %v3388, %v3413
        %v3415 = vpop.f32.mrf.mxu0
        %3416 = vdwg.mxu0
        %3418 = vrot.lane.b32.xlu0 %v3414, 120
        %v3419 = vpop.permute.xlu0 %3418
        %3421 = vrot.lane.b32.xlu0 %v3414, 112
        %v3422 = vpop.permute.xlu0 %3421
        %3424 = vrot.lane.b32.xlu0 %v3414, 104
        %v3425 = vpop.permute.xlu0 %3424
        %v3427 = vrot.slane %v3422, 4
        %v3428 = vsel %vm436, %v3427, %v3414
        %v3429 = vrot.slane %v3414, 4
        %v3430 = vsel %vm436, %v3422, %v3429
        %v3432 = vunpack.c.l.s4 1983009808
        %v3433 = vunpack.c.0.s8 %v3432
        %v3434 = vperm.slane %v3428, %v3433
        %v3436 = vunpack.c.l.s4 1983009808
        %v3437 = vunpack.c.0.s8 %v3436
        %v3438 = vperm.slane %v3430, %v3437
        %v3439 = vrot.slane %v3425, 4
        %v3440 = vsel %vm436, %v3439, %v3419
        %v3441 = vrot.slane %v3419, 4
        %v3442 = vsel %vm436, %v3425, %v3441
        %v3444 = vunpack.c.l.s4 1983009808
        %v3445 = vunpack.c.0.s8 %v3444
        %v3446 = vperm.slane %v3440, %v3445
        %v3448 = vunpack.c.l.s4 1983009808
        %v3449 = vunpack.c.0.s8 %v3448
        %v3450 = vperm.slane %v3442, %v3449
        %v3451 = vrot.slane %v3446, 4
        %v3452 = vsel %vm436, %v3451, %v3434
        %v3453 = vrot.slane %v3434, 4
        %v3454 = vsel %vm436, %v3446, %v3453
        %v3456 = vunpack.c.l.s4 1934713408
        %v3457 = vunpack.c.0.s8 %v3456
        %v3458 = vperm.slane %v3452, %v3457
        %v3460 = vunpack.c.l.s4 1934713408
        %v3461 = vunpack.c.0.s8 %v3460
        %v3462 = vperm.slane %v3454, %v3461
        %v3463 = vrot.slane %v3450, 4
        %v3464 = vsel %vm436, %v3463, %v3438
        %v3465 = vrot.slane %v3438, 4
        %v3466 = vsel %vm436, %v3450, %v3465
        %v3468 = vunpack.c.l.s4 1934713408
        %v3469 = vunpack.c.0.s8 %v3468
        %v3470 = vperm.slane %v3464, %v3469
        %v3472 = vunpack.c.l.s4 1934713408
        %v3473 = vunpack.c.0.s8 %v3472
        %v3474 = vperm.slane %v3466, %v3473
        %v3475 = vrot.slane %v3458, 4
        %v3476 = vsel %vm436, 0.0, %v3475
        %v3477 = vrot.slane %v3462, 4
        %v3478 = vsel %vm436, 0.0, %v3477
        %v3479 = vrot.slane %v3470, 4
        %v3480 = vsel %vm436, 0.0, %v3479
        %v3481 = vrot.slane %v3474, 4
        %v3482 = vsel %vm436, 0.0, %v3481
        %v3483 = vsel %vm436, %v3477, %v3458
        %v3485 = vunpack.c.l.s4 1983009808
        %v3486 = vunpack.c.0.s8 %v3485
        %v3487 = vperm.slane %v3483, %v3486
        %v3488 = vrot.slane %v3478, 4
        %v3489 = vsel %vm436, %v3488, %v3476
        %v3491 = vunpack.c.l.s4 1983009808
        %v3492 = vunpack.c.0.s8 %v3491
        %v3493 = vperm.slane %v3489, %v3492
        %v3494 = vsel %vm436, %v3481, %v3470
        %v3496 = vunpack.c.l.s4 1983009808
        %v3497 = vunpack.c.0.s8 %v3496
        %v3498 = vperm.slane %v3494, %v3497
        %v3499 = vrot.slane %v3482, 4
        %v3500 = vsel %vm436, %v3499, %v3480
        %v3502 = vunpack.c.l.s4 1983009808
        %v3503 = vunpack.c.0.s8 %v3502
        %v3504 = vperm.slane %v3500, %v3503
        %v3505 = vrot.slane %v3493, 4
        %v3506 = vsel %vm436, %v3505, %v3487
        %v3507 = vrot.slane %v3487, 4
        %v3508 = vsel %vm436, %v3493, %v3507
        %v3510 = vunpack.c.l.s4 1934713408
        %v3511 = vunpack.c.0.s8 %v3510
        %v3512 = vperm.slane %v3506, %v3511
        %v3514 = vunpack.c.l.s4 1934713408
        %v3515 = vunpack.c.0.s8 %v3514
        %v3516 = vperm.slane %v3508, %v3515
        %v3517 = vrot.slane %v3504, 4
        %v3518 = vsel %vm436, %v3517, %v3498
        %v3519 = vrot.slane %v3498, 4
        %v3520 = vsel %vm436, %v3504, %v3519
        %v3522 = vunpack.c.l.s4 1934713408
        %v3523 = vunpack.c.0.s8 %v3522
        %v3524 = vperm.slane %v3518, %v3523
        %v3526 = vunpack.c.l.s4 1934713408
        %v3527 = vunpack.c.0.s8 %v3526
        %v3528 = vperm.slane %v3520, %v3527
        %v3529 = vrot.slane %v3524, 4
        %v3530 = vsel %vm436, %v3529, %v3512
        %v3531 = vrot.slane %v3512, 4
        %v3532 = vsel %vm436, %v3524, %v3531
        %v3533 = vrot.slane %v3528, 4
        %v3534 = vsel %vm436, %v3533, %v3516
        %v3535 = vrot.slane %v3516, 4
        %v3536 = vsel %vm436, %v3528, %v3535
        %v3537 = vpack.c.bf16 %v3379, %v3379
        %3538 = vrot.lane.b32.xlu0 %v3397, 96
        %v3539 = vpop.permute.xlu0 %3538
        %3540 = vrot.lane.b32.xlu0 %v3398, 96
        %v3541 = vpop.permute.xlu0 %3540
        %3545 = vrot.lane.b32.xlu0 %v3388, 96
        %v3546 = vpop.permute.xlu0 %3545
        %v3549 = vsel %vm356, %v3537, 0
        %3551 = vmatpush.bf16.msra.mxu0 0
        %3552 = vmatpush.bf16.msra.mxu0 0
        %3553 = vmatpush.bf16.msra.mxu0 0
        %3554 = vmatpush.bf16.msra.mxu0 0
        %3555 = vmatpush.bf16.msra.mxu0 0
        %3556 = vmatpush.bf16.msra.mxu0 0
        %3557 = vmatpush.bf16.msra.mxu0 %v3541
        %3558 = vmatpush.bf16.msra.mxu0 %v3539
        %3559 = vmatmul.bf16.gmra.mxu0 %v3549
        %v3560 = vpop.f32.mrf.mxu0
        %v3561 = vadd.f32 %v3546, %v3560
        %v3562 = vpop.f32.mrf.mxu0
        %3563 = vdwg.mxu0
        %3565 = vrot.lane.b32.xlu0 %v3561, 120
        %v3566 = vpop.permute.xlu0 %3565
        %3568 = vrot.lane.b32.xlu0 %v3561, 112
        %v3569 = vpop.permute.xlu0 %3568
        %3571 = vrot.lane.b32.xlu0 %v3561, 104
        %v3572 = vpop.permute.xlu0 %3571
        %v3574 = vrot.slane %v3569, 4
        %v3575 = vsel %vm436, %v3574, %v3561
        %v3576 = vrot.slane %v3561, 4
        %v3577 = vsel %vm436, %v3569, %v3576
        %v3579 = vunpack.c.l.s4 1983009808
        %v3580 = vunpack.c.0.s8 %v3579
        %v3581 = vperm.slane %v3575, %v3580
        %v3583 = vunpack.c.l.s4 1983009808
        %v3584 = vunpack.c.0.s8 %v3583
        %v3585 = vperm.slane %v3577, %v3584
        %v3586 = vrot.slane %v3572, 4
        %v3587 = vsel %vm436, %v3586, %v3566
        %v3588 = vrot.slane %v3566, 4
        %v3589 = vsel %vm436, %v3572, %v3588
        %v3591 = vunpack.c.l.s4 1983009808
        %v3592 = vunpack.c.0.s8 %v3591
        %v3593 = vperm.slane %v3587, %v3592
        %v3595 = vunpack.c.l.s4 1983009808
        %v3596 = vunpack.c.0.s8 %v3595
        %v3597 = vperm.slane %v3589, %v3596
        %v3598 = vrot.slane %v3593, 4
        %v3599 = vsel %vm436, %v3598, %v3581
        %v3600 = vrot.slane %v3581, 4
        %v3601 = vsel %vm436, %v3593, %v3600
        %v3603 = vunpack.c.l.s4 1934713408
        %v3604 = vunpack.c.0.s8 %v3603
        %v3605 = vperm.slane %v3599, %v3604
        %v3607 = vunpack.c.l.s4 1934713408
        %v3608 = vunpack.c.0.s8 %v3607
        %v3609 = vperm.slane %v3601, %v3608
        %v3610 = vrot.slane %v3597, 4
        %v3611 = vsel %vm436, %v3610, %v3585
        %v3612 = vrot.slane %v3585, 4
        %v3613 = vsel %vm436, %v3597, %v3612
        %v3615 = vunpack.c.l.s4 1934713408
        %v3616 = vunpack.c.0.s8 %v3615
        %v3617 = vperm.slane %v3611, %v3616
        %v3619 = vunpack.c.l.s4 1934713408
        %v3620 = vunpack.c.0.s8 %v3619
        %v3621 = vperm.slane %v3613, %v3620
        %v3622 = vrot.slane %v3605, 4
        %v3623 = vsel %vm436, 0.0, %v3622
        %v3624 = vrot.slane %v3609, 4
        %v3625 = vsel %vm436, 0.0, %v3624
        %v3626 = vrot.slane %v3617, 4
        %v3627 = vsel %vm436, 0.0, %v3626
        %v3628 = vrot.slane %v3621, 4
        %v3629 = vsel %vm436, 0.0, %v3628
        %v3630 = vsel %vm436, %v3624, %v3605
        %v3632 = vunpack.c.l.s4 1983009808
        %v3633 = vunpack.c.0.s8 %v3632
        %v3634 = vperm.slane %v3630, %v3633
        %v3635 = vrot.slane %v3625, 4
        %v3636 = vsel %vm436, %v3635, %v3623
        %v3638 = vunpack.c.l.s4 1983009808
        %v3639 = vunpack.c.0.s8 %v3638
        %v3640 = vperm.slane %v3636, %v3639
        %v3641 = vsel %vm436, %v3628, %v3617
        %v3643 = vunpack.c.l.s4 1983009808
        %v3644 = vunpack.c.0.s8 %v3643
        %v3645 = vperm.slane %v3641, %v3644
        %v3646 = vrot.slane %v3629, 4
        %v3647 = vsel %vm436, %v3646, %v3627
        %v3649 = vunpack.c.l.s4 1983009808
        %v3650 = vunpack.c.0.s8 %v3649
        %v3651 = vperm.slane %v3647, %v3650
        %v3652 = vrot.slane %v3640, 4
        %v3653 = vsel %vm436, %v3652, %v3634
        %v3654 = vrot.slane %v3634, 4
        %v3655 = vsel %vm436, %v3640, %v3654
        %v3657 = vunpack.c.l.s4 1934713408
        %v3658 = vunpack.c.0.s8 %v3657
        %v3659 = vperm.slane %v3653, %v3658
        %v3661 = vunpack.c.l.s4 1934713408
        %v3662 = vunpack.c.0.s8 %v3661
        %v3663 = vperm.slane %v3655, %v3662
        %v3664 = vrot.slane %v3651, 4
        %v3665 = vsel %vm436, %v3664, %v3645
        %v3666 = vrot.slane %v3645, 4
        %v3667 = vsel %vm436, %v3651, %v3666
        %v3669 = vunpack.c.l.s4 1934713408
        %v3670 = vunpack.c.0.s8 %v3669
        %v3671 = vperm.slane %v3665, %v3670
        %v3673 = vunpack.c.l.s4 1934713408
        %v3674 = vunpack.c.0.s8 %v3673
        %v3675 = vperm.slane %v3667, %v3674
        %v3676 = vrot.slane %v3671, 4
        %v3677 = vsel %vm436, %v3676, %v3659
        %v3678 = vrot.slane %v3659, 4
        %v3679 = vsel %vm436, %v3671, %v3678
        %v3680 = vrot.slane %v3675, 4
        %v3681 = vsel %vm436, %v3680, %v3663
        %v3682 = vrot.slane %v3663, 4
        %v3683 = vsel %vm436, %v3675, %v3682
        %3684 = vrot.lane.b32.xlu0 %v3561, 96
        %v3685 = vpop.permute.xlu0 %3684
        %3686 = vrot.lane.b32.xlu0 %v3566, 96
        %v3687 = vpop.permute.xlu0 %3686
        %3688 = vrot.lane.b32.xlu0 %v3569, 96
        %v3689 = vpop.permute.xlu0 %3688
        %3690 = vrot.lane.b32.xlu0 %v3572, 96
        %v3691 = vpop.permute.xlu0 %3690
        %v3696 = vrot.slane %v3689, 4
        %v3697 = vsel %vm436, %v3696, %v3685
        %v3698 = vrot.slane %v3685, 4
        %v3699 = vsel %vm436, %v3689, %v3698
        %v3701 = vunpack.c.l.s4 1983009808
        %v3702 = vunpack.c.0.s8 %v3701
        %v3703 = vperm.slane %v3697, %v3702
        %v3705 = vunpack.c.l.s4 1983009808
        %v3706 = vunpack.c.0.s8 %v3705
        %v3707 = vperm.slane %v3699, %v3706
        %v3708 = vrot.slane %v3691, 4
        %v3709 = vsel %vm436, %v3708, %v3687
        %v3710 = vrot.slane %v3687, 4
        %v3711 = vsel %vm436, %v3691, %v3710
        %v3713 = vunpack.c.l.s4 1983009808
        %v3714 = vunpack.c.0.s8 %v3713
        %v3715 = vperm.slane %v3709, %v3714
        %v3717 = vunpack.c.l.s4 1983009808
        %v3718 = vunpack.c.0.s8 %v3717
        %v3719 = vperm.slane %v3711, %v3718
        %v3720 = vrot.slane %v3715, 4
        %v3721 = vsel %vm436, %v3720, %v3703
        %v3722 = vrot.slane %v3703, 4
        %v3723 = vsel %vm436, %v3715, %v3722
        %v3725 = vunpack.c.l.s4 1934713408
        %v3726 = vunpack.c.0.s8 %v3725
        %v3727 = vperm.slane %v3721, %v3726
        %v3729 = vunpack.c.l.s4 1934713408
        %v3730 = vunpack.c.0.s8 %v3729
        %v3731 = vperm.slane %v3723, %v3730
        %v3732 = vrot.slane %v3719, 4
        %v3733 = vsel %vm436, %v3732, %v3707
        %v3734 = vrot.slane %v3707, 4
        %v3735 = vsel %vm436, %v3719, %v3734
        %v3737 = vunpack.c.l.s4 1934713408
        %v3738 = vunpack.c.0.s8 %v3737
        %v3739 = vperm.slane %v3733, %v3738
        %v3741 = vunpack.c.l.s4 1934713408
        %v3742 = vunpack.c.0.s8 %v3741
        %v3743 = vperm.slane %v3735, %v3742
        %v3744 = vrot.slane %v3727, 4
        %v3745 = vsel %vm436, 0.0, %v3744
        %v3746 = vrot.slane %v3731, 4
        %v3747 = vsel %vm436, 0.0, %v3746
        %v3748 = vrot.slane %v3739, 4
        %v3749 = vsel %vm436, 0.0, %v3748
        %v3750 = vrot.slane %v3743, 4
        %v3751 = vsel %vm436, 0.0, %v3750
        %v3752 = vsel %vm436, %v3746, %v3727
        %v3754 = vunpack.c.l.s4 1983009808
        %v3755 = vunpack.c.0.s8 %v3754
        %v3756 = vperm.slane %v3752, %v3755
        %v3757 = vrot.slane %v3747, 4
        %v3758 = vsel %vm436, %v3757, %v3745
        %v3760 = vunpack.c.l.s4 1983009808
        %v3761 = vunpack.c.0.s8 %v3760
        %v3762 = vperm.slane %v3758, %v3761
        %v3763 = vsel %vm436, %v3750, %v3739
        %v3765 = vunpack.c.l.s4 1983009808
        %v3766 = vunpack.c.0.s8 %v3765
        %v3767 = vperm.slane %v3763, %v3766
        %v3768 = vrot.slane %v3751, 4
        %v3769 = vsel %vm436, %v3768, %v3749
        %v3771 = vunpack.c.l.s4 1983009808
        %v3772 = vunpack.c.0.s8 %v3771
        %v3773 = vperm.slane %v3769, %v3772
        %v3774 = vrot.slane %v3762, 4
        %v3775 = vsel %vm436, %v3774, %v3756
        %v3776 = vrot.slane %v3756, 4
        %v3777 = vsel %vm436, %v3762, %v3776
        %v3779 = vunpack.c.l.s4 1934713408
        %v3780 = vunpack.c.0.s8 %v3779
        %v3781 = vperm.slane %v3775, %v3780
        %v3783 = vunpack.c.l.s4 1934713408
        %v3784 = vunpack.c.0.s8 %v3783
        %v3785 = vperm.slane %v3777, %v3784
        %v3786 = vrot.slane %v3773, 4
        %v3787 = vsel %vm436, %v3786, %v3767
        %v3788 = vrot.slane %v3767, 4
        %v3789 = vsel %vm436, %v3773, %v3788
        %v3791 = vunpack.c.l.s4 1934713408
        %v3792 = vunpack.c.0.s8 %v3791
        %v3793 = vperm.slane %v3787, %v3792
        %v3795 = vunpack.c.l.s4 1934713408
        %v3796 = vunpack.c.0.s8 %v3795
        %v3797 = vperm.slane %v3789, %v3796
        %v3798 = vrot.slane %v3793, 4
        %v3799 = vsel %vm436, %v3798, %v3781
        %v3800 = vrot.slane %v3781, 4
        %v3801 = vsel %vm436, %v3793, %v3800
        %v3802 = vrot.slane %v3797, 4
        %v3803 = vsel %vm436, %v3802, %v3785
        %v3804 = vrot.slane %v3785, 4
        %v3805 = vsel %vm436, %v3797, %v3804
        %v3806 = vmul.f32 %v3530, 0.35355338
        %v3807 = vmul.f32 %v3532, 0.35355338
        %v3808 = vmul.f32 %v3534, 0.35355338
        %v3809 = vmul.f32 %v3536, 0.35355338
        %v3810 = vpack.c.bf16 %v3806, %v3806
        %v3811 = vpack.c.bf16 %v3807, %v3807
        %v3812 = vpack.c.bf16 %v3808, %v3808
        %v3813 = vpack.c.bf16 %v3809, %v3809
        %v3814 = vpack.c.bf16 %v3677, %v3677
        %v3815 = vpack.c.bf16 %v3679, %v3679
        %v3816 = vpack.c.bf16 %v3681, %v3681
        %v3817 = vpack.c.bf16 %v3683, %v3683
        %v3819 = vsel %vm802, %v3810, 0
        %v3822 = vsel %vm802, %v3814, 0
        %3824 = vmatpush.bf16.xpose.msra.mxu0 0
        %3825 = vmatpush.bf16.xpose.msra.mxu0 0
        %3826 = vmatpush.bf16.xpose.msra.mxu0 0
        %3827 = vmatpush.bf16.xpose.msra.mxu0 0
        %3828 = vmatpush.bf16.xpose.msra.mxu0 0
        %3829 = vmatpush.bf16.xpose.msra.mxu0 0
        %3830 = vmatpush.bf16.xpose.msra.mxu0 0
        %3831 = vmatpush.bf16.xpose.msra.mxu0 %v3822
        %3832 = vmatmul.bf16.gmra.mxu0 %v3819
        %v3833 = vpop.f32.mrf.mxu0
        %v3834 = vadd.f32 0.0, %v3833
        %v3835 = vpop.f32.mrf.mxu0
        %3836 = vdwg.mxu0
        %v3838 = vsel %vm802, %v3811, 0
        %v3841 = vsel %vm802, %v3815, 0
        %3843 = vmatpush.bf16.xpose.msra.mxu0 0
        %3844 = vmatpush.bf16.xpose.msra.mxu0 0
        %3845 = vmatpush.bf16.xpose.msra.mxu0 0
        %3846 = vmatpush.bf16.xpose.msra.mxu0 0
        %3847 = vmatpush.bf16.xpose.msra.mxu0 0
        %3848 = vmatpush.bf16.xpose.msra.mxu0 0
        %3849 = vmatpush.bf16.xpose.msra.mxu0 0
        %3850 = vmatpush.bf16.xpose.msra.mxu0 %v3841
        %3851 = vmatmul.bf16.gmra.mxu0 %v3838
        %v3852 = vpop.f32.mrf.mxu0
        %v3853 = vadd.f32 0.0, %v3852
        %v3854 = vpop.f32.mrf.mxu0
        %3855 = vdwg.mxu0
        %v3857 = vsel %vm802, %v3812, 0
        %v3860 = vsel %vm802, %v3816, 0
        %3862 = vmatpush.bf16.xpose.msra.mxu0 0
        %3863 = vmatpush.bf16.xpose.msra.mxu0 0
        %3864 = vmatpush.bf16.xpose.msra.mxu0 0
        %3865 = vmatpush.bf16.xpose.msra.mxu0 0
        %3866 = vmatpush.bf16.xpose.msra.mxu0 0
        %3867 = vmatpush.bf16.xpose.msra.mxu0 0
        %3868 = vmatpush.bf16.xpose.msra.mxu0 0
        %3869 = vmatpush.bf16.xpose.msra.mxu0 %v3860
        %3870 = vmatmul.bf16.gmra.mxu0 %v3857
        %v3871 = vpop.f32.mrf.mxu0
        %v3872 = vadd.f32 0.0, %v3871
        %v3873 = vpop.f32.mrf.mxu0
        %3874 = vdwg.mxu0
        %v3876 = vsel %vm802, %v3813, 0
        %v3879 = vsel %vm802, %v3817, 0
        %3881 = vmatpush.bf16.xpose.msra.mxu0 0
        %3882 = vmatpush.bf16.xpose.msra.mxu0 0
        %3883 = vmatpush.bf16.xpose.msra.mxu0 0
        %3884 = vmatpush.bf16.xpose.msra.mxu0 0
        %3885 = vmatpush.bf16.xpose.msra.mxu0 0
        %3886 = vmatpush.bf16.xpose.msra.mxu0 0
        %3887 = vmatpush.bf16.xpose.msra.mxu0 0
        %3888 = vmatpush.bf16.xpose.msra.mxu0 %v3879
        %3889 = vmatmul.bf16.gmra.mxu0 %v3876
        %v3890 = vpop.f32.mrf.mxu0
        %v3891 = vadd.f32 0.0, %v3890
        %v3892 = vpop.f32.mrf.mxu0
        %3893 = vdwg.mxu0
        %v3894 = vsel %vm802, %v3834, -inf
        %3895 = vmax.xlane.f32.xlu0 %v3894
        %v3896 = vpop.xlane.xlu0 %3895
        %v3897 = vsel %vm802, %v3853, -inf
        %3898 = vmax.xlane.f32.xlu0 %v3897
        %v3899 = vpop.xlane.xlu0 %3898
        %v3900 = vsel %vm802, %v3872, -inf
        %3901 = vmax.xlane.f32.xlu0 %v3900
        %v3902 = vpop.xlane.xlu0 %3901
        %v3903 = vsel %vm802, %v3891, -inf
        %3904 = vmax.xlane.f32.xlu0 %v3903
        %v3905 = vpop.xlane.xlu0 %3904
        %v3906 = vsub.f32 %v3834, %v3896
        %v3907 = vsub.f32 %v3853, %v3899
        %v3908 = vsub.f32 %v3872, %v3902
        %v3909 = vsub.f32 %v3891, %v3905
        %v3910 = vmul.f32 %v3906, 1.442695
        %v3911 = vpow.pop %v3910
        %v3912 = vmul.f32 %v3907, 1.442695
        %v3913 = vpow.pop %v3912
        %v3914 = vmul.f32 %v3908, 1.442695
        %v3915 = vpow.pop %v3914
        %v3916 = vmul.f32 %v3909, 1.442695
        %v3917 = vpow.pop %v3916
        %v3918 = vsel %vm802, %v3911, 0.0
        %3919 = vadd.xlane.f32.xlu0 %v3918
        %v3920 = vpop.xlane.xlu0 %3919
        %v3921 = vsel %vm802, %v3913, 0.0
        %3922 = vadd.xlane.f32.xlu0 %v3921
        %v3923 = vpop.xlane.xlu0 %3922
        %v3924 = vsel %vm802, %v3915, 0.0
        %3925 = vadd.xlane.f32.xlu0 %v3924
        %v3926 = vpop.xlane.xlu0 %3925
        %v3927 = vsel %vm802, %v3917, 0.0
        %3928 = vadd.xlane.f32.xlu0 %v3927
        %v3929 = vpop.xlane.xlu0 %3928
        %v3930 = vrcp.pop %v3920
        %v3931 = vrcp.pop %v3923
        %v3932 = vrcp.pop %v3926
        %v3933 = vrcp.pop %v3929
        %v3934 = vmul.f32 %v3911, %v3930
        %v3935 = vmul.f32 %v3913, %v3931
        %v3936 = vmul.f32 %v3915, %v3932
        %v3937 = vmul.f32 %v3917, %v3933
        %v3938 = vpack.c.bf16 %v3934, %v3934
        %v3939 = vpack.c.bf16 %v3935, %v3935
        %v3940 = vpack.c.bf16 %v3936, %v3936
        %v3941 = vpack.c.bf16 %v3937, %v3937
        %v3942 = vpack.c.bf16 %v3799, %v3799
        %v3943 = vpack.c.bf16 %v3801, %v3801
        %v3944 = vpack.c.bf16 %v3803, %v3803
        %v3945 = vpack.c.bf16 %v3805, %v3805
        %v3947 = vsel %vm802, %v3938, 0
        %v3950 = vsel %vm934, %v3942, 0
        %3952 = vmatpush.bf16.msra.mxu0 0
        %3953 = vmatpush.bf16.msra.mxu0 0
        %3954 = vmatpush.bf16.msra.mxu0 0
        %3955 = vmatpush.bf16.msra.mxu0 0
        %3956 = vmatpush.bf16.msra.mxu0 0
        %3957 = vmatpush.bf16.msra.mxu0 0
        %3958 = vmatpush.bf16.msra.mxu0 0
        %3959 = vmatpush.bf16.msra.mxu0 %v3950
        %3960 = vmatmul.bf16.gmra.mxu0 %v3947
        %v3961 = vpop.f32.mrf.mxu0
        %v3962 = vadd.f32 0.0, %v3961
        %v3963 = vpop.f32.mrf.mxu0
        %3964 = vdwg.mxu0
        %v3966 = vsel %vm802, %v3939, 0
        %v3969 = vsel %vm934, %v3943, 0
        %3971 = vmatpush.bf16.msra.mxu0 0
        %3972 = vmatpush.bf16.msra.mxu0 0
        %3973 = vmatpush.bf16.msra.mxu0 0
        %3974 = vmatpush.bf16.msra.mxu0 0
        %3975 = vmatpush.bf16.msra.mxu0 0
        %3976 = vmatpush.bf16.msra.mxu0 0
        %3977 = vmatpush.bf16.msra.mxu0 0
        %3978 = vmatpush.bf16.msra.mxu0 %v3969
        %3979 = vmatmul.bf16.gmra.mxu0 %v3966
        %v3980 = vpop.f32.mrf.mxu0
        %v3981 = vadd.f32 0.0, %v3980
        %v3982 = vpop.f32.mrf.mxu0
        %3983 = vdwg.mxu0
        %v3985 = vsel %vm802, %v3940, 0
        %v3988 = vsel %vm934, %v3944, 0
        %3990 = vmatpush.bf16.msra.mxu0 0
        %3991 = vmatpush.bf16.msra.mxu0 0
        %3992 = vmatpush.bf16.msra.mxu0 0
        %3993 = vmatpush.bf16.msra.mxu0 0
        %3994 = vmatpush.bf16.msra.mxu0 0
        %3995 = vmatpush.bf16.msra.mxu0 0
        %3996 = vmatpush.bf16.msra.mxu0 0
        %3997 = vmatpush.bf16.msra.mxu0 %v3988
        %3998 = vmatmul.bf16.gmra.mxu0 %v3985
        %v3999 = vpop.f32.mrf.mxu0
        %v4000 = vadd.f32 0.0, %v3999
        %v4001 = vpop.f32.mrf.mxu0
        %4002 = vdwg.mxu0
        %v4004 = vsel %vm802, %v3941, 0
        %v4007 = vsel %vm934, %v3945, 0
        %4009 = vmatpush.bf16.msra.mxu0 0
        %4010 = vmatpush.bf16.msra.mxu0 0
        %4011 = vmatpush.bf16.msra.mxu0 0
        %4012 = vmatpush.bf16.msra.mxu0 0
        %4013 = vmatpush.bf16.msra.mxu0 0
        %4014 = vmatpush.bf16.msra.mxu0 0
        %4015 = vmatpush.bf16.msra.mxu0 0
        %4016 = vmatpush.bf16.msra.mxu0 %v4007
        %4017 = vmatmul.bf16.gmra.mxu0 %v4004
        %v4018 = vpop.f32.mrf.mxu0
        %v4019 = vadd.f32 0.0, %v4018
        %v4020 = vpop.f32.mrf.mxu0
        %4021 = vdwg.mxu0
        %v4022 = vrot.slane %v4000, 4
        %v4023 = vsel %vm436, %v4022, %v3962
        %v4024 = vrot.slane %v3962, 4
        %v4025 = vsel %vm436, %v4000, %v4024
        %v4027 = vunpack.c.l.s4 1983009808
        %v4028 = vunpack.c.0.s8 %v4027
        %v4029 = vperm.slane %v4023, %v4028
        %v4031 = vunpack.c.l.s4 1983009808
        %v4032 = vunpack.c.0.s8 %v4031
        %v4033 = vperm.slane %v4025, %v4032
        %v4034 = vrot.slane %v4019, 4
        %v4035 = vsel %vm436, %v4034, %v3981
        %v4036 = vrot.slane %v3981, 4
        %v4037 = vsel %vm436, %v4019, %v4036
        %v4039 = vunpack.c.l.s4 1983009808
        %v4040 = vunpack.c.0.s8 %v4039
        %v4041 = vperm.slane %v4035, %v4040
        %v4043 = vunpack.c.l.s4 1983009808
        %v4044 = vunpack.c.0.s8 %v4043
        %v4045 = vperm.slane %v4037, %v4044
        %v4046 = vrot.slane %v4041, 4
        %v4047 = vsel %vm436, %v4046, %v4029
        %v4048 = vrot.slane %v4029, 4
        %v4049 = vsel %vm436, %v4041, %v4048
        %v4051 = vunpack.c.l.s4 1934713408
        %v4052 = vunpack.c.0.s8 %v4051
        %v4053 = vperm.slane %v4047, %v4052
        %v4055 = vunpack.c.l.s4 1934713408
        %v4056 = vunpack.c.0.s8 %v4055
        %v4057 = vperm.slane %v4049, %v4056
        %v4058 = vrot.slane %v4045, 4
        %v4059 = vsel %vm436, %v4058, %v4033
        %v4060 = vrot.slane %v4033, 4
        %v4061 = vsel %vm436, %v4045, %v4060
        %v4063 = vunpack.c.l.s4 1934713408
        %v4064 = vunpack.c.0.s8 %v4063
        %v4065 = vperm.slane %v4059, %v4064
        %v4067 = vunpack.c.l.s4 1934713408
        %v4068 = vunpack.c.0.s8 %v4067
        %v4069 = vperm.slane %v4061, %v4068
        %v4070 = vrot.slane %v4053, 4
        %v4071 = vsel %vm436, 0.0, %v4070
        %v4072 = vrot.slane %v4057, 4
        %v4073 = vsel %vm436, 0.0, %v4072
        %v4074 = vrot.slane %v4065, 4
        %v4075 = vsel %vm436, 0.0, %v4074
        %v4076 = vrot.slane %v4069, 4
        %v4077 = vsel %vm436, 0.0, %v4076
        %v4078 = vsel %vm436, %v4072, %v4053
        %v4080 = vunpack.c.l.s4 1983009808
        %v4081 = vunpack.c.0.s8 %v4080
        %v4082 = vperm.slane %v4078, %v4081
        %v4083 = vrot.slane %v4073, 4
        %v4084 = vsel %vm436, %v4083, %v4071
        %v4086 = vunpack.c.l.s4 1983009808
        %v4087 = vunpack.c.0.s8 %v4086
        %v4088 = vperm.slane %v4084, %v4087
        %v4089 = vsel %vm436, %v4076, %v4065
        %v4091 = vunpack.c.l.s4 1983009808
        %v4092 = vunpack.c.0.s8 %v4091
        %v4093 = vperm.slane %v4089, %v4092
        %v4094 = vrot.slane %v4077, 4
        %v4095 = vsel %vm436, %v4094, %v4075
        %v4097 = vunpack.c.l.s4 1983009808
        %v4098 = vunpack.c.0.s8 %v4097
        %v4099 = vperm.slane %v4095, %v4098
        %v4100 = vrot.slane %v4088, 4
        %v4101 = vsel %vm436, %v4100, %v4082
        %v4102 = vrot.slane %v4082, 4
        %v4103 = vsel %vm436, %v4088, %v4102
        %v4105 = vunpack.c.l.s4 1934713408
        %v4106 = vunpack.c.0.s8 %v4105
        %v4107 = vperm.slane %v4101, %v4106
        %v4109 = vunpack.c.l.s4 1934713408
        %v4110 = vunpack.c.0.s8 %v4109
        %v4111 = vperm.slane %v4103, %v4110
        %v4112 = vrot.slane %v4099, 4
        %v4113 = vsel %vm436, %v4112, %v4093
        %v4114 = vrot.slane %v4093, 4
        %v4115 = vsel %vm436, %v4099, %v4114
        %v4117 = vunpack.c.l.s4 1934713408
        %v4118 = vunpack.c.0.s8 %v4117
        %v4119 = vperm.slane %v4113, %v4118
        %v4121 = vunpack.c.l.s4 1934713408
        %v4122 = vunpack.c.0.s8 %v4121
        %v4123 = vperm.slane %v4115, %v4122
        %v4124 = vrot.slane %v4119, 4
        %v4125 = vsel %vm436, %v4124, %v4107
        %v4126 = vrot.slane %v4107, 4
        %v4127 = vsel %vm436, %v4119, %v4126
        %v4128 = vrot.slane %v4123, 4
        %v4129 = vsel %vm436, %v4128, %v4111
        %v4130 = vrot.slane %v4111, 4
        %v4131 = vsel %vm436, %v4123, %v4130
        %4133 = vrot.lane.b32.xlu0 %v4127, 8
        %v4134 = vpop.permute.xlu0 %4133
        %4137 = vrot.lane.b32.xlu0 %v4129, 16
        %v4138 = vpop.permute.xlu0 %4137
        %4141 = vrot.lane.b32.xlu0 %v4131, 24
        %v4142 = vpop.permute.xlu0 %4141
        %v4144 = vsel %vm802, %v4125, %v4134
        %v4145 = vsel %vm1131, %v4144, %v4138
        %v4146 = vsel %vm1133, %v4145, %v4142
        %s4147 = scalar_lea.vmem %s4, 48
        %v4148 = vld [vmem:[%s4147] sm:$0xf]
        %v4149 = vld [vmem:[%s4147 + $0x4] sm:$0xf]
        %v4150 = vld [vmem:[%s4147 + $0x8] sm:$0xf]
        %v4151 = vld [vmem:[%s4147 + $0xc] sm:$0xf]
        %v4152 = vpack.c.bf16 %v4146, %v4146
        %v4153 = vperm.slane %v3386, 2
        %v4158 = vunpack.c.l.b16 %v4148
        %v4159 = vunpack.c.l.b16 %v4149
        %v4160 = vunpack.c.l.b16 %v4150
        %v4161 = vunpack.c.l.b16 %v4151
        %v4162 = vpack.c.b16 %v4159, %v4158
        %v4163 = vpack.c.b16 %v4161, %v4160
        %v4167 = vsel %vm356, %v4152, 0
        %4169 = vmatpush.bf16.msra.mxu0 0
        %4170 = vmatpush.bf16.msra.mxu0 0
        %4171 = vmatpush.bf16.msra.mxu0 0
        %4172 = vmatpush.bf16.msra.mxu0 0
        %4173 = vmatpush.bf16.msra.mxu0 0
        %4174 = vmatpush.bf16.msra.mxu0 0
        %4175 = vmatpush.bf16.msra.mxu0 %v4163
        %4176 = vmatpush.bf16.msra.mxu0 %v4162
        %4177 = vmatmul.bf16.gmra.mxu0 %v4167
        %v4178 = vpop.f32.mrf.mxu0
        %v4179 = vadd.f32 %v4153, %v4178
        %v4180 = vpop.f32.mrf.mxu0
        %4181 = vdwg.mxu0
        %v4182 = vadd.f32 %v3345, %v4179
        %v4183 = vld [vmem:[%s2 + $0x9] sm:$0x1]
        %v4184 = vld [vmem:[%s2 + $0x14] sm:$0x1]
        %v4185 = vsel %vm356, %v4182, 0.0
        %4186 = vadd.xlane.f32.xlu0 %v4185
        %v4187 = vpop.xlane.xlu0 %4186
        %v4188 = vmul.f32 %v4187, %v366
        %v4189 = vsub.f32 %v4182, %v4188
        %v4190 = vmul.f32 %v4189, %v4189
        %v4191 = vsel %vm356, %v4190, 0.0
        %4192 = vadd.xlane.f32.xlu0 %v4191
        %v4193 = vpop.xlane.xlu0 %4192
        %v4194 = vmul.f32 %v4193, %v366
        %v4195 = vadd.f32 %v4194, 1e-05
        %v4196 = vrsqrt.pop %v4195
        %v4197 = vmul.f32 %v4196, %v4195
        %v4198 = vmul.f32 %v4197, %v4196
        %v4199 = vmul.f32 0.5, %v4198
        %v4200 = vsub.f32 1.5, %v4199
        %v4201 = vmul.f32 %v4196, %v4200
        %vm4202 = vweird.f32 %v4195
        %vm4203 = vweird.f32 %v4196
        %vm4204 = vmor %vm4202, %vm4203
        %v4205 = vsel %vm4204, %v4196, %v4201
        %v4206 = vmul.f32 %v4189, %v4205
        %v4207 = vperm.slane %v4183, 0
        %v4208 = vmul.f32 %v4206, %v4207
        %v4209 = vperm.slane %v4184, 0
        %v4210 = vadd.f32 %v4208, %v4209
        %v4211 = vld [vmem:[%s3385] sm:$0xf]
        %s4212 = scalar_lea.vmem %s5, 48
        %v4213 = vld [vmem:[%s4212] sm:$0xf]
        %v4214 = vld [vmem:[%s4212 + $0x4] sm:$0xf]
        %v4215 = vld [vmem:[%s4212 + $0x8] sm:$0xf]
        %v4216 = vld [vmem:[%s4212 + $0xc] sm:$0xf]
        %v4217 = vpack.c.bf16 %v4210, %v4210
        %v4218 = vperm.slane %v4211, 1
        %v4223 = vunpack.c.l.b16 %v4213
        %v4224 = vunpack.c.l.b16 %v4214
        %v4225 = vunpack.c.l.b16 %v4215
        %v4226 = vunpack.c.l.b16 %v4216
        %v4227 = vpack.c.b16 %v4224, %v4223
        %v4228 = vpack.c.b16 %v4226, %v4225
        %v4232 = vsel %vm356, %v4217, 0
        %4234 = vmatpush.bf16.msra.mxu0 0
        %4235 = vmatpush.bf16.msra.mxu0 0
        %4236 = vmatpush.bf16.msra.mxu0 0
        %4237 = vmatpush.bf16.msra.mxu0 0
        %4238 = vmatpush.bf16.msra.mxu0 0
        %4239 = vmatpush.bf16.msra.mxu0 0
        %4240 = vmatpush.bf16.msra.mxu0 %v4228
        %4241 = vmatpush.bf16.msra.mxu0 %v4227
        %4242 = vmatmul.bf16.gmra.mxu0 %v4232
        %v4243 = vpop.f32.mrf.mxu0
        %v4244 = vadd.f32 %v4218, %v4243
        %v4245 = vpop.f32.mrf.mxu0
        %4246 = vdwg.mxu0
        %v4247 = vmul.f32 %v4244, 0.5
        %v4248 = vmul.f32 %v4244, 0.70710677
        %v4249 = vand.u32 2147483647, %v4248
        %v4250 = vmul.f32 %v4249, 0.3275911
        %v4251 = vadd.f32 %v4250, 1.0
        %v4252 = vrcp.pop %v4251
        %v4253 = vmul.f32 %v4252, 1.0614054
        %v4254 = vadd.f32 %v4253, -1.4531521
        %v4255 = vmul.f32 %v4254, %v4252
        %v4256 = vadd.f32 %v4255, 1.4214138
        %v4257 = vmul.f32 %v4256, %v4252
        %v4258 = vadd.f32 %v4257, -0.28449672
        %v4259 = vmul.f32 %v4258, %v4252
        %v4260 = vadd.f32 %v4259, 0.2548296
        %v4261 = vmul.f32 %v4260, %v4252
        %v4262 = vsub.f32 0.0, %v4249
        %v4263 = vmul.f32 %v4262, %v4249
        %v4264 = vmul.f32 %v4263, 1.442695
        %v4265 = vpow.pop %v4264
        %v4266 = vmul.f32 %v4261, %v4265
        %v4267 = vsub.f32 1.0, %v4266
        %vm4268 = vcmp.ge.f32.partialorder %v4248, 0.0
        %v4269 = vsub.f32 0.0, %v4267
        %v4270 = vsel %vm4268, %v4267, %v4269
        %v4271 = vadd.f32 %v4270, 1.0
        %v4272 = vmul.f32 %v4247, %v4271
        %s4273 = scalar_lea.vmem %s6, 192
        %v4274 = vld [vmem:[%s4273] sm:$0xf]
        %v4275 = vld [vmem:[%s4273 + $0x4] sm:$0xf]
        %v4276 = vld [vmem:[%s4273 + $0x8] sm:$0xf]
        %v4277 = vld [vmem:[%s4273 + $0xc] sm:$0xf]
        %v4278 = vld [vmem:[%s4273 + $0x10] sm:$0xf]
        %v4279 = vld [vmem:[%s4273 + $0x14] sm:$0xf]
        %v4280 = vld [vmem:[%s4273 + $0x18] sm:$0xf]
        %v4281 = vld [vmem:[%s4273 + $0x1c] sm:$0xf]
        %v4282 = vld [vmem:[%s4273 + $0x20] sm:$0xf]
        %v4283 = vld [vmem:[%s4273 + $0x24] sm:$0xf]
        %v4284 = vld [vmem:[%s4273 + $0x28] sm:$0xf]
        %v4285 = vld [vmem:[%s4273 + $0x2c] sm:$0xf]
        %v4286 = vld [vmem:[%s4273 + $0x30] sm:$0xf]
        %v4287 = vld [vmem:[%s4273 + $0x34] sm:$0xf]
        %v4288 = vld [vmem:[%s4273 + $0x38] sm:$0xf]
        %v4289 = vld [vmem:[%s4273 + $0x3c] sm:$0xf]
        %v4290 = vpack.c.bf16 %v4272, %v4272
        %v4291 = vperm.slane %v4211, 3
        %v4308 = vunpack.c.l.b16 %v4274
        %v4309 = vunpack.c.l.b16 %v4275
        %v4310 = vunpack.c.l.b16 %v4276
        %v4311 = vunpack.c.l.b16 %v4277
        %v4312 = vunpack.c.l.b16 %v4278
        %v4313 = vunpack.c.l.b16 %v4279
        %v4314 = vunpack.c.l.b16 %v4280
        %v4315 = vunpack.c.l.b16 %v4281
        %v4316 = vunpack.c.l.b16 %v4282
        %v4317 = vunpack.c.l.b16 %v4283
        %v4318 = vunpack.c.l.b16 %v4284
        %v4319 = vunpack.c.l.b16 %v4285
        %v4320 = vunpack.c.l.b16 %v4286
        %v4321 = vunpack.c.l.b16 %v4287
        %v4322 = vunpack.c.l.b16 %v4288
        %v4323 = vunpack.c.l.b16 %v4289
        %v4324 = vpack.c.b16 %v4309, %v4308
        %v4325 = vpack.c.b16 %v4311, %v4310
        %v4326 = vpack.c.b16 %v4313, %v4312
        %v4327 = vpack.c.b16 %v4315, %v4314
        %v4328 = vpack.c.b16 %v4317, %v4316
        %v4329 = vpack.c.b16 %v4319, %v4318
        %v4330 = vpack.c.b16 %v4321, %v4320
        %v4331 = vpack.c.b16 %v4323, %v4322
        %4340 = vmatpush.bf16.msra.mxu0 %v4331
        %4341 = vmatpush.bf16.msra.mxu0 %v4330
        %4342 = vmatpush.bf16.msra.mxu0 %v4329
        %4343 = vmatpush.bf16.msra.mxu0 %v4328
        %4344 = vmatpush.bf16.msra.mxu0 %v4327
        %4345 = vmatpush.bf16.msra.mxu0 %v4326
        %4346 = vmatpush.bf16.msra.mxu0 %v4325
        %4347 = vmatpush.bf16.msra.mxu0 %v4324
        %4348 = vmatmul.bf16.gmra.mxu0 %v4290
        %v4349 = vpop.f32.mrf.mxu0
        %v4350 = vadd.f32 %v4291, %v4349
        %v4351 = vpop.f32.mrf.mxu0
        %4352 = vdwg.mxu0
        %v4353 = vadd.f32 %v4182, %v4350
        %v4354 = vld [vmem:[%s2 + $0xa] sm:$0x1]
        %v4355 = vld [vmem:[%s2 + $0x15] sm:$0x1]
        %v4356 = vsel %vm356, %v4353, 0.0
        %4357 = vadd.xlane.f32.xlu0 %v4356
        %v4358 = vpop.xlane.xlu0 %4357
        %v4359 = vmul.f32 %v4358, %v366
        %v4360 = vsub.f32 %v4353, %v4359
        %v4361 = vmul.f32 %v4360, %v4360
        %v4362 = vsel %vm356, %v4361, 0.0
        %4363 = vadd.xlane.f32.xlu0 %v4362
        %v4364 = vpop.xlane.xlu0 %4363
        %v4365 = vmul.f32 %v4364, %v366
        %v4366 = vadd.f32 %v4365, 1e-05
        %v4367 = vrsqrt.pop %v4366
        %v4368 = vmul.f32 %v4367, %v4366
        %v4369 = vmul.f32 %v4368, %v4367
        %v4370 = vmul.f32 0.5, %v4369
        %v4371 = vsub.f32 1.5, %v4370
        %v4372 = vmul.f32 %v4367, %v4371
        %vm4373 = vweird.f32 %v4366
        %vm4374 = vweird.f32 %v4367
        %vm4375 = vmor %vm4373, %vm4374
        %v4376 = vsel %vm4375, %v4367, %v4372
        %v4377 = vmul.f32 %v4360, %v4376
        %v4378 = vperm.slane %v4354, 0
        %v4379 = vmul.f32 %v4377, %v4378
        %v4380 = vperm.slane %v4355, 0
        %v4381 = vadd.f32 %v4379, %v4380
        %v4382 = vld [vmem:[%s8] sm:$0xf]
        %v4383 = vld [vmem:[%s8 + $0x4] sm:$0xf]
        %v4384 = vld [vmem:[%s8 + $0x8] sm:$0xf]
        %v4385 = vld [vmem:[%s8 + $0xc] sm:$0xf]
        %v4386 = vpack.c.bf16 %v4381, %v4381
        %v4391 = vunpack.c.l.b16 %v4382
        %v4392 = vunpack.c.l.b16 %v4383
        %v4393 = vunpack.c.l.b16 %v4384
        %v4394 = vunpack.c.l.b16 %v4385
        %v4395 = vpack.c.b16 %v4392, %v4391
        %v4396 = vpack.c.b16 %v4394, %v4393
        %v4400 = vsel %vm356, %v4386, 0
        %4402 = vmatpush.bf16.msra.mxu0 0
        %4403 = vmatpush.bf16.msra.mxu0 0
        %4404 = vmatpush.bf16.msra.mxu0 0
        %4405 = vmatpush.bf16.msra.mxu0 0
        %4406 = vmatpush.bf16.msra.mxu0 0
        %4407 = vmatpush.bf16.msra.mxu0 0
        %4408 = vmatpush.bf16.msra.mxu0 %v4396
        %4409 = vmatpush.bf16.msra.mxu0 %v4395
        %4410 = vmatmul.bf16.gmra.mxu0 %v4400
        %v4411 = vpop.f32.mrf.mxu0
        %v4412 = vadd.f32 0.0, %v4411
        %v4413 = vpop.f32.mrf.mxu0
        %4414 = vdwg.mxu0
        %4415 = vst [vmem:[%s336] sm:$0xff] %v4412
        %s4416 = sand.u32 %s230, 1
        %s4417 = scalar_lea.sflag [#allocation3], %s4416
        %s4418 = sand.u32 %s230, 1
        %s4419 = smul.addr %s4418, 8
        %s4420 = scalar_lea.vmem [#allocation2], %s4419
        // Predicated region
        $region57: #{tpu_custom_call.1} parent=55 // pred_check
          %p4421 = pneg %p240
        $region58: #{tpu_custom_call.1} parent=55 // pred_check_branch
          %4423 = sbr.rel (%p4421) target = $region60
        $region59: #{tpu_custom_call.1} parent=55 // pred_region
          %4425 = vsyncadd %s4417, 0
          %s4426 = smul.addr %s23, 8
          %s4427 = scalar_lea.hbm %s9, %s4426
          %s4429 = sshll.u32 %s4420, 4
          %s4430 = int_to_ptr.vmem [resolvable:$true] %s4429
          %s4431 = sshll.u32 %s4427, 4
          %s4432 = int_to_ptr.hbm [resolvable:$true] %s4431
          %4434 = dma.vmem_to_hbm [thread:$0]  %s4430, 128, %s4432, %s4417
        $region60: #{tpu_custom_call.1} parent=55 // pred_fallthru
          _
      $region56: #{tpu_custom_call.1} parent=5 // pred_fallthru
        _
      %p4435 = scmp.le.s32.totalorder 2, %s18
      // Predicated region
      $region61: #{tpu_custom_call.1} parent=5 // pred_check
        %p4436 = pneg %p4435
      $region62: #{tpu_custom_call.1} parent=5 // pred_check_branch
        %4438 = sbr.rel (%p4436) target = $region64
      $region63: #{tpu_custom_call.1} parent=5 // pred_region
        %s4439 = ssub.s32 %s18, 2
        // Predicated region
        $region65: #{tpu_custom_call.1} parent=63 // pred_check
          %p4440 = pneg %p246
        $region66: #{tpu_custom_call.1} parent=63 // pred_check_branch
          %4442 = sbr.rel (%p4440) target = $region68
        $region67: #{tpu_custom_call.1} parent=63 // pred_region
          %s4443 = sand.u32 %s231, 1
          %s4444 = scalar_lea.sflag [#allocation3], %s4443
          %s4445 = sand.u32 %s231, 1
          %s4446 = smul.addr %s4445, 8
          %s4447 = scalar_lea.vmem [#allocation2], %s4446
          %4449 = dma.done %s4444, 128
        $region68: #{tpu_custom_call.1} parent=63 // pred_fallthru
          _
      $region64: #{tpu_custom_call.1} parent=5 // pred_fallthru
        _
    $region6: #{tpu_custom_call.1} parent=1 // loop_footer
      %s22 = sadd.s32 1, %s18
    $region7: #{tpu_custom_call.1} parent=1 // loop_footer_branch
      %17 = sbr.rel target = $region3
    $region8: #{tpu_custom_call.1} parent=1 // loop_exit
      _
    %4450 = vsyncpa [#allocation3], 1
    %s4451 = scalar_lea.sflag [#allocation3], 1
    %4452 = vsyncpa %s4451, 1

</llo_original>
